<compile_context>
chip_gen: v6e
topology: v6e:2x2x1
jax: 0.10.0
libtpu: 0.0.40
codegen_flags: <defaults>
</compile_context>

<pallas_src>
import functools

import jax
import jax.numpy as jnp
from jax.experimental import pallas as pl
from jax.experimental.pallas import tpu as pltpu


def _round_up(x, m):
    return ((x + m - 1) // m) * m


def make_deeplog_kernel(num_layers, hp, seq_len, bp):
    HP = hp          # per-gate lane-padded hidden width (>= 128)
    T = seq_len
    B = bp           # sublane-padded batch (multiple of 8)

    def sigmoid_fast(x):
        # sigmoid(x) == 0.5*tanh(0.5*x) + 0.5 : single EUP tanh instead of
        # exp + reciprocal on the recurrent dependency chain.
        return 0.5 * jnp.tanh(0.5 * x) + 0.5

    def kernel(*refs):
        # refs: x2d, w_ih0P, b0P, w_hh0P, [w_ihP, w_hhP, bP] * (L-1),
        #       fc_wP, fc_bP, out
        x2d_ref = refs[0]
        w_ih0_ref, b0_ref, w_hh0_ref = refs[1], refs[2], refs[3]
        idx = 4
        upper = []
        for _ in range(num_layers - 1):
            upper.append((refs[idx], refs[idx + 1], refs[idx + 2]))
            idx += 3
        fc_w_ref, fc_b_ref, out_ref = refs[idx], refs[idx + 1], refs[idx + 2]

        # Hoisted layer-0 input projection: ONE matmul over all T*B rows,
        # bias folded in once.  Shape (T*B, 4*HP).
        gx0 = (jnp.dot(x2d_ref[...], w_ih0_ref[...],
                       preferred_element_type=jnp.float32) + b0_ref[...])

        def cell(gates, c):
            # Each gate occupies its own HP-wide lane slab -> whole-vreg
            # slices; no lane-offset sub-vreg extracts per cell.
            i_g = sigmoid_fast(gates[:, 0 * HP:1 * HP])
            f_g = sigmoid_fast(gates[:, 1 * HP:2 * HP])
            g_g = jnp.tanh(gates[:, 2 * HP:3 * HP])
            o_g = sigmoid_fast(gates[:, 3 * HP:4 * HP])
            c_new = f_g * c + i_g * g_g
            h_new = o_g * jnp.tanh(c_new)
            return h_new, c_new

        # h/c live in vregs, threaded through the fully unrolled time loop.
        h = [jnp.zeros((B, HP), jnp.float32) for _ in range(num_layers)]
        c = [jnp.zeros((B, HP), jnp.float32) for _ in range(num_layers)]

        # TODO(synk): for T > ~16 switch to lax.fori_loop(..., unroll=4) with
        # stacked h/c carries to bound code size and vreg live ranges.
        for t in range(T):                        # fully unrolled (T small)
            # Tile-aligned (B=8 sublanes) row block of the hoisted projection.
            gates0 = gx0[t * B:(t + 1) * B, :] + jnp.dot(
                h[0], w_hh0_ref[...], preferred_element_type=jnp.float32)
            h[0], c[0] = cell(gates0, c[0])
            for l in range(1, num_layers):
                w_ih_ref, w_hh_ref, b_ref = upper[l - 1]
                gates = (jnp.dot(h[l - 1], w_ih_ref[...],
                                 preferred_element_type=jnp.float32)
                         + jnp.dot(h[l], w_hh_ref[...],
                                   preferred_element_type=jnp.float32)
                         + b_ref[...])
                h[l], c[l] = cell(gates, c[l])

        # FC on the final top-layer hidden state; FC weights touched only
        # after the recurrence (shorter live ranges). Output stays 128-lane
        # dense (padded) -> unmasked stores; wrapper slices it back.
        out_ref[...] = (jnp.dot(h[num_layers - 1], fc_w_ref[...],
                                preferred_element_type=jnp.float32)
                        + fc_b_ref[...])

    return kernel


def pack_params(params, hidden_size, num_layers, num_keys):
    """One-time packing of PyTorch-layout LSTM/FC params into kernel layout.

    Gate order is PyTorch's (i, f, g, o); b_ih + b_hh pre-summed; each gate is
    padded to HP lanes; recurrent / upper-layer weight rows are padded to HP
    with zeros (so zero-padded h lanes contribute nothing)."""
    H = hidden_size
    HP = max(128, _round_up(H, 128))
    OUT_PAD = max(128, _round_up(num_keys, 128))

    def pack_cols(w_t):  # (in_dim, 4H) -> (in_dim, 4*HP), gate g at lanes g*HP..
        in_dim = w_t.shape[0]
        out = jnp.zeros((in_dim, 4 * HP), jnp.float32)
        for g in range(4):
            out = out.at[:, g * HP:g * HP + H].set(w_t[:, g * H:(g + 1) * H])
        return out

    def pack_rows_cols(w):  # (4H, H) -> transposed, row-padded, gate-packed (HP, 4*HP)
        out = jnp.zeros((HP, 4 * HP), jnp.float32)
        w_t = w.T  # (H, 4H)
        for g in range(4):
            out = out.at[:H, g * HP:g * HP + H].set(w_t[:, g * H:(g + 1) * H])
        return out

    def pack_bias(b):  # (4H,) -> (1, 4*HP)
        out = jnp.zeros((1, 4 * HP), jnp.float32)
        for g in range(4):
            out = out.at[0, g * HP:g * HP + H].set(b[g * H:(g + 1) * H])
        return out

    packed = []
    w_ih0, w_hh0, b_ih0, b_hh0 = params["lstm"][0]
    packed += [pack_cols(w_ih0.T), pack_bias(b_ih0 + b_hh0), pack_rows_cols(w_hh0)]
    for l in range(1, num_layers):
        w_ih, w_hh, b_ih, b_hh = params["lstm"][l]
        packed += [pack_rows_cols(w_ih), pack_rows_cols(w_hh),
                   pack_bias(b_ih + b_hh)]
    fc_w = jnp.zeros((HP, OUT_PAD), jnp.float32).at[:H, :num_keys].set(
        params["fc_w"].T)
    fc_b = jnp.zeros((1, OUT_PAD), jnp.float32).at[0, :num_keys].set(
        params["fc_b"])
    packed += [fc_w, fc_b]
    return tuple(packed)


@functools.partial(jax.jit,
                   static_argnames=("hidden_size", "num_layers", "num_keys"))
def deeplog_forward(x, packed, hidden_size, num_layers, num_keys):
    """x: (B, T, num_keys) float32, packed: pack_params(...) -> (B, num_keys)."""
    B, T, K = x.shape
    H = hidden_size
    HP = max(128, _round_up(H, 128))
    OUT_PAD = max(128, _round_up(num_keys, 128))
    BP = _round_up(B, 8)  # f32 sublane tile

    # Zero-pad batch to the sublane tile, flatten time-major:
    # row t*BP + b  <->  (time t, batch b); per-step slices are tile-aligned.
    x_p = jnp.zeros((BP, T, K), jnp.float32).at[:B].set(x.astype(jnp.float32))
    x2d = jnp.transpose(x_p, (1, 0, 2)).reshape(T * BP, K)

    vmem = pl.BlockSpec(memory_space=pltpu.MemorySpace.VMEM)
    kernel = make_deeplog_kernel(num_layers, HP, T, BP)
    inputs = (x2d,) + tuple(packed)

    # TODO(synk): for large B, add a batch grid axis with
    # dimension_semantics=("parallel",) so v7x's second TensorCore is used,
    # and set vmem_limit_bytes if H/num_layers scale up.
    out = pl.pallas_call(
        kernel,
        out_shape=jax.ShapeDtypeStruct((BP, OUT_PAD), jnp.float32),
        in_specs=[vmem] * len(inputs),
        out_specs=vmem,
    )(*inputs)
    return out[:B, :num_keys]


def deeplog_reference(x, params, hidden_size, num_layers):
    """Pure-JAX reference matching torch.nn.LSTM + Linear semantics."""
    B, T, _ = x.shape
    seq = x
    for l in range(num_layers):
        w_ih, w_hh, b_ih, b_hh = params["lstm"][l]
        h = jnp.zeros((B, hidden_size), jnp.float32)
        c = jnp.zeros((B, hidden_size), jnp.float32)
        outs = []
        for t in range(T):
            gates = seq[:, t, :] @ w_ih.T + b_ih + h @ w_hh.T + b_hh
            i, f, g, o = jnp.split(gates, 4, axis=-1)
            i = jax.nn.sigmoid(i)
            f = jax.nn.sigmoid(f)
            g = jnp.tanh(g)
            o = jax.nn.sigmoid(o)
            c = f * c + i * g
            h = o * jnp.tanh(c)
            outs.append(h)
        seq = jnp.stack(outs, axis=1)
    return seq[:, -1, :] @ params["fc_w"].T + params["fc_b"]


def init_params(key, hidden_size, num_layers, num_keys):
    params = {"lstm": []}
    scale = 0.1
    for l in range(num_layers):
        in_dim = num_keys if l == 0 else hidden_size
        key, k1, k2, k3, k4 = jax.random.split(key, 5)
        w_ih = scale * jax.random.normal(k1, (4 * hidden_size, in_dim), jnp.float32)
        w_hh = scale * jax.random.normal(k2, (4 * hidden_size, hidden_size), jnp.float32)
        b_ih = scale * jax.random.normal(k3, (4 * hidden_size,), jnp.float32)
        b_hh = scale * jax.random.normal(k4, (4 * hidden_size,), jnp.float32)
        params["lstm"].append((w_ih, w_hh, b_ih, b_hh))
    key, k5, k6 = jax.random.split(key, 3)
    params["fc_w"] = scale * jax.random.normal(k5, (num_keys, hidden_size), jnp.float32)
    params["fc_b"] = scale * jax.random.normal(k6, (num_keys,), jnp.float32)
    return params


if __name__ == "__main__":
    hidden_size = 32
    num_layers = 2
    num_keys = 8
    batch = 2
    seq_len = 8

    key = jax.random.PRNGKey(0)
    key, kx = jax.random.split(key)
    x = jax.random.normal(kx, (batch, seq_len, num_keys), jnp.float32)
    params = init_params(key, hidden_size, num_layers, num_keys)

    # One-time weight packing (kept out of the per-call path).
    packed = jax.block_until_ready(
        pack_params(params, hidden_size, num_layers, num_keys))

    out = deeplog_forward(x, packed, hidden_size, num_layers, num_keys)
    out = jax.block_until_ready(out)

    ref = deeplog_reference(x, params, hidden_size, num_layers)
    assert out.shape == (batch, num_keys)
    assert jnp.allclose(out, ref, atol=1e-4, rtol=1e-4), (out, ref)

    print("KERNEL_OK")
</pallas_src>

<mosaic_0001>
module attributes {stable_mosaic.version = 11 : i64} {
  func.func @kernel(%arg0: memref<64x8xf32, #tpu.memory_space<vmem>>, %arg1: memref<8x512xf32, #tpu.memory_space<vmem>>, %arg2: memref<1x512xf32, #tpu.memory_space<vmem>>, %arg3: memref<128x512xf32, #tpu.memory_space<vmem>>, %arg4: memref<128x512xf32, #tpu.memory_space<vmem>>, %arg5: memref<128x512xf32, #tpu.memory_space<vmem>>, %arg6: memref<1x512xf32, #tpu.memory_space<vmem>>, %arg7: memref<128x128xf32, #tpu.memory_space<vmem>>, %arg8: memref<1x128xf32, #tpu.memory_space<vmem>>, %arg9: memref<8x128xf32, #tpu.memory_space<vmem>>) attributes {dimension_semantics = [], scalar_prefetch = 0 : i64, scratch_operands = 0 : i64, tpu.core_type = #tpu.core_type<tc>} {
    %c0 = arith.constant 0 : index
    %c0_0 = arith.constant 0 : index
    %0 = vector.load %arg0[%c0, %c0_0] : memref<64x8xf32, #tpu.memory_space<vmem>>, vector<64x8xf32>
    %c0_1 = arith.constant 0 : index
    %c0_2 = arith.constant 0 : index
    %1 = vector.load %arg1[%c0_1, %c0_2] : memref<8x512xf32, #tpu.memory_space<vmem>>, vector<8x512xf32>
    %cst = arith.constant dense<0.000000e+00> : vector<64x512xf32>
    %2 = tpu.matmul %0, %1, %cst {dimension_numbers = #tpu.dot_dimension_numbers<[1], [0], [0], [1], [0, 0, 1, 1], [], []>} : vector<64x8xf32>, vector<8x512xf32>, vector<64x512xf32> -> vector<64x512xf32>
    %c0_3 = arith.constant 0 : index
    %c0_4 = arith.constant 0 : index
    %3 = vector.load %arg2[%c0_3, %c0_4] : memref<1x512xf32, #tpu.memory_space<vmem>>, vector<1x512xf32>
    %4 = vector.broadcast %3 : vector<1x512xf32> to vector<64x512xf32>
    %5 = arith.addf %2, %4 : vector<64x512xf32>
    %cst_5 = arith.constant 0.000000e+00 : f32
    %6 = vector.broadcast %cst_5 : f32 to vector<8x128xf32>
    %cst_6 = arith.constant 0.000000e+00 : f32
    %7 = vector.broadcast %cst_6 : f32 to vector<8x128xf32>
    %cst_7 = arith.constant 0.000000e+00 : f32
    %8 = vector.broadcast %cst_7 : f32 to vector<8x128xf32>
    %cst_8 = arith.constant 0.000000e+00 : f32
    %9 = vector.broadcast %cst_8 : f32 to vector<8x128xf32>
    %10 = vector.extract_strided_slice %5 {offsets = [0, 0], sizes = [8, 512], strides = [1, 1]} : vector<64x512xf32> to vector<8x512xf32>
    %c0_9 = arith.constant 0 : index
    %c0_10 = arith.constant 0 : index
    %11 = vector.load %arg3[%c0_9, %c0_10] : memref<128x512xf32, #tpu.memory_space<vmem>>, vector<128x512xf32>
    %cst_11 = arith.constant dense<0.000000e+00> : vector<8x512xf32>
    %12 = tpu.matmul %6, %11, %cst_11 {dimension_numbers = #tpu.dot_dimension_numbers<[1], [0], [0], [1], [0, 0, 1, 1], [], []>} : vector<8x128xf32>, vector<128x512xf32>, vector<8x512xf32> -> vector<8x512xf32>
    %13 = arith.addf %10, %12 : vector<8x512xf32>
    %14 = vector.extract_strided_slice %13 {offsets = [0, 0], sizes = [8, 128], strides = [1, 1]} : vector<8x512xf32> to vector<8x128xf32>
    %cst_12 = arith.constant 5.000000e-01 : f32
    %15 = vector.broadcast %cst_12 : f32 to vector<8x128xf32>
    %16 = arith.mulf %15, %14 : vector<8x128xf32>
    %17 = math.tanh %16 : vector<8x128xf32>
    %cst_13 = arith.constant 5.000000e-01 : f32
    %18 = vector.broadcast %cst_13 : f32 to vector<8x128xf32>
    %19 = arith.mulf %18, %17 : vector<8x128xf32>
    %cst_14 = arith.constant 5.000000e-01 : f32
    %20 = vector.broadcast %cst_14 : f32 to vector<8x128xf32>
    %21 = arith.addf %19, %20 : vector<8x128xf32>
    %22 = vector.extract_strided_slice %13 {offsets = [0, 128], sizes = [8, 128], strides = [1, 1]} : vector<8x512xf32> to vector<8x128xf32>
    %cst_15 = arith.constant 5.000000e-01 : f32
    %23 = vector.broadcast %cst_15 : f32 to vector<8x128xf32>
    %24 = arith.mulf %23, %22 : vector<8x128xf32>
    %25 = math.tanh %24 : vector<8x128xf32>
    %cst_16 = arith.constant 5.000000e-01 : f32
    %26 = vector.broadcast %cst_16 : f32 to vector<8x128xf32>
    %27 = arith.mulf %26, %25 : vector<8x128xf32>
    %cst_17 = arith.constant 5.000000e-01 : f32
    %28 = vector.broadcast %cst_17 : f32 to vector<8x128xf32>
    %29 = arith.addf %27, %28 : vector<8x128xf32>
    %30 = vector.extract_strided_slice %13 {offsets = [0, 256], sizes = [8, 128], strides = [1, 1]} : vector<8x512xf32> to vector<8x128xf32>
    %31 = math.tanh %30 : vector<8x128xf32>
    %32 = vector.extract_strided_slice %13 {offsets = [0, 384], sizes = [8, 128], strides = [1, 1]} : vector<8x512xf32> to vector<8x128xf32>
    %cst_18 = arith.constant 5.000000e-01 : f32
    %33 = vector.broadcast %cst_18 : f32 to vector<8x128xf32>
    %34 = arith.mulf %33, %32 : vector<8x128xf32>
    %35 = math.tanh %34 : vector<8x128xf32>
    %cst_19 = arith.constant 5.000000e-01 : f32
    %36 = vector.broadcast %cst_19 : f32 to vector<8x128xf32>
    %37 = arith.mulf %36, %35 : vector<8x128xf32>
    %cst_20 = arith.constant 5.000000e-01 : f32
    %38 = vector.broadcast %cst_20 : f32 to vector<8x128xf32>
    %39 = arith.addf %37, %38 : vector<8x128xf32>
    %40 = arith.mulf %29, %8 : vector<8x128xf32>
    %41 = arith.mulf %21, %31 : vector<8x128xf32>
    %42 = arith.addf %40, %41 : vector<8x128xf32>
    %43 = math.tanh %42 : vector<8x128xf32>
    %44 = arith.mulf %39, %43 : vector<8x128xf32>
    %c0_21 = arith.constant 0 : index
    %c0_22 = arith.constant 0 : index
    %45 = vector.load %arg4[%c0_21, %c0_22] : memref<128x512xf32, #tpu.memory_space<vmem>>, vector<128x512xf32>
    %cst_23 = arith.constant dense<0.000000e+00> : vector<8x512xf32>
    %46 = tpu.matmul %44, %45, %cst_23 {dimension_numbers = #tpu.dot_dimension_numbers<[1], [0], [0], [1], [0, 0, 1, 1], [], []>} : vector<8x128xf32>, vector<128x512xf32>, vector<8x512xf32> -> vector<8x512xf32>
    %c0_24 = arith.constant 0 : index
    %c0_25 = arith.constant 0 : index
    %47 = vector.load %arg5[%c0_24, %c0_25] : memref<128x512xf32, #tpu.memory_space<vmem>>, vector<128x512xf32>
    %cst_26 = arith.constant dense<0.000000e+00> : vector<8x512xf32>
    %48 = tpu.matmul %7, %47, %cst_26 {dimension_numbers = #tpu.dot_dimension_numbers<[1], [0], [0], [1], [0, 0, 1, 1], [], []>} : vector<8x128xf32>, vector<128x512xf32>, vector<8x512xf32> -> vector<8x512xf32>
    %49 = arith.addf %46, %48 : vector<8x512xf32>
    %c0_27 = arith.constant 0 : index
    %c0_28 = arith.constant 0 : index
    %50 = vector.load %arg6[%c0_27, %c0_28] : memref<1x512xf32, #tpu.memory_space<vmem>>, vector<1x512xf32>
    %51 = vector.broadcast %50 : vector<1x512xf32> to vector<8x512xf32>
    %52 = arith.addf %49, %51 : vector<8x512xf32>
    %53 = vector.extract_strided_slice %52 {offsets = [0, 0], sizes = [8, 128], strides = [1, 1]} : vector<8x512xf32> to vector<8x128xf32>
    %cst_29 = arith.constant 5.000000e-01 : f32
    %54 = vector.broadcast %cst_29 : f32 to vector<8x128xf32>
    %55 = arith.mulf %54, %53 : vector<8x128xf32>
    %56 = math.tanh %55 : vector<8x128xf32>
    %cst_30 = arith.constant 5.000000e-01 : f32
    %57 = vector.broadcast %cst_30 : f32 to vector<8x128xf32>
    %58 = arith.mulf %57, %56 : vector<8x128xf32>
    %cst_31 = arith.constant 5.000000e-01 : f32
    %59 = vector.broadcast %cst_31 : f32 to vector<8x128xf32>
    %60 = arith.addf %58, %59 : vector<8x128xf32>
    %61 = vector.extract_strided_slice %52 {offsets = [0, 128], sizes = [8, 128], strides = [1, 1]} : vector<8x512xf32> to vector<8x128xf32>
    %cst_32 = arith.constant 5.000000e-01 : f32
    %62 = vector.broadcast %cst_32 : f32 to vector<8x128xf32>
    %63 = arith.mulf %62, %61 : vector<8x128xf32>
    %64 = math.tanh %63 : vector<8x128xf32>
    %cst_33 = arith.constant 5.000000e-01 : f32
    %65 = vector.broadcast %cst_33 : f32 to vector<8x128xf32>
    %66 = arith.mulf %65, %64 : vector<8x128xf32>
    %cst_34 = arith.constant 5.000000e-01 : f32
    %67 = vector.broadcast %cst_34 : f32 to vector<8x128xf32>
    %68 = arith.addf %66, %67 : vector<8x128xf32>
    %69 = vector.extract_strided_slice %52 {offsets = [0, 256], sizes = [8, 128], strides = [1, 1]} : vector<8x512xf32> to vector<8x128xf32>
    %70 = math.tanh %69 : vector<8x128xf32>
    %71 = vector.extract_strided_slice %52 {offsets = [0, 384], sizes = [8, 128], strides = [1, 1]} : vector<8x512xf32> to vector<8x128xf32>
    %cst_35 = arith.constant 5.000000e-01 : f32
    %72 = vector.broadcast %cst_35 : f32 to vector<8x128xf32>
    %73 = arith.mulf %72, %71 : vector<8x128xf32>
    %74 = math.tanh %73 : vector<8x128xf32>
    %cst_36 = arith.constant 5.000000e-01 : f32
    %75 = vector.broadcast %cst_36 : f32 to vector<8x128xf32>
    %76 = arith.mulf %75, %74 : vector<8x128xf32>
    %cst_37 = arith.constant 5.000000e-01 : f32
    %77 = vector.broadcast %cst_37 : f32 to vector<8x128xf32>
    %78 = arith.addf %76, %77 : vector<8x128xf32>
    %79 = arith.mulf %68, %9 : vector<8x128xf32>
    %80 = arith.mulf %60, %70 : vector<8x128xf32>
    %81 = arith.addf %79, %80 : vector<8x128xf32>
    %82 = math.tanh %81 : vector<8x128xf32>
    %83 = arith.mulf %78, %82 : vector<8x128xf32>
    %84 = vector.extract_strided_slice %5 {offsets = [8, 0], sizes = [8, 512], strides = [1, 1]} : vector<64x512xf32> to vector<8x512xf32>
    %c0_38 = arith.constant 0 : index
    %c0_39 = arith.constant 0 : index
    %85 = vector.load %arg3[%c0_38, %c0_39] : memref<128x512xf32, #tpu.memory_space<vmem>>, vector<128x512xf32>
    %cst_40 = arith.constant dense<0.000000e+00> : vector<8x512xf32>
    %86 = tpu.matmul %44, %85, %cst_40 {dimension_numbers = #tpu.dot_dimension_numbers<[1], [0], [0], [1], [0, 0, 1, 1], [], []>} : vector<8x128xf32>, vector<128x512xf32>, vector<8x512xf32> -> vector<8x512xf32>
    %87 = arith.addf %84, %86 : vector<8x512xf32>
    %88 = vector.extract_strided_slice %87 {offsets = [0, 0], sizes = [8, 128], strides = [1, 1]} : vector<8x512xf32> to vector<8x128xf32>
    %cst_41 = arith.constant 5.000000e-01 : f32
    %89 = vector.broadcast %cst_41 : f32 to vector<8x128xf32>
    %90 = arith.mulf %89, %88 : vector<8x128xf32>
    %91 = math.tanh %90 : vector<8x128xf32>
    %cst_42 = arith.constant 5.000000e-01 : f32
    %92 = vector.broadcast %cst_42 : f32 to vector<8x128xf32>
    %93 = arith.mulf %92, %91 : vector<8x128xf32>
    %cst_43 = arith.constant 5.000000e-01 : f32
    %94 = vector.broadcast %cst_43 : f32 to vector<8x128xf32>
    %95 = arith.addf %93, %94 : vector<8x128xf32>
    %96 = vector.extract_strided_slice %87 {offsets = [0, 128], sizes = [8, 128], strides = [1, 1]} : vector<8x512xf32> to vector<8x128xf32>
    %cst_44 = arith.constant 5.000000e-01 : f32
    %97 = vector.broadcast %cst_44 : f32 to vector<8x128xf32>
    %98 = arith.mulf %97, %96 : vector<8x128xf32>
    %99 = math.tanh %98 : vector<8x128xf32>
    %cst_45 = arith.constant 5.000000e-01 : f32
    %100 = vector.broadcast %cst_45 : f32 to vector<8x128xf32>
    %101 = arith.mulf %100, %99 : vector<8x128xf32>
    %cst_46 = arith.constant 5.000000e-01 : f32
    %102 = vector.broadcast %cst_46 : f32 to vector<8x128xf32>
    %103 = arith.addf %101, %102 : vector<8x128xf32>
    %104 = vector.extract_strided_slice %87 {offsets = [0, 256], sizes = [8, 128], strides = [1, 1]} : vector<8x512xf32> to vector<8x128xf32>
    %105 = math.tanh %104 : vector<8x128xf32>
    %106 = vector.extract_strided_slice %87 {offsets = [0, 384], sizes = [8, 128], strides = [1, 1]} : vector<8x512xf32> to vector<8x128xf32>
    %cst_47 = arith.constant 5.000000e-01 : f32
    %107 = vector.broadcast %cst_47 : f32 to vector<8x128xf32>
    %108 = arith.mulf %107, %106 : vector<8x128xf32>
    %109 = math.tanh %108 : vector<8x128xf32>
    %cst_48 = arith.constant 5.000000e-01 : f32
    %110 = vector.broadcast %cst_48 : f32 to vector<8x128xf32>
    %111 = arith.mulf %110, %109 : vector<8x128xf32>
    %cst_49 = arith.constant 5.000000e-01 : f32
    %112 = vector.broadcast %cst_49 : f32 to vector<8x128xf32>
    %113 = arith.addf %111, %112 : vector<8x128xf32>
    %114 = arith.mulf %103, %42 : vector<8x128xf32>
    %115 = arith.mulf %95, %105 : vector<8x128xf32>
    %116 = arith.addf %114, %115 : vector<8x128xf32>
    %117 = math.tanh %116 : vector<8x128xf32>
    %118 = arith.mulf %113, %117 : vector<8x128xf32>
    %c0_50 = arith.constant 0 : index
    %c0_51 = arith.constant 0 : index
    %119 = vector.load %arg4[%c0_50, %c0_51] : memref<128x512xf32, #tpu.memory_space<vmem>>, vector<128x512xf32>
    %cst_52 = arith.constant dense<0.000000e+00> : vector<8x512xf32>
    %120 = tpu.matmul %118, %119, %cst_52 {dimension_numbers = #tpu.dot_dimension_numbers<[1], [0], [0], [1], [0, 0, 1, 1], [], []>} : vector<8x128xf32>, vector<128x512xf32>, vector<8x512xf32> -> vector<8x512xf32>
    %c0_53 = arith.constant 0 : index
    %c0_54 = arith.constant 0 : index
    %121 = vector.load %arg5[%c0_53, %c0_54] : memref<128x512xf32, #tpu.memory_space<vmem>>, vector<128x512xf32>
    %cst_55 = arith.constant dense<0.000000e+00> : vector<8x512xf32>
    %122 = tpu.matmul %83, %121, %cst_55 {dimension_numbers = #tpu.dot_dimension_numbers<[1], [0], [0], [1], [0, 0, 1, 1], [], []>} : vector<8x128xf32>, vector<128x512xf32>, vector<8x512xf32> -> vector<8x512xf32>
    %123 = arith.addf %120, %122 : vector<8x512xf32>
    %c0_56 = arith.constant 0 : index
    %c0_57 = arith.constant 0 : index
    %124 = vector.load %arg6[%c0_56, %c0_57] : memref<1x512xf32, #tpu.memory_space<vmem>>, vector<1x512xf32>
    %125 = vector.broadcast %124 : vector<1x512xf32> to vector<8x512xf32>
    %126 = arith.addf %123, %125 : vector<8x512xf32>
    %127 = vector.extract_strided_slice %126 {offsets = [0, 0], sizes = [8, 128], strides = [1, 1]} : vector<8x512xf32> to vector<8x128xf32>
    %cst_58 = arith.constant 5.000000e-01 : f32
    %128 = vector.broadcast %cst_58 : f32 to vector<8x128xf32>
    %129 = arith.mulf %128, %127 : vector<8x128xf32>
    %130 = math.tanh %129 : vector<8x128xf32>
    %cst_59 = arith.constant 5.000000e-01 : f32
    %131 = vector.broadcast %cst_59 : f32 to vector<8x128xf32>
    %132 = arith.mulf %131, %130 : vector<8x128xf32>
    %cst_60 = arith.constant 5.000000e-01 : f32
    %133 = vector.broadcast %cst_60 : f32 to vector<8x128xf32>
    %134 = arith.addf %132, %133 : vector<8x128xf32>
    %135 = vector.extract_strided_slice %126 {offsets = [0, 128], sizes = [8, 128], strides = [1, 1]} : vector<8x512xf32> to vector<8x128xf32>
    %cst_61 = arith.constant 5.000000e-01 : f32
    %136 = vector.broadcast %cst_61 : f32 to vector<8x128xf32>
    %137 = arith.mulf %136, %135 : vector<8x128xf32>
    %138 = math.tanh %137 : vector<8x128xf32>
    %cst_62 = arith.constant 5.000000e-01 : f32
    %139 = vector.broadcast %cst_62 : f32 to vector<8x128xf32>
    %140 = arith.mulf %139, %138 : vector<8x128xf32>
    %cst_63 = arith.constant 5.000000e-01 : f32
    %141 = vector.broadcast %cst_63 : f32 to vector<8x128xf32>
    %142 = arith.addf %140, %141 : vector<8x128xf32>
    %143 = vector.extract_strided_slice %126 {offsets = [0, 256], sizes = [8, 128], strides = [1, 1]} : vector<8x512xf32> to vector<8x128xf32>
    %144 = math.tanh %143 : vector<8x128xf32>
    %145 = vector.extract_strided_slice %126 {offsets = [0, 384], sizes = [8, 128], strides = [1, 1]} : vector<8x512xf32> to vector<8x128xf32>
    %cst_64 = arith.constant 5.000000e-01 : f32
    %146 = vector.broadcast %cst_64 : f32 to vector<8x128xf32>
    %147 = arith.mulf %146, %145 : vector<8x128xf32>
    %148 = math.tanh %147 : vector<8x128xf32>
    %cst_65 = arith.constant 5.000000e-01 : f32
    %149 = vector.broadcast %cst_65 : f32 to vector<8x128xf32>
    %150 = arith.mulf %149, %148 : vector<8x128xf32>
    %cst_66 = arith.constant 5.000000e-01 : f32
    %151 = vector.broadcast %cst_66 : f32 to vector<8x128xf32>
    %152 = arith.addf %150, %151 : vector<8x128xf32>
    %153 = arith.mulf %142, %81 : vector<8x128xf32>
    %154 = arith.mulf %134, %144 : vector<8x128xf32>
    %155 = arith.addf %153, %154 : vector<8x128xf32>
    %156 = math.tanh %155 : vector<8x128xf32>
    %157 = arith.mulf %152, %156 : vector<8x128xf32>
    %158 = vector.extract_strided_slice %5 {offsets = [16, 0], sizes = [8, 512], strides = [1, 1]} : vector<64x512xf32> to vector<8x512xf32>
    %c0_67 = arith.constant 0 : index
    %c0_68 = arith.constant 0 : index
    %159 = vector.load %arg3[%c0_67, %c0_68] : memref<128x512xf32, #tpu.memory_space<vmem>>, vector<128x512xf32>
    %cst_69 = arith.constant dense<0.000000e+00> : vector<8x512xf32>
    %160 = tpu.matmul %118, %159, %cst_69 {dimension_numbers = #tpu.dot_dimension_numbers<[1], [0], [0], [1], [0, 0, 1, 1], [], []>} : vector<8x128xf32>, vector<128x512xf32>, vector<8x512xf32> -> vector<8x512xf32>
    %161 = arith.addf %158, %160 : vector<8x512xf32>
    %162 = vector.extract_strided_slice %161 {offsets = [0, 0], sizes = [8, 128], strides = [1, 1]} : vector<8x512xf32> to vector<8x128xf32>
    %cst_70 = arith.constant 5.000000e-01 : f32
    %163 = vector.broadcast %cst_70 : f32 to vector<8x128xf32>
    %164 = arith.mulf %163, %162 : vector<8x128xf32>
    %165 = math.tanh %164 : vector<8x128xf32>
    %cst_71 = arith.constant 5.000000e-01 : f32
    %166 = vector.broadcast %cst_71 : f32 to vector<8x128xf32>
    %167 = arith.mulf %166, %165 : vector<8x128xf32>
    %cst_72 = arith.constant 5.000000e-01 : f32
    %168 = vector.broadcast %cst_72 : f32 to vector<8x128xf32>
    %169 = arith.addf %167, %168 : vector<8x128xf32>
    %170 = vector.extract_strided_slice %161 {offsets = [0, 128], sizes = [8, 128], strides = [1, 1]} : vector<8x512xf32> to vector<8x128xf32>
    %cst_73 = arith.constant 5.000000e-01 : f32
    %171 = vector.broadcast %cst_73 : f32 to vector<8x128xf32>
    %172 = arith.mulf %171, %170 : vector<8x128xf32>
    %173 = math.tanh %172 : vector<8x128xf32>
    %cst_74 = arith.constant 5.000000e-01 : f32
    %174 = vector.broadcast %cst_74 : f32 to vector<8x128xf32>
    %175 = arith.mulf %174, %173 : vector<8x128xf32>
    %cst_75 = arith.constant 5.000000e-01 : f32
    %176 = vector.broadcast %cst_75 : f32 to vector<8x128xf32>
    %177 = arith.addf %175, %176 : vector<8x128xf32>
    %178 = vector.extract_strided_slice %161 {offsets = [0, 256], sizes = [8, 128], strides = [1, 1]} : vector<8x512xf32> to vector<8x128xf32>
    %179 = math.tanh %178 : vector<8x128xf32>
    %180 = vector.extract_strided_slice %161 {offsets = [0, 384], sizes = [8, 128], strides = [1, 1]} : vector<8x512xf32> to vector<8x128xf32>
    %cst_76 = arith.constant 5.000000e-01 : f32
    %181 = vector.broadcast %cst_76 : f32 to vector<8x128xf32>
    %182 = arith.mulf %181, %180 : vector<8x128xf32>
    %183 = math.tanh %182 : vector<8x128xf32>
    %cst_77 = arith.constant 5.000000e-01 : f32
    %184 = vector.broadcast %cst_77 : f32 to vector<8x128xf32>
    %185 = arith.mulf %184, %183 : vector<8x128xf32>
    %cst_78 = arith.constant 5.000000e-01 : f32
    %186 = vector.broadcast %cst_78 : f32 to vector<8x128xf32>
    %187 = arith.addf %185, %186 : vector<8x128xf32>
    %188 = arith.mulf %177, %116 : vector<8x128xf32>
    %189 = arith.mulf %169, %179 : vector<8x128xf32>
    %190 = arith.addf %188, %189 : vector<8x128xf32>
    %191 = math.tanh %190 : vector<8x128xf32>
    %192 = arith.mulf %187, %191 : vector<8x128xf32>
    %c0_79 = arith.constant 0 : index
    %c0_80 = arith.constant 0 : index
    %193 = vector.load %arg4[%c0_79, %c0_80] : memref<128x512xf32, #tpu.memory_space<vmem>>, vector<128x512xf32>
    %cst_81 = arith.constant dense<0.000000e+00> : vector<8x512xf32>
    %194 = tpu.matmul %192, %193, %cst_81 {dimension_numbers = #tpu.dot_dimension_numbers<[1], [0], [0], [1], [0, 0, 1, 1], [], []>} : vector<8x128xf32>, vector<128x512xf32>, vector<8x512xf32> -> vector<8x512xf32>
    %c0_82 = arith.constant 0 : index
    %c0_83 = arith.constant 0 : index
    %195 = vector.load %arg5[%c0_82, %c0_83] : memref<128x512xf32, #tpu.memory_space<vmem>>, vector<128x512xf32>
    %cst_84 = arith.constant dense<0.000000e+00> : vector<8x512xf32>
    %196 = tpu.matmul %157, %195, %cst_84 {dimension_numbers = #tpu.dot_dimension_numbers<[1], [0], [0], [1], [0, 0, 1, 1], [], []>} : vector<8x128xf32>, vector<128x512xf32>, vector<8x512xf32> -> vector<8x512xf32>
    %197 = arith.addf %194, %196 : vector<8x512xf32>
    %c0_85 = arith.constant 0 : index
    %c0_86 = arith.constant 0 : index
    %198 = vector.load %arg6[%c0_85, %c0_86] : memref<1x512xf32, #tpu.memory_space<vmem>>, vector<1x512xf32>
    %199 = vector.broadcast %198 : vector<1x512xf32> to vector<8x512xf32>
    %200 = arith.addf %197, %199 : vector<8x512xf32>
    %201 = vector.extract_strided_slice %200 {offsets = [0, 0], sizes = [8, 128], strides = [1, 1]} : vector<8x512xf32> to vector<8x128xf32>
    %cst_87 = arith.constant 5.000000e-01 : f32
    %202 = vector.broadcast %cst_87 : f32 to vector<8x128xf32>
    %203 = arith.mulf %202, %201 : vector<8x128xf32>
    %204 = math.tanh %203 : vector<8x128xf32>
    %cst_88 = arith.constant 5.000000e-01 : f32
    %205 = vector.broadcast %cst_88 : f32 to vector<8x128xf32>
    %206 = arith.mulf %205, %204 : vector<8x128xf32>
    %cst_89 = arith.constant 5.000000e-01 : f32
    %207 = vector.broadcast %cst_89 : f32 to vector<8x128xf32>
    %208 = arith.addf %206, %207 : vector<8x128xf32>
    %209 = vector.extract_strided_slice %200 {offsets = [0, 128], sizes = [8, 128], strides = [1, 1]} : vector<8x512xf32> to vector<8x128xf32>
    %cst_90 = arith.constant 5.000000e-01 : f32
    %210 = vector.broadcast %cst_90 : f32 to vector<8x128xf32>
    %211 = arith.mulf %210, %209 : vector<8x128xf32>
    %212 = math.tanh %211 : vector<8x128xf32>
    %cst_91 = arith.constant 5.000000e-01 : f32
    %213 = vector.broadcast %cst_91 : f32 to vector<8x128xf32>
    %214 = arith.mulf %213, %212 : vector<8x128xf32>
    %cst_92 = arith.constant 5.000000e-01 : f32
    %215 = vector.broadcast %cst_92 : f32 to vector<8x128xf32>
    %216 = arith.addf %214, %215 : vector<8x128xf32>
    %217 = vector.extract_strided_slice %200 {offsets = [0, 256], sizes = [8, 128], strides = [1, 1]} : vector<8x512xf32> to vector<8x128xf32>
    %218 = math.tanh %217 : vector<8x128xf32>
    %219 = vector.extract_strided_slice %200 {offsets = [0, 384], sizes = [8, 128], strides = [1, 1]} : vector<8x512xf32> to vector<8x128xf32>
    %cst_93 = arith.constant 5.000000e-01 : f32
    %220 = vector.broadcast %cst_93 : f32 to vector<8x128xf32>
    %221 = arith.mulf %220, %219 : vector<8x128xf32>
    %222 = math.tanh %221 : vector<8x128xf32>
    %cst_94 = arith.constant 5.000000e-01 : f32
    %223 = vector.broadcast %cst_94 : f32 to vector<8x128xf32>
    %224 = arith.mulf %223, %222 : vector<8x128xf32>
    %cst_95 = arith.constant 5.000000e-01 : f32
    %225 = vector.broadcast %cst_95 : f32 to vector<8x128xf32>
    %226 = arith.addf %224, %225 : vector<8x128xf32>
    %227 = arith.mulf %216, %155 : vector<8x128xf32>
    %228 = arith.mulf %208, %218 : vector<8x128xf32>
    %229 = arith.addf %227, %228 : vector<8x128xf32>
    %230 = math.tanh %229 : vector<8x128xf32>
    %231 = arith.mulf %226, %230 : vector<8x128xf32>
    %232 = vector.extract_strided_slice %5 {offsets = [24, 0], sizes = [8, 512], strides = [1, 1]} : vector<64x512xf32> to vector<8x512xf32>
    %c0_96 = arith.constant 0 : index
    %c0_97 = arith.constant 0 : index
    %233 = vector.load %arg3[%c0_96, %c0_97] : memref<128x512xf32, #tpu.memory_space<vmem>>, vector<128x512xf32>
    %cst_98 = arith.constant dense<0.000000e+00> : vector<8x512xf32>
    %234 = tpu.matmul %192, %233, %cst_98 {dimension_numbers = #tpu.dot_dimension_numbers<[1], [0], [0], [1], [0, 0, 1, 1], [], []>} : vector<8x128xf32>, vector<128x512xf32>, vector<8x512xf32> -> vector<8x512xf32>
    %235 = arith.addf %232, %234 : vector<8x512xf32>
    %236 = vector.extract_strided_slice %235 {offsets = [0, 0], sizes = [8, 128], strides = [1, 1]} : vector<8x512xf32> to vector<8x128xf32>
    %cst_99 = arith.constant 5.000000e-01 : f32
    %237 = vector.broadcast %cst_99 : f32 to vector<8x128xf32>
    %238 = arith.mulf %237, %236 : vector<8x128xf32>
    %239 = math.tanh %238 : vector<8x128xf32>
    %cst_100 = arith.constant 5.000000e-01 : f32
    %240 = vector.broadcast %cst_100 : f32 to vector<8x128xf32>
    %241 = arith.mulf %240, %239 : vector<8x128xf32>
    %cst_101 = arith.constant 5.000000e-01 : f32
    %242 = vector.broadcast %cst_101 : f32 to vector<8x128xf32>
    %243 = arith.addf %241, %242 : vector<8x128xf32>
    %244 = vector.extract_strided_slice %235 {offsets = [0, 128], sizes = [8, 128], strides = [1, 1]} : vector<8x512xf32> to vector<8x128xf32>
    %cst_102 = arith.constant 5.000000e-01 : f32
    %245 = vector.broadcast %cst_102 : f32 to vector<8x128xf32>
    %246 = arith.mulf %245, %244 : vector<8x128xf32>
    %247 = math.tanh %246 : vector<8x128xf32>
    %cst_103 = arith.constant 5.000000e-01 : f32
    %248 = vector.broadcast %cst_103 : f32 to vector<8x128xf32>
    %249 = arith.mulf %248, %247 : vector<8x128xf32>
    %cst_104 = arith.constant 5.000000e-01 : f32
    %250 = vector.broadcast %cst_104 : f32 to vector<8x128xf32>
    %251 = arith.addf %249, %250 : vector<8x128xf32>
    %252 = vector.extract_strided_slice %235 {offsets = [0, 256], sizes = [8, 128], strides = [1, 1]} : vector<8x512xf32> to vector<8x128xf32>
    %253 = math.tanh %252 : vector<8x128xf32>
    %254 = vector.extract_strided_slice %235 {offsets = [0, 384], sizes = [8, 128], strides = [1, 1]} : vector<8x512xf32> to vector<8x128xf32>
    %cst_105 = arith.constant 5.000000e-01 : f32
    %255 = vector.broadcast %cst_105 : f32 to vector<8x128xf32>
    %256 = arith.mulf %255, %254 : vector<8x128xf32>
    %257 = math.tanh %256 : vector<8x128xf32>
    %cst_106 = arith.constant 5.000000e-01 : f32
    %258 = vector.broadcast %cst_106 : f32 to vector<8x128xf32>
    %259 = arith.mulf %258, %257 : vector<8x128xf32>
    %cst_107 = arith.constant 5.000000e-01 : f32
    %260 = vector.broadcast %cst_107 : f32 to vector<8x128xf32>
    %261 = arith.addf %259, %260 : vector<8x128xf32>
    %262 = arith.mulf %251, %190 : vector<8x128xf32>
    %263 = arith.mulf %243, %253 : vector<8x128xf32>
    %264 = arith.addf %262, %263 : vector<8x128xf32>
    %265 = math.tanh %264 : vector<8x128xf32>
    %266 = arith.mulf %261, %265 : vector<8x128xf32>
    %c0_108 = arith.constant 0 : index
    %c0_109 = arith.constant 0 : index
    %267 = vector.load %arg4[%c0_108, %c0_109] : memref<128x512xf32, #tpu.memory_space<vmem>>, vector<128x512xf32>
    %cst_110 = arith.constant dense<0.000000e+00> : vector<8x512xf32>
    %268 = tpu.matmul %266, %267, %cst_110 {dimension_numbers = #tpu.dot_dimension_numbers<[1], [0], [0], [1], [0, 0, 1, 1], [], []>} : vector<8x128xf32>, vector<128x512xf32>, vector<8x512xf32> -> vector<8x512xf32>
    %c0_111 = arith.constant 0 : index
    %c0_112 = arith.constant 0 : index
    %269 = vector.load %arg5[%c0_111, %c0_112] : memref<128x512xf32, #tpu.memory_space<vmem>>, vector<128x512xf32>
    %cst_113 = arith.constant dense<0.000000e+00> : vector<8x512xf32>
    %270 = tpu.matmul %231, %269, %cst_113 {dimension_numbers = #tpu.dot_dimension_numbers<[1], [0], [0], [1], [0, 0, 1, 1], [], []>} : vector<8x128xf32>, vector<128x512xf32>, vector<8x512xf32> -> vector<8x512xf32>
    %271 = arith.addf %268, %270 : vector<8x512xf32>
    %c0_114 = arith.constant 0 : index
    %c0_115 = arith.constant 0 : index
    %272 = vector.load %arg6[%c0_114, %c0_115] : memref<1x512xf32, #tpu.memory_space<vmem>>, vector<1x512xf32>
    %273 = vector.broadcast %272 : vector<1x512xf32> to vector<8x512xf32>
    %274 = arith.addf %271, %273 : vector<8x512xf32>
    %275 = vector.extract_strided_slice %274 {offsets = [0, 0], sizes = [8, 128], strides = [1, 1]} : vector<8x512xf32> to vector<8x128xf32>
    %cst_116 = arith.constant 5.000000e-01 : f32
    %276 = vector.broadcast %cst_116 : f32 to vector<8x128xf32>
    %277 = arith.mulf %276, %275 : vector<8x128xf32>
    %278 = math.tanh %277 : vector<8x128xf32>
    %cst_117 = arith.constant 5.000000e-01 : f32
    %279 = vector.broadcast %cst_117 : f32 to vector<8x128xf32>
    %280 = arith.mulf %279, %278 : vector<8x128xf32>
    %cst_118 = arith.constant 5.000000e-01 : f32
    %281 = vector.broadcast %cst_118 : f32 to vector<8x128xf32>
    %282 = arith.addf %280, %281 : vector<8x128xf32>
    %283 = vector.extract_strided_slice %274 {offsets = [0, 128], sizes = [8, 128], strides = [1, 1]} : vector<8x512xf32> to vector<8x128xf32>
    %cst_119 = arith.constant 5.000000e-01 : f32
    %284 = vector.broadcast %cst_119 : f32 to vector<8x128xf32>
    %285 = arith.mulf %284, %283 : vector<8x128xf32>
    %286 = math.tanh %285 : vector<8x128xf32>
    %cst_120 = arith.constant 5.000000e-01 : f32
    %287 = vector.broadcast %cst_120 : f32 to vector<8x128xf32>
    %288 = arith.mulf %287, %286 : vector<8x128xf32>
    %cst_121 = arith.constant 5.000000e-01 : f32
    %289 = vector.broadcast %cst_121 : f32 to vector<8x128xf32>
    %290 = arith.addf %288, %289 : vector<8x128xf32>
    %291 = vector.extract_strided_slice %274 {offsets = [0, 256], sizes = [8, 128], strides = [1, 1]} : vector<8x512xf32> to vector<8x128xf32>
    %292 = math.tanh %291 : vector<8x128xf32>
    %293 = vector.extract_strided_slice %274 {offsets = [0, 384], sizes = [8, 128], strides = [1, 1]} : vector<8x512xf32> to vector<8x128xf32>
    %cst_122 = arith.constant 5.000000e-01 : f32
    %294 = vector.broadcast %cst_122 : f32 to vector<8x128xf32>
    %295 = arith.mulf %294, %293 : vector<8x128xf32>
    %296 = math.tanh %295 : vector<8x128xf32>
    %cst_123 = arith.constant 5.000000e-01 : f32
    %297 = vector.broadcast %cst_123 : f32 to vector<8x128xf32>
    %298 = arith.mulf %297, %296 : vector<8x128xf32>
    %cst_124 = arith.constant 5.000000e-01 : f32
    %299 = vector.broadcast %cst_124 : f32 to vector<8x128xf32>
    %300 = arith.addf %298, %299 : vector<8x128xf32>
    %301 = arith.mulf %290, %229 : vector<8x128xf32>
    %302 = arith.mulf %282, %292 : vector<8x128xf32>
    %303 = arith.addf %301, %302 : vector<8x128xf32>
    %304 = math.tanh %303 : vector<8x128xf32>
    %305 = arith.mulf %300, %304 : vector<8x128xf32>
    %306 = vector.extract_strided_slice %5 {offsets = [32, 0], sizes = [8, 512], strides = [1, 1]} : vector<64x512xf32> to vector<8x512xf32>
    %c0_125 = arith.constant 0 : index
    %c0_126 = arith.constant 0 : index
    %307 = vector.load %arg3[%c0_125, %c0_126] : memref<128x512xf32, #tpu.memory_space<vmem>>, vector<128x512xf32>
    %cst_127 = arith.constant dense<0.000000e+00> : vector<8x512xf32>
    %308 = tpu.matmul %266, %307, %cst_127 {dimension_numbers = #tpu.dot_dimension_numbers<[1], [0], [0], [1], [0, 0, 1, 1], [], []>} : vector<8x128xf32>, vector<128x512xf32>, vector<8x512xf32> -> vector<8x512xf32>
    %309 = arith.addf %306, %308 : vector<8x512xf32>
    %310 = vector.extract_strided_slice %309 {offsets = [0, 0], sizes = [8, 128], strides = [1, 1]} : vector<8x512xf32> to vector<8x128xf32>
    %cst_128 = arith.constant 5.000000e-01 : f32
    %311 = vector.broadcast %cst_128 : f32 to vector<8x128xf32>
    %312 = arith.mulf %311, %310 : vector<8x128xf32>
    %313 = math.tanh %312 : vector<8x128xf32>
    %cst_129 = arith.constant 5.000000e-01 : f32
    %314 = vector.broadcast %cst_129 : f32 to vector<8x128xf32>
    %315 = arith.mulf %314, %313 : vector<8x128xf32>
    %cst_130 = arith.constant 5.000000e-01 : f32
    %316 = vector.broadcast %cst_130 : f32 to vector<8x128xf32>
    %317 = arith.addf %315, %316 : vector<8x128xf32>
    %318 = vector.extract_strided_slice %309 {offsets = [0, 128], sizes = [8, 128], strides = [1, 1]} : vector<8x512xf32> to vector<8x128xf32>
    %cst_131 = arith.constant 5.000000e-01 : f32
    %319 = vector.broadcast %cst_131 : f32 to vector<8x128xf32>
    %320 = arith.mulf %319, %318 : vector<8x128xf32>
    %321 = math.tanh %320 : vector<8x128xf32>
    %cst_132 = arith.constant 5.000000e-01 : f32
    %322 = vector.broadcast %cst_132 : f32 to vector<8x128xf32>
    %323 = arith.mulf %322, %321 : vector<8x128xf32>
    %cst_133 = arith.constant 5.000000e-01 : f32
    %324 = vector.broadcast %cst_133 : f32 to vector<8x128xf32>
    %325 = arith.addf %323, %324 : vector<8x128xf32>
    %326 = vector.extract_strided_slice %309 {offsets = [0, 256], sizes = [8, 128], strides = [1, 1]} : vector<8x512xf32> to vector<8x128xf32>
    %327 = math.tanh %326 : vector<8x128xf32>
    %328 = vector.extract_strided_slice %309 {offsets = [0, 384], sizes = [8, 128], strides = [1, 1]} : vector<8x512xf32> to vector<8x128xf32>
    %cst_134 = arith.constant 5.000000e-01 : f32
    %329 = vector.broadcast %cst_134 : f32 to vector<8x128xf32>
    %330 = arith.mulf %329, %328 : vector<8x128xf32>
    %331 = math.tanh %330 : vector<8x128xf32>
    %cst_135 = arith.constant 5.000000e-01 : f32
    %332 = vector.broadcast %cst_135 : f32 to vector<8x128xf32>
    %333 = arith.mulf %332, %331 : vector<8x128xf32>
    %cst_136 = arith.constant 5.000000e-01 : f32
    %334 = vector.broadcast %cst_136 : f32 to vector<8x128xf32>
    %335 = arith.addf %333, %334 : vector<8x128xf32>
    %336 = arith.mulf %325, %264 : vector<8x128xf32>
    %337 = arith.mulf %317, %327 : vector<8x128xf32>
    %338 = arith.addf %336, %337 : vector<8x128xf32>
    %339 = math.tanh %338 : vector<8x128xf32>
    %340 = arith.mulf %335, %339 : vector<8x128xf32>
    %c0_137 = arith.constant 0 : index
    %c0_138 = arith.constant 0 : index
    %341 = vector.load %arg4[%c0_137, %c0_138] : memref<128x512xf32, #tpu.memory_space<vmem>>, vector<128x512xf32>
    %cst_139 = arith.constant dense<0.000000e+00> : vector<8x512xf32>
    %342 = tpu.matmul %340, %341, %cst_139 {dimension_numbers = #tpu.dot_dimension_numbers<[1], [0], [0], [1], [0, 0, 1, 1], [], []>} : vector<8x128xf32>, vector<128x512xf32>, vector<8x512xf32> -> vector<8x512xf32>
    %c0_140 = arith.constant 0 : index
    %c0_141 = arith.constant 0 : index
    %343 = vector.load %arg5[%c0_140, %c0_141] : memref<128x512xf32, #tpu.memory_space<vmem>>, vector<128x512xf32>
    %cst_142 = arith.constant dense<0.000000e+00> : vector<8x512xf32>
    %344 = tpu.matmul %305, %343, %cst_142 {dimension_numbers = #tpu.dot_dimension_numbers<[1], [0], [0], [1], [0, 0, 1, 1], [], []>} : vector<8x128xf32>, vector<128x512xf32>, vector<8x512xf32> -> vector<8x512xf32>
    %345 = arith.addf %342, %344 : vector<8x512xf32>
    %c0_143 = arith.constant 0 : index
    %c0_144 = arith.constant 0 : index
    %346 = vector.load %arg6[%c0_143, %c0_144] : memref<1x512xf32, #tpu.memory_space<vmem>>, vector<1x512xf32>
    %347 = vector.broadcast %346 : vector<1x512xf32> to vector<8x512xf32>
    %348 = arith.addf %345, %347 : vector<8x512xf32>
    %349 = vector.extract_strided_slice %348 {offsets = [0, 0], sizes = [8, 128], strides = [1, 1]} : vector<8x512xf32> to vector<8x128xf32>
    %cst_145 = arith.constant 5.000000e-01 : f32
    %350 = vector.broadcast %cst_145 : f32 to vector<8x128xf32>
    %351 = arith.mulf %350, %349 : vector<8x128xf32>
    %352 = math.tanh %351 : vector<8x128xf32>
    %cst_146 = arith.constant 5.000000e-01 : f32
    %353 = vector.broadcast %cst_146 : f32 to vector<8x128xf32>
    %354 = arith.mulf %353, %352 : vector<8x128xf32>
    %cst_147 = arith.constant 5.000000e-01 : f32
    %355 = vector.broadcast %cst_147 : f32 to vector<8x128xf32>
    %356 = arith.addf %354, %355 : vector<8x128xf32>
    %357 = vector.extract_strided_slice %348 {offsets = [0, 128], sizes = [8, 128], strides = [1, 1]} : vector<8x512xf32> to vector<8x128xf32>
    %cst_148 = arith.constant 5.000000e-01 : f32
    %358 = vector.broadcast %cst_148 : f32 to vector<8x128xf32>
    %359 = arith.mulf %358, %357 : vector<8x128xf32>
    %360 = math.tanh %359 : vector<8x128xf32>
    %cst_149 = arith.constant 5.000000e-01 : f32
    %361 = vector.broadcast %cst_149 : f32 to vector<8x128xf32>
    %362 = arith.mulf %361, %360 : vector<8x128xf32>
    %cst_150 = arith.constant 5.000000e-01 : f32
    %363 = vector.broadcast %cst_150 : f32 to vector<8x128xf32>
    %364 = arith.addf %362, %363 : vector<8x128xf32>
    %365 = vector.extract_strided_slice %348 {offsets = [0, 256], sizes = [8, 128], strides = [1, 1]} : vector<8x512xf32> to vector<8x128xf32>
    %366 = math.tanh %365 : vector<8x128xf32>
    %367 = vector.extract_strided_slice %348 {offsets = [0, 384], sizes = [8, 128], strides = [1, 1]} : vector<8x512xf32> to vector<8x128xf32>
    %cst_151 = arith.constant 5.000000e-01 : f32
    %368 = vector.broadcast %cst_151 : f32 to vector<8x128xf32>
    %369 = arith.mulf %368, %367 : vector<8x128xf32>
    %370 = math.tanh %369 : vector<8x128xf32>
    %cst_152 = arith.constant 5.000000e-01 : f32
    %371 = vector.broadcast %cst_152 : f32 to vector<8x128xf32>
    %372 = arith.mulf %371, %370 : vector<8x128xf32>
    %cst_153 = arith.constant 5.000000e-01 : f32
    %373 = vector.broadcast %cst_153 : f32 to vector<8x128xf32>
    %374 = arith.addf %372, %373 : vector<8x128xf32>
    %375 = arith.mulf %364, %303 : vector<8x128xf32>
    %376 = arith.mulf %356, %366 : vector<8x128xf32>
    %377 = arith.addf %375, %376 : vector<8x128xf32>
    %378 = math.tanh %377 : vector<8x128xf32>
    %379 = arith.mulf %374, %378 : vector<8x128xf32>
    %380 = vector.extract_strided_slice %5 {offsets = [40, 0], sizes = [8, 512], strides = [1, 1]} : vector<64x512xf32> to vector<8x512xf32>
    %c0_154 = arith.constant 0 : index
    %c0_155 = arith.constant 0 : index
    %381 = vector.load %arg3[%c0_154, %c0_155] : memref<128x512xf32, #tpu.memory_space<vmem>>, vector<128x512xf32>
    %cst_156 = arith.constant dense<0.000000e+00> : vector<8x512xf32>
    %382 = tpu.matmul %340, %381, %cst_156 {dimension_numbers = #tpu.dot_dimension_numbers<[1], [0], [0], [1], [0, 0, 1, 1], [], []>} : vector<8x128xf32>, vector<128x512xf32>, vector<8x512xf32> -> vector<8x512xf32>
    %383 = arith.addf %380, %382 : vector<8x512xf32>
    %384 = vector.extract_strided_slice %383 {offsets = [0, 0], sizes = [8, 128], strides = [1, 1]} : vector<8x512xf32> to vector<8x128xf32>
    %cst_157 = arith.constant 5.000000e-01 : f32
    %385 = vector.broadcast %cst_157 : f32 to vector<8x128xf32>
    %386 = arith.mulf %385, %384 : vector<8x128xf32>
    %387 = math.tanh %386 : vector<8x128xf32>
    %cst_158 = arith.constant 5.000000e-01 : f32
    %388 = vector.broadcast %cst_158 : f32 to vector<8x128xf32>
    %389 = arith.mulf %388, %387 : vector<8x128xf32>
    %cst_159 = arith.constant 5.000000e-01 : f32
    %390 = vector.broadcast %cst_159 : f32 to vector<8x128xf32>
    %391 = arith.addf %389, %390 : vector<8x128xf32>
    %392 = vector.extract_strided_slice %383 {offsets = [0, 128], sizes = [8, 128], strides = [1, 1]} : vector<8x512xf32> to vector<8x128xf32>
    %cst_160 = arith.constant 5.000000e-01 : f32
    %393 = vector.broadcast %cst_160 : f32 to vector<8x128xf32>
    %394 = arith.mulf %393, %392 : vector<8x128xf32>
    %395 = math.tanh %394 : vector<8x128xf32>
    %cst_161 = arith.constant 5.000000e-01 : f32
    %396 = vector.broadcast %cst_161 : f32 to vector<8x128xf32>
    %397 = arith.mulf %396, %395 : vector<8x128xf32>
    %cst_162 = arith.constant 5.000000e-01 : f32
    %398 = vector.broadcast %cst_162 : f32 to vector<8x128xf32>
    %399 = arith.addf %397, %398 : vector<8x128xf32>
    %400 = vector.extract_strided_slice %383 {offsets = [0, 256], sizes = [8, 128], strides = [1, 1]} : vector<8x512xf32> to vector<8x128xf32>
    %401 = math.tanh %400 : vector<8x128xf32>
    %402 = vector.extract_strided_slice %383 {offsets = [0, 384], sizes = [8, 128], strides = [1, 1]} : vector<8x512xf32> to vector<8x128xf32>
    %cst_163 = arith.constant 5.000000e-01 : f32
    %403 = vector.broadcast %cst_163 : f32 to vector<8x128xf32>
    %404 = arith.mulf %403, %402 : vector<8x128xf32>
    %405 = math.tanh %404 : vector<8x128xf32>
    %cst_164 = arith.constant 5.000000e-01 : f32
    %406 = vector.broadcast %cst_164 : f32 to vector<8x128xf32>
    %407 = arith.mulf %406, %405 : vector<8x128xf32>
    %cst_165 = arith.constant 5.000000e-01 : f32
    %408 = vector.broadcast %cst_165 : f32 to vector<8x128xf32>
    %409 = arith.addf %407, %408 : vector<8x128xf32>
    %410 = arith.mulf %399, %338 : vector<8x128xf32>
    %411 = arith.mulf %391, %401 : vector<8x128xf32>
    %412 = arith.addf %410, %411 : vector<8x128xf32>
    %413 = math.tanh %412 : vector<8x128xf32>
    %414 = arith.mulf %409, %413 : vector<8x128xf32>
    %c0_166 = arith.constant 0 : index
    %c0_167 = arith.constant 0 : index
    %415 = vector.load %arg4[%c0_166, %c0_167] : memref<128x512xf32, #tpu.memory_space<vmem>>, vector<128x512xf32>
    %cst_168 = arith.constant dense<0.000000e+00> : vector<8x512xf32>
    %416 = tpu.matmul %414, %415, %cst_168 {dimension_numbers = #tpu.dot_dimension_numbers<[1], [0], [0], [1], [0, 0, 1, 1], [], []>} : vector<8x128xf32>, vector<128x512xf32>, vector<8x512xf32> -> vector<8x512xf32>
    %c0_169 = arith.constant 0 : index
    %c0_170 = arith.constant 0 : index
    %417 = vector.load %arg5[%c0_169, %c0_170] : memref<128x512xf32, #tpu.memory_space<vmem>>, vector<128x512xf32>
    %cst_171 = arith.constant dense<0.000000e+00> : vector<8x512xf32>
    %418 = tpu.matmul %379, %417, %cst_171 {dimension_numbers = #tpu.dot_dimension_numbers<[1], [0], [0], [1], [0, 0, 1, 1], [], []>} : vector<8x128xf32>, vector<128x512xf32>, vector<8x512xf32> -> vector<8x512xf32>
    %419 = arith.addf %416, %418 : vector<8x512xf32>
    %c0_172 = arith.constant 0 : index
    %c0_173 = arith.constant 0 : index
    %420 = vector.load %arg6[%c0_172, %c0_173] : memref<1x512xf32, #tpu.memory_space<vmem>>, vector<1x512xf32>
    %421 = vector.broadcast %420 : vector<1x512xf32> to vector<8x512xf32>
    %422 = arith.addf %419, %421 : vector<8x512xf32>
    %423 = vector.extract_strided_slice %422 {offsets = [0, 0], sizes = [8, 128], strides = [1, 1]} : vector<8x512xf32> to vector<8x128xf32>
    %cst_174 = arith.constant 5.000000e-01 : f32
    %424 = vector.broadcast %cst_174 : f32 to vector<8x128xf32>
    %425 = arith.mulf %424, %423 : vector<8x128xf32>
    %426 = math.tanh %425 : vector<8x128xf32>
    %cst_175 = arith.constant 5.000000e-01 : f32
    %427 = vector.broadcast %cst_175 : f32 to vector<8x128xf32>
    %428 = arith.mulf %427, %426 : vector<8x128xf32>
    %cst_176 = arith.constant 5.000000e-01 : f32
    %429 = vector.broadcast %cst_176 : f32 to vector<8x128xf32>
    %430 = arith.addf %428, %429 : vector<8x128xf32>
    %431 = vector.extract_strided_slice %422 {offsets = [0, 128], sizes = [8, 128], strides = [1, 1]} : vector<8x512xf32> to vector<8x128xf32>
    %cst_177 = arith.constant 5.000000e-01 : f32
    %432 = vector.broadcast %cst_177 : f32 to vector<8x128xf32>
    %433 = arith.mulf %432, %431 : vector<8x128xf32>
    %434 = math.tanh %433 : vector<8x128xf32>
    %cst_178 = arith.constant 5.000000e-01 : f32
    %435 = vector.broadcast %cst_178 : f32 to vector<8x128xf32>
    %436 = arith.mulf %435, %434 : vector<8x128xf32>
    %cst_179 = arith.constant 5.000000e-01 : f32
    %437 = vector.broadcast %cst_179 : f32 to vector<8x128xf32>
    %438 = arith.addf %436, %437 : vector<8x128xf32>
    %439 = vector.extract_strided_slice %422 {offsets = [0, 256], sizes = [8, 128], strides = [1, 1]} : vector<8x512xf32> to vector<8x128xf32>
    %440 = math.tanh %439 : vector<8x128xf32>
    %441 = vector.extract_strided_slice %422 {offsets = [0, 384], sizes = [8, 128], strides = [1, 1]} : vector<8x512xf32> to vector<8x128xf32>
    %cst_180 = arith.constant 5.000000e-01 : f32
    %442 = vector.broadcast %cst_180 : f32 to vector<8x128xf32>
    %443 = arith.mulf %442, %441 : vector<8x128xf32>
    %444 = math.tanh %443 : vector<8x128xf32>
    %cst_181 = arith.constant 5.000000e-01 : f32
    %445 = vector.broadcast %cst_181 : f32 to vector<8x128xf32>
    %446 = arith.mulf %445, %444 : vector<8x128xf32>
    %cst_182 = arith.constant 5.000000e-01 : f32
    %447 = vector.broadcast %cst_182 : f32 to vector<8x128xf32>
    %448 = arith.addf %446, %447 : vector<8x128xf32>
    %449 = arith.mulf %438, %377 : vector<8x128xf32>
    %450 = arith.mulf %430, %440 : vector<8x128xf32>
    %451 = arith.addf %449, %450 : vector<8x128xf32>
    %452 = math.tanh %451 : vector<8x128xf32>
    %453 = arith.mulf %448, %452 : vector<8x128xf32>
    %454 = vector.extract_strided_slice %5 {offsets = [48, 0], sizes = [8, 512], strides = [1, 1]} : vector<64x512xf32> to vector<8x512xf32>
    %c0_183 = arith.constant 0 : index
    %c0_184 = arith.constant 0 : index
    %455 = vector.load %arg3[%c0_183, %c0_184] : memref<128x512xf32, #tpu.memory_space<vmem>>, vector<128x512xf32>
    %cst_185 = arith.constant dense<0.000000e+00> : vector<8x512xf32>
    %456 = tpu.matmul %414, %455, %cst_185 {dimension_numbers = #tpu.dot_dimension_numbers<[1], [0], [0], [1], [0, 0, 1, 1], [], []>} : vector<8x128xf32>, vector<128x512xf32>, vector<8x512xf32> -> vector<8x512xf32>
    %457 = arith.addf %454, %456 : vector<8x512xf32>
    %458 = vector.extract_strided_slice %457 {offsets = [0, 0], sizes = [8, 128], strides = [1, 1]} : vector<8x512xf32> to vector<8x128xf32>
    %cst_186 = arith.constant 5.000000e-01 : f32
    %459 = vector.broadcast %cst_186 : f32 to vector<8x128xf32>
    %460 = arith.mulf %459, %458 : vector<8x128xf32>
    %461 = math.tanh %460 : vector<8x128xf32>
    %cst_187 = arith.constant 5.000000e-01 : f32
    %462 = vector.broadcast %cst_187 : f32 to vector<8x128xf32>
    %463 = arith.mulf %462, %461 : vector<8x128xf32>
    %cst_188 = arith.constant 5.000000e-01 : f32
    %464 = vector.broadcast %cst_188 : f32 to vector<8x128xf32>
    %465 = arith.addf %463, %464 : vector<8x128xf32>
    %466 = vector.extract_strided_slice %457 {offsets = [0, 128], sizes = [8, 128], strides = [1, 1]} : vector<8x512xf32> to vector<8x128xf32>
    %cst_189 = arith.constant 5.000000e-01 : f32
    %467 = vector.broadcast %cst_189 : f32 to vector<8x128xf32>
    %468 = arith.mulf %467, %466 : vector<8x128xf32>
    %469 = math.tanh %468 : vector<8x128xf32>
    %cst_190 = arith.constant 5.000000e-01 : f32
    %470 = vector.broadcast %cst_190 : f32 to vector<8x128xf32>
    %471 = arith.mulf %470, %469 : vector<8x128xf32>
    %cst_191 = arith.constant 5.000000e-01 : f32
    %472 = vector.broadcast %cst_191 : f32 to vector<8x128xf32>
    %473 = arith.addf %471, %472 : vector<8x128xf32>
    %474 = vector.extract_strided_slice %457 {offsets = [0, 256], sizes = [8, 128], strides = [1, 1]} : vector<8x512xf32> to vector<8x128xf32>
    %475 = math.tanh %474 : vector<8x128xf32>
    %476 = vector.extract_strided_slice %457 {offsets = [0, 384], sizes = [8, 128], strides = [1, 1]} : vector<8x512xf32> to vector<8x128xf32>
    %cst_192 = arith.constant 5.000000e-01 : f32
    %477 = vector.broadcast %cst_192 : f32 to vector<8x128xf32>
    %478 = arith.mulf %477, %476 : vector<8x128xf32>
    %479 = math.tanh %478 : vector<8x128xf32>
    %cst_193 = arith.constant 5.000000e-01 : f32
    %480 = vector.broadcast %cst_193 : f32 to vector<8x128xf32>
    %481 = arith.mulf %480, %479 : vector<8x128xf32>
    %cst_194 = arith.constant 5.000000e-01 : f32
    %482 = vector.broadcast %cst_194 : f32 to vector<8x128xf32>
    %483 = arith.addf %481, %482 : vector<8x128xf32>
    %484 = arith.mulf %473, %412 : vector<8x128xf32>
    %485 = arith.mulf %465, %475 : vector<8x128xf32>
    %486 = arith.addf %484, %485 : vector<8x128xf32>
    %487 = math.tanh %486 : vector<8x128xf32>
    %488 = arith.mulf %483, %487 : vector<8x128xf32>
    %c0_195 = arith.constant 0 : index
    %c0_196 = arith.constant 0 : index
    %489 = vector.load %arg4[%c0_195, %c0_196] : memref<128x512xf32, #tpu.memory_space<vmem>>, vector<128x512xf32>
    %cst_197 = arith.constant dense<0.000000e+00> : vector<8x512xf32>
    %490 = tpu.matmul %488, %489, %cst_197 {dimension_numbers = #tpu.dot_dimension_numbers<[1], [0], [0], [1], [0, 0, 1, 1], [], []>} : vector<8x128xf32>, vector<128x512xf32>, vector<8x512xf32> -> vector<8x512xf32>
    %c0_198 = arith.constant 0 : index
    %c0_199 = arith.constant 0 : index
    %491 = vector.load %arg5[%c0_198, %c0_199] : memref<128x512xf32, #tpu.memory_space<vmem>>, vector<128x512xf32>
    %cst_200 = arith.constant dense<0.000000e+00> : vector<8x512xf32>
    %492 = tpu.matmul %453, %491, %cst_200 {dimension_numbers = #tpu.dot_dimension_numbers<[1], [0], [0], [1], [0, 0, 1, 1], [], []>} : vector<8x128xf32>, vector<128x512xf32>, vector<8x512xf32> -> vector<8x512xf32>
    %493 = arith.addf %490, %492 : vector<8x512xf32>
    %c0_201 = arith.constant 0 : index
    %c0_202 = arith.constant 0 : index
    %494 = vector.load %arg6[%c0_201, %c0_202] : memref<1x512xf32, #tpu.memory_space<vmem>>, vector<1x512xf32>
    %495 = vector.broadcast %494 : vector<1x512xf32> to vector<8x512xf32>
    %496 = arith.addf %493, %495 : vector<8x512xf32>
    %497 = vector.extract_strided_slice %496 {offsets = [0, 0], sizes = [8, 128], strides = [1, 1]} : vector<8x512xf32> to vector<8x128xf32>
    %cst_203 = arith.constant 5.000000e-01 : f32
    %498 = vector.broadcast %cst_203 : f32 to vector<8x128xf32>
    %499 = arith.mulf %498, %497 : vector<8x128xf32>
    %500 = math.tanh %499 : vector<8x128xf32>
    %cst_204 = arith.constant 5.000000e-01 : f32
    %501 = vector.broadcast %cst_204 : f32 to vector<8x128xf32>
    %502 = arith.mulf %501, %500 : vector<8x128xf32>
    %cst_205 = arith.constant 5.000000e-01 : f32
    %503 = vector.broadcast %cst_205 : f32 to vector<8x128xf32>
    %504 = arith.addf %502, %503 : vector<8x128xf32>
    %505 = vector.extract_strided_slice %496 {offsets = [0, 128], sizes = [8, 128], strides = [1, 1]} : vector<8x512xf32> to vector<8x128xf32>
    %cst_206 = arith.constant 5.000000e-01 : f32
    %506 = vector.broadcast %cst_206 : f32 to vector<8x128xf32>
    %507 = arith.mulf %506, %505 : vector<8x128xf32>
    %508 = math.tanh %507 : vector<8x128xf32>
    %cst_207 = arith.constant 5.000000e-01 : f32
    %509 = vector.broadcast %cst_207 : f32 to vector<8x128xf32>
    %510 = arith.mulf %509, %508 : vector<8x128xf32>
    %cst_208 = arith.constant 5.000000e-01 : f32
    %511 = vector.broadcast %cst_208 : f32 to vector<8x128xf32>
    %512 = arith.addf %510, %511 : vector<8x128xf32>
    %513 = vector.extract_strided_slice %496 {offsets = [0, 256], sizes = [8, 128], strides = [1, 1]} : vector<8x512xf32> to vector<8x128xf32>
    %514 = math.tanh %513 : vector<8x128xf32>
    %515 = vector.extract_strided_slice %496 {offsets = [0, 384], sizes = [8, 128], strides = [1, 1]} : vector<8x512xf32> to vector<8x128xf32>
    %cst_209 = arith.constant 5.000000e-01 : f32
    %516 = vector.broadcast %cst_209 : f32 to vector<8x128xf32>
    %517 = arith.mulf %516, %515 : vector<8x128xf32>
    %518 = math.tanh %517 : vector<8x128xf32>
    %cst_210 = arith.constant 5.000000e-01 : f32
    %519 = vector.broadcast %cst_210 : f32 to vector<8x128xf32>
    %520 = arith.mulf %519, %518 : vector<8x128xf32>
    %cst_211 = arith.constant 5.000000e-01 : f32
    %521 = vector.broadcast %cst_211 : f32 to vector<8x128xf32>
    %522 = arith.addf %520, %521 : vector<8x128xf32>
    %523 = arith.mulf %512, %451 : vector<8x128xf32>
    %524 = arith.mulf %504, %514 : vector<8x128xf32>
    %525 = arith.addf %523, %524 : vector<8x128xf32>
    %526 = math.tanh %525 : vector<8x128xf32>
    %527 = arith.mulf %522, %526 : vector<8x128xf32>
    %528 = vector.extract_strided_slice %5 {offsets = [56, 0], sizes = [8, 512], strides = [1, 1]} : vector<64x512xf32> to vector<8x512xf32>
    %c0_212 = arith.constant 0 : index
    %c0_213 = arith.constant 0 : index
    %529 = vector.load %arg3[%c0_212, %c0_213] : memref<128x512xf32, #tpu.memory_space<vmem>>, vector<128x512xf32>
    %cst_214 = arith.constant dense<0.000000e+00> : vector<8x512xf32>
    %530 = tpu.matmul %488, %529, %cst_214 {dimension_numbers = #tpu.dot_dimension_numbers<[1], [0], [0], [1], [0, 0, 1, 1], [], []>} : vector<8x128xf32>, vector<128x512xf32>, vector<8x512xf32> -> vector<8x512xf32>
    %531 = arith.addf %528, %530 : vector<8x512xf32>
    %532 = vector.extract_strided_slice %531 {offsets = [0, 0], sizes = [8, 128], strides = [1, 1]} : vector<8x512xf32> to vector<8x128xf32>
    %cst_215 = arith.constant 5.000000e-01 : f32
    %533 = vector.broadcast %cst_215 : f32 to vector<8x128xf32>
    %534 = arith.mulf %533, %532 : vector<8x128xf32>
    %535 = math.tanh %534 : vector<8x128xf32>
    %cst_216 = arith.constant 5.000000e-01 : f32
    %536 = vector.broadcast %cst_216 : f32 to vector<8x128xf32>
    %537 = arith.mulf %536, %535 : vector<8x128xf32>
    %cst_217 = arith.constant 5.000000e-01 : f32
    %538 = vector.broadcast %cst_217 : f32 to vector<8x128xf32>
    %539 = arith.addf %537, %538 : vector<8x128xf32>
    %540 = vector.extract_strided_slice %531 {offsets = [0, 128], sizes = [8, 128], strides = [1, 1]} : vector<8x512xf32> to vector<8x128xf32>
    %cst_218 = arith.constant 5.000000e-01 : f32
    %541 = vector.broadcast %cst_218 : f32 to vector<8x128xf32>
    %542 = arith.mulf %541, %540 : vector<8x128xf32>
    %543 = math.tanh %542 : vector<8x128xf32>
    %cst_219 = arith.constant 5.000000e-01 : f32
    %544 = vector.broadcast %cst_219 : f32 to vector<8x128xf32>
    %545 = arith.mulf %544, %543 : vector<8x128xf32>
    %cst_220 = arith.constant 5.000000e-01 : f32
    %546 = vector.broadcast %cst_220 : f32 to vector<8x128xf32>
    %547 = arith.addf %545, %546 : vector<8x128xf32>
    %548 = vector.extract_strided_slice %531 {offsets = [0, 256], sizes = [8, 128], strides = [1, 1]} : vector<8x512xf32> to vector<8x128xf32>
    %549 = math.tanh %548 : vector<8x128xf32>
    %550 = vector.extract_strided_slice %531 {offsets = [0, 384], sizes = [8, 128], strides = [1, 1]} : vector<8x512xf32> to vector<8x128xf32>
    %cst_221 = arith.constant 5.000000e-01 : f32
    %551 = vector.broadcast %cst_221 : f32 to vector<8x128xf32>
    %552 = arith.mulf %551, %550 : vector<8x128xf32>
    %553 = math.tanh %552 : vector<8x128xf32>
    %cst_222 = arith.constant 5.000000e-01 : f32
    %554 = vector.broadcast %cst_222 : f32 to vector<8x128xf32>
    %555 = arith.mulf %554, %553 : vector<8x128xf32>
    %cst_223 = arith.constant 5.000000e-01 : f32
    %556 = vector.broadcast %cst_223 : f32 to vector<8x128xf32>
    %557 = arith.addf %555, %556 : vector<8x128xf32>
    %558 = arith.mulf %547, %486 : vector<8x128xf32>
    %559 = arith.mulf %539, %549 : vector<8x128xf32>
    %560 = arith.addf %558, %559 : vector<8x128xf32>
    %561 = math.tanh %560 : vector<8x128xf32>
    %562 = arith.mulf %557, %561 : vector<8x128xf32>
    %c0_224 = arith.constant 0 : index
    %c0_225 = arith.constant 0 : index
    %563 = vector.load %arg4[%c0_224, %c0_225] : memref<128x512xf32, #tpu.memory_space<vmem>>, vector<128x512xf32>
    %cst_226 = arith.constant dense<0.000000e+00> : vector<8x512xf32>
    %564 = tpu.matmul %562, %563, %cst_226 {dimension_numbers = #tpu.dot_dimension_numbers<[1], [0], [0], [1], [0, 0, 1, 1], [], []>} : vector<8x128xf32>, vector<128x512xf32>, vector<8x512xf32> -> vector<8x512xf32>
    %c0_227 = arith.constant 0 : index
    %c0_228 = arith.constant 0 : index
    %565 = vector.load %arg5[%c0_227, %c0_228] : memref<128x512xf32, #tpu.memory_space<vmem>>, vector<128x512xf32>
    %cst_229 = arith.constant dense<0.000000e+00> : vector<8x512xf32>
    %566 = tpu.matmul %527, %565, %cst_229 {dimension_numbers = #tpu.dot_dimension_numbers<[1], [0], [0], [1], [0, 0, 1, 1], [], []>} : vector<8x128xf32>, vector<128x512xf32>, vector<8x512xf32> -> vector<8x512xf32>
    %567 = arith.addf %564, %566 : vector<8x512xf32>
    %c0_230 = arith.constant 0 : index
    %c0_231 = arith.constant 0 : index
    %568 = vector.load %arg6[%c0_230, %c0_231] : memref<1x512xf32, #tpu.memory_space<vmem>>, vector<1x512xf32>
    %569 = vector.broadcast %568 : vector<1x512xf32> to vector<8x512xf32>
    %570 = arith.addf %567, %569 : vector<8x512xf32>
    %571 = vector.extract_strided_slice %570 {offsets = [0, 0], sizes = [8, 128], strides = [1, 1]} : vector<8x512xf32> to vector<8x128xf32>
    %cst_232 = arith.constant 5.000000e-01 : f32
    %572 = vector.broadcast %cst_232 : f32 to vector<8x128xf32>
    %573 = arith.mulf %572, %571 : vector<8x128xf32>
    %574 = math.tanh %573 : vector<8x128xf32>
    %cst_233 = arith.constant 5.000000e-01 : f32
    %575 = vector.broadcast %cst_233 : f32 to vector<8x128xf32>
    %576 = arith.mulf %575, %574 : vector<8x128xf32>
    %cst_234 = arith.constant 5.000000e-01 : f32
    %577 = vector.broadcast %cst_234 : f32 to vector<8x128xf32>
    %578 = arith.addf %576, %577 : vector<8x128xf32>
    %579 = vector.extract_strided_slice %570 {offsets = [0, 128], sizes = [8, 128], strides = [1, 1]} : vector<8x512xf32> to vector<8x128xf32>
    %cst_235 = arith.constant 5.000000e-01 : f32
    %580 = vector.broadcast %cst_235 : f32 to vector<8x128xf32>
    %581 = arith.mulf %580, %579 : vector<8x128xf32>
    %582 = math.tanh %581 : vector<8x128xf32>
    %cst_236 = arith.constant 5.000000e-01 : f32
    %583 = vector.broadcast %cst_236 : f32 to vector<8x128xf32>
    %584 = arith.mulf %583, %582 : vector<8x128xf32>
    %cst_237 = arith.constant 5.000000e-01 : f32
    %585 = vector.broadcast %cst_237 : f32 to vector<8x128xf32>
    %586 = arith.addf %584, %585 : vector<8x128xf32>
    %587 = vector.extract_strided_slice %570 {offsets = [0, 256], sizes = [8, 128], strides = [1, 1]} : vector<8x512xf32> to vector<8x128xf32>
    %588 = math.tanh %587 : vector<8x128xf32>
    %589 = vector.extract_strided_slice %570 {offsets = [0, 384], sizes = [8, 128], strides = [1, 1]} : vector<8x512xf32> to vector<8x128xf32>
    %cst_238 = arith.constant 5.000000e-01 : f32
    %590 = vector.broadcast %cst_238 : f32 to vector<8x128xf32>
    %591 = arith.mulf %590, %589 : vector<8x128xf32>
    %592 = math.tanh %591 : vector<8x128xf32>
    %cst_239 = arith.constant 5.000000e-01 : f32
    %593 = vector.broadcast %cst_239 : f32 to vector<8x128xf32>
    %594 = arith.mulf %593, %592 : vector<8x128xf32>
    %cst_240 = arith.constant 5.000000e-01 : f32
    %595 = vector.broadcast %cst_240 : f32 to vector<8x128xf32>
    %596 = arith.addf %594, %595 : vector<8x128xf32>
    %597 = arith.mulf %586, %525 : vector<8x128xf32>
    %598 = arith.mulf %578, %588 : vector<8x128xf32>
    %599 = arith.addf %597, %598 : vector<8x128xf32>
    %600 = math.tanh %599 : vector<8x128xf32>
    %601 = arith.mulf %596, %600 : vector<8x128xf32>
    %c0_241 = arith.constant 0 : index
    %c0_242 = arith.constant 0 : index
    %602 = vector.load %arg7[%c0_241, %c0_242] : memref<128x128xf32, #tpu.memory_space<vmem>>, vector<128x128xf32>
    %cst_243 = arith.constant dense<0.000000e+00> : vector<8x128xf32>
    %603 = tpu.matmul %601, %602, %cst_243 {dimension_numbers = #tpu.dot_dimension_numbers<[1], [0], [0], [1], [0, 0, 1, 1], [], []>} : vector<8x128xf32>, vector<128x128xf32>, vector<8x128xf32> -> vector<8x128xf32>
    %c0_244 = arith.constant 0 : index
    %c0_245 = arith.constant 0 : index
    %604 = vector.load %arg8[%c0_244, %c0_245] : memref<1x128xf32, #tpu.memory_space<vmem>>, vector<1x128xf32>
    %605 = vector.broadcast %604 : vector<1x128xf32> to vector<8x128xf32>
    %606 = arith.addf %603, %605 : vector<8x128xf32>
    %c0_246 = arith.constant 0 : index
    %c0_247 = arith.constant 0 : index
    %607 = vector.load %arg9[%c0_246, %c0_247] : memref<8x128xf32, #tpu.memory_space<vmem>>, vector<8x128xf32>
    tpu.vector_store %arg9[%c0_246, %c0_247], %606 {strides = array<i32>} : memref<8x128xf32, #tpu.memory_space<vmem>>, vector<8x128xf32>,
    return
  }
}

</mosaic_0001>

<llo_original>
// kernel: deeplog_forward.1
$region0: #{deeplog_forward.1}
  #allocation0 [shape = 'u32[]', space=smem, size = 0x4, offset = 0x4, fixed_abs, tag = 'smem constant byte address 0x4 - core index']
  #allocation1 [shape = 'u32[144,128]{1,0:T(1,128)}', space=vmem, size = 0x12000, scoped, tag = 'internal scratch']
  %s0 = inlined_call_operand.vmem [shape: f32[64,8], index: 0, kind: input, shape index: {}]
  %s1 = inlined_call_operand.vmem [shape: f32[8,512], index: 1, kind: input, shape index: {}]
  %s2 = inlined_call_operand.vmem [shape: f32[1,512], index: 2, kind: input, shape index: {}]
  %s3 = inlined_call_operand.hbm [shape: f32[128,512], index: 3, kind: input, shape index: {}]
  %s4 = inlined_call_operand.hbm [shape: f32[128,512], index: 4, kind: input, shape index: {}]
  %s5 = inlined_call_operand.hbm [shape: f32[128,512], index: 5, kind: input, shape index: {}]
  %s6 = inlined_call_operand.vmem [shape: f32[1,512], index: 6, kind: input, shape index: {}]
  %s7 = inlined_call_operand.vmem [shape: f32[128,128], index: 7, kind: input, shape index: {}]
  %s8 = inlined_call_operand.vmem [shape: f32[1,128], index: 8, kind: input, shape index: {}]
  %s9 = inlined_call_operand.vmem [shape: f32[8,128], index: 9, kind: output, shape index: {}]
  %s10 = sld [smem:[#allocation0]]
  $region58: #{deeplog_forward.1} parent=0
    _
  %s12 = ssub.s32 1, %s10
  %s13 = scalar_select 0, %s12, %s10
  $region1: #{deeplog_forward.1} parent=0
    #allocation2 [shape = 'u8[262144]{0}', space=vmem, size = 0x40000, scoped, tag = 'input window, operand 3, single buffered']
    #allocation3 [shape = 's32[1]{0}', space=sflag, size = 0x4, scoped, tag = 'scoped memory for deeplog_forward.1']
    #allocation4 [shape = 'u8[262144]{0}', space=vmem, size = 0x40000, scoped, tag = 'input window, operand 4, single buffered']
    #allocation5 [shape = 's32[1]{0}', space=sflag, size = 0x4, scoped, tag = 'scoped memory for deeplog_forward.1']
    #allocation6 [shape = 'u8[262144]{0}', space=vmem, size = 0x40000, scoped, tag = 'input window, operand 5, single buffered']
    %14 = vsyncpa [#allocation3], 0
    %15 = vsyncpa [#allocation5], 0
    // Predicated region
    $region2: #{deeplog_forward.1} parent=1 // pred_check
      _
    $region3: #{deeplog_forward.1} parent=1 // pred_check_branch
      %17 = sbr.rel (0) target = $region5
    $region4: #{deeplog_forward.1} parent=1 // pred_region
      _
    $region5: #{deeplog_forward.1} parent=1 // pred_fallthru
      _
    // Predicated region
    $region6: #{deeplog_forward.1} parent=1 // pred_check
      _
    $region7: #{deeplog_forward.1} parent=1 // pred_check_branch
      %19 = sbr.rel (0) target = $region9
    $region8: #{deeplog_forward.1} parent=1 // pred_region
      _
    $region9: #{deeplog_forward.1} parent=1 // pred_fallthru
      _
    // Predicated region
    $region10: #{deeplog_forward.1} parent=1 // pred_check
      _
    $region11: #{deeplog_forward.1} parent=1 // pred_check_branch
      %21 = sbr.rel (0) target = $region13
    $region12: #{deeplog_forward.1} parent=1 // pred_region
      _
    $region13: #{deeplog_forward.1} parent=1 // pred_fallthru
      _
    // Predicated region
    $region14: #{deeplog_forward.1} parent=1 // pred_check
      _
    $region15: #{deeplog_forward.1} parent=1 // pred_check_branch
      %23 = sbr.rel (0) target = $region17
    $region16: #{deeplog_forward.1} parent=1 // pred_region
      %s25 = ssub.s32 8192, 8192
      %26 = vsyncadd [#allocation3], %s25
      %s27 = sshll.u32 [#allocation2], 4
      %s28 = int_to_ptr.vmem [resolvable:$true] %s27
      %33 = dma.hbm_to_vmem [thread:$0]  %s3, 8192, %s28, [#allocation3], 512, 512, 32
    $region17: #{deeplog_forward.1} parent=1 // pred_fallthru
      _
    // Predicated region
    $region18: #{deeplog_forward.1} parent=1 // pred_check
      _
    $region19: #{deeplog_forward.1} parent=1 // pred_check_branch
      %35 = sbr.rel (0) target = $region21
    $region20: #{deeplog_forward.1} parent=1 // pred_region
      %s37 = ssub.s32 8192, 8192
      %38 = vsyncadd [#allocation5], %s37
      %s39 = sshll.u32 [#allocation4], 4
      %s40 = int_to_ptr.vmem [resolvable:$true] %s39
      %45 = dma.hbm_to_vmem [thread:$0]  %s4, 8192, %s40, [#allocation5], 512, 512, 32
    $region21: #{deeplog_forward.1} parent=1 // pred_fallthru
      _
    // Predicated region
    $region22: #{deeplog_forward.1} parent=1 // pred_check
      _
    $region23: #{deeplog_forward.1} parent=1 // pred_check_branch
      %47 = sbr.rel (0) target = $region25
    $region24: #{deeplog_forward.1} parent=1 // pred_region
      %s49 = ssub.s32 8192, 8192
      %50 = vsyncadd [#allocation5], %s49
      %s51 = sshll.u32 [#allocation6], 4
      %s52 = int_to_ptr.vmem [resolvable:$true] %s51
      %57 = dma.hbm_to_vmem [thread:$0]  %s5, 8192, %s52, [#allocation5], 512, 512, 32
    $region25: #{deeplog_forward.1} parent=1 // pred_fallthru
      _
    // Predicated region
    $region26: #{deeplog_forward.1} parent=1 // pred_check
      _
    $region27: #{deeplog_forward.1} parent=1 // pred_check_branch
      %59 = sbr.rel (0) target = $region29
    $region28: #{deeplog_forward.1} parent=1 // pred_region
      _
    $region29: #{deeplog_forward.1} parent=1 // pred_fallthru
      _
    // Predicated region
    $region30: #{deeplog_forward.1} parent=1 // pred_check
      _
    $region31: #{deeplog_forward.1} parent=1 // pred_check_branch
      %61 = sbr.rel (0) target = $region33
    $region32: #{deeplog_forward.1} parent=1 // pred_region
      _
    $region33: #{deeplog_forward.1} parent=1 // pred_fallthru
      _
    // Predicated region
    $region34: #{deeplog_forward.1} parent=1 // pred_check
      _
    $region35: #{deeplog_forward.1} parent=1 // pred_check_branch
      %63 = sbr.rel (0) target = $region37
    $region36: #{deeplog_forward.1} parent=1 // pred_region
      _
    $region37: #{deeplog_forward.1} parent=1 // pred_fallthru
      _
    // Predicated region
    $region38: #{deeplog_forward.1} parent=1 // pred_check
      _
    $region39: #{deeplog_forward.1} parent=1 // pred_check_branch
      %65 = sbr.rel (0) target = $region41
    $region40: #{deeplog_forward.1} parent=1 // pred_region
      %66 = dma.done [#allocation3], 8192
    $region41: #{deeplog_forward.1} parent=1 // pred_fallthru
      _
    // Predicated region
    $region42: #{deeplog_forward.1} parent=1 // pred_check
      _
    $region43: #{deeplog_forward.1} parent=1 // pred_check_branch
      %68 = sbr.rel (0) target = $region45
    $region44: #{deeplog_forward.1} parent=1 // pred_region
      %69 = dma.done [#allocation5], 8192
    $region45: #{deeplog_forward.1} parent=1 // pred_fallthru
      _
    // Predicated region
    $region46: #{deeplog_forward.1} parent=1 // pred_check
      _
    $region47: #{deeplog_forward.1} parent=1 // pred_check_branch
      %71 = sbr.rel (0) target = $region49
    $region48: #{deeplog_forward.1} parent=1 // pred_region
      %72 = dma.done [#allocation5], 8192
    $region49: #{deeplog_forward.1} parent=1 // pred_fallthru
      _
    %v73 = vld [vmem:[%s0] sm:$0xff]
    %v74 = vld [vmem:[%s0 + $0x8] sm:$0xff]
    %v75 = vld [vmem:[%s0 + $0x10] sm:$0xff]
    %v76 = vld [vmem:[%s0 + $0x18] sm:$0xff]
    %v77 = vld [vmem:[%s0 + $0x20] sm:$0xff]
    %v78 = vld [vmem:[%s0 + $0x28] sm:$0xff]
    %v79 = vld [vmem:[%s0 + $0x30] sm:$0xff]
    %v80 = vld [vmem:[%s0 + $0x38] sm:$0xff]
    %v81 = vld [vmem:[%s1] sm:$0xff]
    %v82 = vld [vmem:[%s1 + $0x8] sm:$0xff]
    %v83 = vld [vmem:[%s1 + $0x10] sm:$0xff]
    %v84 = vld [vmem:[%s1 + $0x18] sm:$0xff]
    %v85 = vld [vmem:[%s2] sm:$0xf]
    %v87 = vlaneseq
    %v88 = vshrl.u32 %v87, 7
    %v89 = vsub.s32 0, %v88
    %v90 = vrot.slane %v85, %v89
    %v91 = vlaneseq
    %v92 = vshrl.u32 %v91, 7
    %v93 = vsub.s32 1, %v92
    %v94 = vrot.slane %v85, %v93
    %v95 = vlaneseq
    %v96 = vshrl.u32 %v95, 7
    %v97 = vsub.s32 2, %v96
    %v98 = vrot.slane %v85, %v97
    %v99 = vlaneseq
    %v100 = vshrl.u32 %v99, 7
    %v101 = vsub.s32 3, %v100
    %v102 = vrot.slane %v85, %v101
    %vm107 = vcmask 64512
    %v109 = vsel %vm107, %v73, 0
    %v112 = vsel %vm107, %v74, 0
    %v115 = vsel %vm107, %v75, 0
    %v118 = vsel %vm107, %v76, 0
    %v121 = vsel %vm107, %v77, 0
    %v124 = vsel %vm107, %v78, 0
    %v127 = vsel %vm107, %v79, 0
    %v130 = vsel %vm107, %v80, 0
    %132 = vmatprep.subr.mxu0 0.0
    %133 = vmatpush1.msra.mxu0 0.0
    %134 = vmatprep.subr.mxu0 0.0
    %135 = vmatpush1.msra.mxu0 0.0
    %136 = vmatprep.subr.mxu0 0.0
    %137 = vmatpush1.msra.mxu0 0.0
    %138 = vmatprep.subr.mxu0 0.0
    %139 = vmatpush1.msra.mxu0 0.0
    %140 = vmatprep.subr.mxu0 0.0
    %141 = vmatpush1.msra.mxu0 0.0
    %142 = vmatprep.subr.mxu0 0.0
    %143 = vmatpush1.msra.mxu0 0.0
    %144 = vmatprep.subr.mxu0 0.0
    %145 = vmatpush1.msra.mxu0 0.0
    %146 = vmatprep.subr.mxu0 0.0
    %147 = vmatpush1.msra.mxu0 0.0
    %148 = vmatprep.subr.mxu0 0.0
    %149 = vmatpush1.msra.mxu0 0.0
    %150 = vmatprep.subr.mxu0 0.0
    %151 = vmatpush1.msra.mxu0 0.0
    %152 = vmatprep.subr.mxu0 0.0
    %153 = vmatpush1.msra.mxu0 0.0
    %154 = vmatprep.subr.mxu0 0.0
    %155 = vmatpush1.msra.mxu0 0.0
    %156 = vmatprep.subr.mxu0 0.0
    %157 = vmatpush1.msra.mxu0 0.0
    %158 = vmatprep.subr.mxu0 0.0
    %159 = vmatpush1.msra.mxu0 0.0
    %160 = vmatprep.subr.mxu0 0.0
    %161 = vmatpush1.msra.mxu0 0.0
    %162 = vmatprep.subr.mxu0 %v82
    %163 = vmatpush1.msra.mxu0 %v81
    %164 = vmatprep.subr.mxu0 0.0
    %165 = vmatpush2.msra.mxu0 0.0
    %166 = vmatprep.subr.mxu0 0.0
    %167 = vmatpush2.msra.mxu0 0.0
    %168 = vmatprep.subr.mxu0 0.0
    %169 = vmatpush2.msra.mxu0 0.0
    %170 = vmatprep.subr.mxu0 0.0
    %171 = vmatpush2.msra.mxu0 0.0
    %172 = vmatprep.subr.mxu0 0.0
    %173 = vmatpush2.msra.mxu0 0.0
    %174 = vmatprep.subr.mxu0 0.0
    %175 = vmatpush2.msra.mxu0 0.0
    %176 = vmatprep.subr.mxu0 0.0
    %177 = vmatpush2.msra.mxu0 0.0
    %178 = vmatprep.subr.mxu0 0.0
    %179 = vmatpush2.msra.mxu0 0.0
    %180 = vmatprep.subr.mxu0 0.0
    %181 = vmatpush2.msra.mxu0 0.0
    %182 = vmatprep.subr.mxu0 0.0
    %183 = vmatpush2.msra.mxu0 0.0
    %184 = vmatprep.subr.mxu0 0.0
    %185 = vmatpush2.msra.mxu0 0.0
    %186 = vmatprep.subr.mxu0 0.0
    %187 = vmatpush2.msra.mxu0 0.0
    %188 = vmatprep.subr.mxu0 0.0
    %189 = vmatpush2.msra.mxu0 0.0
    %190 = vmatprep.subr.mxu0 0.0
    %191 = vmatpush2.msra.mxu0 0.0
    %192 = vmatprep.subr.mxu0 0.0
    %193 = vmatpush2.msra.mxu0 0.0
    %194 = vmatprep.subr.mxu0 0.0
    %195 = vmatpush2.msra.mxu0 0.0
    %196 = vmatprep.mubr.f32.mxu0 0.0
    %197 = vmatmul.mubr.f32.gmra.mxu0 %v109
    %v198 = vpop.f32.mrf.mxu0
    %v199 = vadd.f32 %v90, %v198
    %v200 = vpop.f32.mrf.mxu0
    %v201 = vadd.f32 %v94, %v200
    %202 = vmatprep.mubr.f32.mxu0 0.0
    %203 = vmatmul.mubr.f32.gmra.mxu0 %v112
    %v204 = vpop.f32.mrf.mxu0
    %v205 = vadd.f32 %v90, %v204
    %v206 = vpop.f32.mrf.mxu0
    %v207 = vadd.f32 %v94, %v206
    %208 = vmatprep.mubr.f32.mxu0 0.0
    %209 = vmatmul.mubr.f32.gmra.mxu0 %v115
    %v210 = vpop.f32.mrf.mxu0
    %v211 = vadd.f32 %v90, %v210
    %v212 = vpop.f32.mrf.mxu0
    %v213 = vadd.f32 %v94, %v212
    %214 = vmatprep.mubr.f32.mxu0 0.0
    %215 = vmatmul.mubr.f32.gmra.mxu0 %v118
    %v216 = vpop.f32.mrf.mxu0
    %v217 = vadd.f32 %v90, %v216
    %v218 = vpop.f32.mrf.mxu0
    %v219 = vadd.f32 %v94, %v218
    %220 = vmatprep.mubr.f32.mxu0 0.0
    %221 = vmatmul.mubr.f32.gmra.mxu0 %v121
    %v222 = vpop.f32.mrf.mxu0
    %v223 = vadd.f32 %v90, %v222
    %v224 = vpop.f32.mrf.mxu0
    %v225 = vadd.f32 %v94, %v224
    %226 = vmatprep.mubr.f32.mxu0 0.0
    %227 = vmatmul.mubr.f32.gmra.mxu0 %v124
    %v228 = vpop.f32.mrf.mxu0
    %v229 = vadd.f32 %v90, %v228
    %v230 = vpop.f32.mrf.mxu0
    %v231 = vadd.f32 %v94, %v230
    %232 = vmatprep.mubr.f32.mxu0 0.0
    %233 = vmatmul.mubr.f32.gmra.mxu0 %v127
    %v234 = vpop.f32.mrf.mxu0
    %v235 = vadd.f32 %v90, %v234
    %v236 = vpop.f32.mrf.mxu0
    %v237 = vadd.f32 %v94, %v236
    %238 = vmatprep.mubr.f32.mxu0 0.0
    %239 = vmatmul.mubr.f32.gmra.mxu0 %v130
    %v240 = vpop.f32.mrf.mxu0
    %v241 = vadd.f32 %v90, %v240
    %v242 = vpop.f32.mrf.mxu0
    %v243 = vadd.f32 %v94, %v242
    %244 = vdwg.mxu0
    %245 = vmatprep.subr.mxu0 0.0
    %246 = vmatpush1.msra.mxu0 0.0
    %247 = vmatprep.subr.mxu0 0.0
    %248 = vmatpush1.msra.mxu0 0.0
    %249 = vmatprep.subr.mxu0 0.0
    %250 = vmatpush1.msra.mxu0 0.0
    %251 = vmatprep.subr.mxu0 0.0
    %252 = vmatpush1.msra.mxu0 0.0
    %253 = vmatprep.subr.mxu0 0.0
    %254 = vmatpush1.msra.mxu0 0.0
    %255 = vmatprep.subr.mxu0 0.0
    %256 = vmatpush1.msra.mxu0 0.0
    %257 = vmatprep.subr.mxu0 0.0
    %258 = vmatpush1.msra.mxu0 0.0
    %259 = vmatprep.subr.mxu0 0.0
    %260 = vmatpush1.msra.mxu0 0.0
    %261 = vmatprep.subr.mxu0 0.0
    %262 = vmatpush1.msra.mxu0 0.0
    %263 = vmatprep.subr.mxu0 0.0
    %264 = vmatpush1.msra.mxu0 0.0
    %265 = vmatprep.subr.mxu0 0.0
    %266 = vmatpush1.msra.mxu0 0.0
    %267 = vmatprep.subr.mxu0 0.0
    %268 = vmatpush1.msra.mxu0 0.0
    %269 = vmatprep.subr.mxu0 0.0
    %270 = vmatpush1.msra.mxu0 0.0
    %271 = vmatprep.subr.mxu0 0.0
    %272 = vmatpush1.msra.mxu0 0.0
    %273 = vmatprep.subr.mxu0 0.0
    %274 = vmatpush1.msra.mxu0 0.0
    %275 = vmatprep.subr.mxu0 %v84
    %276 = vmatpush1.msra.mxu0 %v83
    %277 = vmatprep.subr.mxu0 0.0
    %278 = vmatpush2.msra.mxu0 0.0
    %279 = vmatprep.subr.mxu0 0.0
    %280 = vmatpush2.msra.mxu0 0.0
    %281 = vmatprep.subr.mxu0 0.0
    %282 = vmatpush2.msra.mxu0 0.0
    %283 = vmatprep.subr.mxu0 0.0
    %284 = vmatpush2.msra.mxu0 0.0
    %285 = vmatprep.subr.mxu0 0.0
    %286 = vmatpush2.msra.mxu0 0.0
    %287 = vmatprep.subr.mxu0 0.0
    %288 = vmatpush2.msra.mxu0 0.0
    %289 = vmatprep.subr.mxu0 0.0
    %290 = vmatpush2.msra.mxu0 0.0
    %291 = vmatprep.subr.mxu0 0.0
    %292 = vmatpush2.msra.mxu0 0.0
    %293 = vmatprep.subr.mxu0 0.0
    %294 = vmatpush2.msra.mxu0 0.0
    %295 = vmatprep.subr.mxu0 0.0
    %296 = vmatpush2.msra.mxu0 0.0
    %297 = vmatprep.subr.mxu0 0.0
    %298 = vmatpush2.msra.mxu0 0.0
    %299 = vmatprep.subr.mxu0 0.0
    %300 = vmatpush2.msra.mxu0 0.0
    %301 = vmatprep.subr.mxu0 0.0
    %302 = vmatpush2.msra.mxu0 0.0
    %303 = vmatprep.subr.mxu0 0.0
    %304 = vmatpush2.msra.mxu0 0.0
    %305 = vmatprep.subr.mxu0 0.0
    %306 = vmatpush2.msra.mxu0 0.0
    %307 = vmatprep.subr.mxu0 0.0
    %308 = vmatpush2.msra.mxu0 0.0
    %309 = vmatprep.mubr.f32.mxu0 0.0
    %310 = vmatmul.mubr.f32.gmra.mxu0 %v109
    %v311 = vpop.f32.mrf.mxu0
    %v312 = vadd.f32 %v98, %v311
    %v313 = vpop.f32.mrf.mxu0
    %v314 = vadd.f32 %v102, %v313
    %315 = vmatprep.mubr.f32.mxu0 0.0
    %316 = vmatmul.mubr.f32.gmra.mxu0 %v112
    %v317 = vpop.f32.mrf.mxu0
    %v318 = vadd.f32 %v98, %v317
    %v319 = vpop.f32.mrf.mxu0
    %v320 = vadd.f32 %v102, %v319
    %321 = vmatprep.mubr.f32.mxu0 0.0
    %322 = vmatmul.mubr.f32.gmra.mxu0 %v115
    %v323 = vpop.f32.mrf.mxu0
    %v324 = vadd.f32 %v98, %v323
    %v325 = vpop.f32.mrf.mxu0
    %v326 = vadd.f32 %v102, %v325
    %327 = vmatprep.mubr.f32.mxu0 0.0
    %328 = vmatmul.mubr.f32.gmra.mxu0 %v118
    %v329 = vpop.f32.mrf.mxu0
    %v330 = vadd.f32 %v98, %v329
    %v331 = vpop.f32.mrf.mxu0
    %v332 = vadd.f32 %v102, %v331
    %333 = vmatprep.mubr.f32.mxu0 0.0
    %334 = vmatmul.mubr.f32.gmra.mxu0 %v121
    %v335 = vpop.f32.mrf.mxu0
    %v336 = vadd.f32 %v98, %v335
    %v337 = vpop.f32.mrf.mxu0
    %v338 = vadd.f32 %v102, %v337
    %339 = vmatprep.mubr.f32.mxu0 0.0
    %340 = vmatmul.mubr.f32.gmra.mxu0 %v124
    %v341 = vpop.f32.mrf.mxu0
    %v342 = vadd.f32 %v98, %v341
    %v343 = vpop.f32.mrf.mxu0
    %v344 = vadd.f32 %v102, %v343
    %345 = vmatprep.mubr.f32.mxu0 0.0
    %346 = vmatmul.mubr.f32.gmra.mxu0 %v127
    %v347 = vpop.f32.mrf.mxu0
    %v348 = vadd.f32 %v98, %v347
    %v349 = vpop.f32.mrf.mxu0
    %v350 = vadd.f32 %v102, %v349
    %351 = vmatprep.mubr.f32.mxu0 0.0
    %352 = vmatmul.mubr.f32.gmra.mxu0 %v130
    %v353 = vpop.f32.mrf.mxu0
    %v354 = vadd.f32 %v98, %v353
    %v355 = vpop.f32.mrf.mxu0
    %v356 = vadd.f32 %v102, %v355
    %357 = vdwg.mxu0
    %v358 = vld [vmem:[#allocation2] sm:$0xff]
    %v359 = vld [vmem:[#allocation2 + $0x8] sm:$0xff]
    %v360 = vld [vmem:[#allocation2 + $0x10] sm:$0xff]
    %v361 = vld [vmem:[#allocation2 + $0x18] sm:$0xff]
    %v362 = vld [vmem:[#allocation2 + $0x20] sm:$0xff]
    %v363 = vld [vmem:[#allocation2 + $0x28] sm:$0xff]
    %v364 = vld [vmem:[#allocation2 + $0x30] sm:$0xff]
    %v365 = vld [vmem:[#allocation2 + $0x38] sm:$0xff]
    %v366 = vld [vmem:[#allocation2 + $0x40] sm:$0xff]
    %v367 = vld [vmem:[#allocation2 + $0x48] sm:$0xff]
    %v368 = vld [vmem:[#allocation2 + $0x50] sm:$0xff]
    %v369 = vld [vmem:[#allocation2 + $0x58] sm:$0xff]
    %v370 = vld [vmem:[#allocation2 + $0x60] sm:$0xff]
    %v371 = vld [vmem:[#allocation2 + $0x68] sm:$0xff]
    %v372 = vld [vmem:[#allocation2 + $0x70] sm:$0xff]
    %v373 = vld [vmem:[#allocation2 + $0x78] sm:$0xff]
    %v374 = vld [vmem:[#allocation2 + $0x80] sm:$0xff]
    %v375 = vld [vmem:[#allocation2 + $0x88] sm:$0xff]
    %v376 = vld [vmem:[#allocation2 + $0x90] sm:$0xff]
    %v377 = vld [vmem:[#allocation2 + $0x98] sm:$0xff]
    %v378 = vld [vmem:[#allocation2 + $0xa0] sm:$0xff]
    %v379 = vld [vmem:[#allocation2 + $0xa8] sm:$0xff]
    %v380 = vld [vmem:[#allocation2 + $0xb0] sm:$0xff]
    %v381 = vld [vmem:[#allocation2 + $0xb8] sm:$0xff]
    %v382 = vld [vmem:[#allocation2 + $0xc0] sm:$0xff]
    %v383 = vld [vmem:[#allocation2 + $0xc8] sm:$0xff]
    %v384 = vld [vmem:[#allocation2 + $0xd0] sm:$0xff]
    %v385 = vld [vmem:[#allocation2 + $0xd8] sm:$0xff]
    %v386 = vld [vmem:[#allocation2 + $0xe0] sm:$0xff]
    %v387 = vld [vmem:[#allocation2 + $0xe8] sm:$0xff]
    %v388 = vld [vmem:[#allocation2 + $0xf0] sm:$0xff]
    %v389 = vld [vmem:[#allocation2 + $0xf8] sm:$0xff]
    %v390 = vld [vmem:[#allocation2 + $0x100] sm:$0xff]
    %v391 = vld [vmem:[#allocation2 + $0x108] sm:$0xff]
    %v392 = vld [vmem:[#allocation2 + $0x110] sm:$0xff]
    %v393 = vld [vmem:[#allocation2 + $0x118] sm:$0xff]
    %v394 = vld [vmem:[#allocation2 + $0x120] sm:$0xff]
    %v395 = vld [vmem:[#allocation2 + $0x128] sm:$0xff]
    %v396 = vld [vmem:[#allocation2 + $0x130] sm:$0xff]
    %v397 = vld [vmem:[#allocation2 + $0x138] sm:$0xff]
    %v398 = vld [vmem:[#allocation2 + $0x140] sm:$0xff]
    %v399 = vld [vmem:[#allocation2 + $0x148] sm:$0xff]
    %v400 = vld [vmem:[#allocation2 + $0x150] sm:$0xff]
    %v401 = vld [vmem:[#allocation2 + $0x158] sm:$0xff]
    %v402 = vld [vmem:[#allocation2 + $0x160] sm:$0xff]
    %v403 = vld [vmem:[#allocation2 + $0x168] sm:$0xff]
    %v404 = vld [vmem:[#allocation2 + $0x170] sm:$0xff]
    %v405 = vld [vmem:[#allocation2 + $0x178] sm:$0xff]
    %v406 = vld [vmem:[#allocation2 + $0x180] sm:$0xff]
    %v407 = vld [vmem:[#allocation2 + $0x188] sm:$0xff]
    %v408 = vld [vmem:[#allocation2 + $0x190] sm:$0xff]
    %v409 = vld [vmem:[#allocation2 + $0x198] sm:$0xff]
    %v410 = vld [vmem:[#allocation2 + $0x1a0] sm:$0xff]
    %v411 = vld [vmem:[#allocation2 + $0x1a8] sm:$0xff]
    %v412 = vld [vmem:[#allocation2 + $0x1b0] sm:$0xff]
    %v413 = vld [vmem:[#allocation2 + $0x1b8] sm:$0xff]
    %v414 = vld [vmem:[#allocation2 + $0x1c0] sm:$0xff]
    %v415 = vld [vmem:[#allocation2 + $0x1c8] sm:$0xff]
    %v416 = vld [vmem:[#allocation2 + $0x1d0] sm:$0xff]
    %v417 = vld [vmem:[#allocation2 + $0x1d8] sm:$0xff]
    %v418 = vld [vmem:[#allocation2 + $0x1e0] sm:$0xff]
    %v419 = vld [vmem:[#allocation2 + $0x1e8] sm:$0xff]
    %v420 = vld [vmem:[#allocation2 + $0x1f0] sm:$0xff]
    %v421 = vld [vmem:[#allocation2 + $0x1f8] sm:$0xff]
    %422 = vmatprep.subr.mxu0 %v419
    %423 = vmatpush1.msra.mxu0 %v418
    %424 = vmatprep.subr.mxu0 %v415
    %425 = vmatpush1.msra.mxu0 %v414
    %426 = vmatprep.subr.mxu0 %v411
    %427 = vmatpush1.msra.mxu0 %v410
    %428 = vmatprep.subr.mxu0 %v407
    %429 = vmatpush1.msra.mxu0 %v406
    %430 = vmatprep.subr.mxu0 %v403
    %431 = vmatpush1.msra.mxu0 %v402
    %432 = vmatprep.subr.mxu0 %v399
    %433 = vmatpush1.msra.mxu0 %v398
    %434 = vmatprep.subr.mxu0 %v395
    %435 = vmatpush1.msra.mxu0 %v394
    %436 = vmatprep.subr.mxu0 %v391
    %437 = vmatpush1.msra.mxu0 %v390
    %438 = vmatprep.subr.mxu0 %v387
    %439 = vmatpush1.msra.mxu0 %v386
    %440 = vmatprep.subr.mxu0 %v383
    %441 = vmatpush1.msra.mxu0 %v382
    %442 = vmatprep.subr.mxu0 %v379
    %443 = vmatpush1.msra.mxu0 %v378
    %444 = vmatprep.subr.mxu0 %v375
    %445 = vmatpush1.msra.mxu0 %v374
    %446 = vmatprep.subr.mxu0 %v371
    %447 = vmatpush1.msra.mxu0 %v370
    %448 = vmatprep.subr.mxu0 %v367
    %449 = vmatpush1.msra.mxu0 %v366
    %450 = vmatprep.subr.mxu0 %v363
    %451 = vmatpush1.msra.mxu0 %v362
    %452 = vmatprep.subr.mxu0 %v359
    %453 = vmatpush1.msra.mxu0 %v358
    %454 = vmatprep.subr.mxu0 0.0
    %455 = vmatpush2.msra.mxu0 0.0
    %456 = vmatprep.subr.mxu0 0.0
    %457 = vmatpush2.msra.mxu0 0.0
    %458 = vmatprep.subr.mxu0 0.0
    %459 = vmatpush2.msra.mxu0 0.0
    %460 = vmatprep.subr.mxu0 0.0
    %461 = vmatpush2.msra.mxu0 0.0
    %462 = vmatprep.subr.mxu0 0.0
    %463 = vmatpush2.msra.mxu0 0.0
    %464 = vmatprep.subr.mxu0 0.0
    %465 = vmatpush2.msra.mxu0 0.0
    %466 = vmatprep.subr.mxu0 0.0
    %467 = vmatpush2.msra.mxu0 0.0
    %468 = vmatprep.subr.mxu0 0.0
    %469 = vmatpush2.msra.mxu0 0.0
    %470 = vmatprep.subr.mxu0 0.0
    %471 = vmatpush2.msra.mxu0 0.0
    %472 = vmatprep.subr.mxu0 0.0
    %473 = vmatpush2.msra.mxu0 0.0
    %474 = vmatprep.subr.mxu0 0.0
    %475 = vmatpush2.msra.mxu0 0.0
    %476 = vmatprep.subr.mxu0 0.0
    %477 = vmatpush2.msra.mxu0 0.0
    %478 = vmatprep.subr.mxu0 0.0
    %479 = vmatpush2.msra.mxu0 0.0
    %480 = vmatprep.subr.mxu0 0.0
    %481 = vmatpush2.msra.mxu0 0.0
    %482 = vmatprep.subr.mxu0 0.0
    %483 = vmatpush2.msra.mxu0 0.0
    %484 = vmatprep.subr.mxu0 0.0
    %485 = vmatpush2.msra.mxu0 0.0
    %486 = vmatprep.mubr.f32.mxu0 0.0
    %487 = vmatmul.mubr.f32.gmra.mxu0 0.0
    %v488 = vpop.f32.mrf.mxu0
    %v489 = vadd.f32 0.0, %v488
    %v490 = vpop.f32.mrf.mxu0
    %v491 = vadd.f32 0.0, %v490
    %492 = vdwg.mxu0
    %493 = vmatprep.subr.mxu0 %v421
    %494 = vmatpush1.msra.mxu0 %v420
    %495 = vmatprep.subr.mxu0 %v417
    %496 = vmatpush1.msra.mxu0 %v416
    %497 = vmatprep.subr.mxu0 %v413
    %498 = vmatpush1.msra.mxu0 %v412
    %499 = vmatprep.subr.mxu0 %v409
    %500 = vmatpush1.msra.mxu0 %v408
    %501 = vmatprep.subr.mxu0 %v405
    %502 = vmatpush1.msra.mxu0 %v404
    %503 = vmatprep.subr.mxu0 %v401
    %504 = vmatpush1.msra.mxu0 %v400
    %505 = vmatprep.subr.mxu0 %v397
    %506 = vmatpush1.msra.mxu0 %v396
    %507 = vmatprep.subr.mxu0 %v393
    %508 = vmatpush1.msra.mxu0 %v392
    %509 = vmatprep.subr.mxu0 %v389
    %510 = vmatpush1.msra.mxu0 %v388
    %511 = vmatprep.subr.mxu0 %v385
    %512 = vmatpush1.msra.mxu0 %v384
    %513 = vmatprep.subr.mxu0 %v381
    %514 = vmatpush1.msra.mxu0 %v380
    %515 = vmatprep.subr.mxu0 %v377
    %516 = vmatpush1.msra.mxu0 %v376
    %517 = vmatprep.subr.mxu0 %v373
    %518 = vmatpush1.msra.mxu0 %v372
    %519 = vmatprep.subr.mxu0 %v369
    %520 = vmatpush1.msra.mxu0 %v368
    %521 = vmatprep.subr.mxu0 %v365
    %522 = vmatpush1.msra.mxu0 %v364
    %523 = vmatprep.subr.mxu0 %v361
    %524 = vmatpush1.msra.mxu0 %v360
    %525 = vmatprep.subr.mxu0 0.0
    %526 = vmatpush2.msra.mxu0 0.0
    %527 = vmatprep.subr.mxu0 0.0
    %528 = vmatpush2.msra.mxu0 0.0
    %529 = vmatprep.subr.mxu0 0.0
    %530 = vmatpush2.msra.mxu0 0.0
    %531 = vmatprep.subr.mxu0 0.0
    %532 = vmatpush2.msra.mxu0 0.0
    %533 = vmatprep.subr.mxu0 0.0
    %534 = vmatpush2.msra.mxu0 0.0
    %535 = vmatprep.subr.mxu0 0.0
    %536 = vmatpush2.msra.mxu0 0.0
    %537 = vmatprep.subr.mxu0 0.0
    %538 = vmatpush2.msra.mxu0 0.0
    %539 = vmatprep.subr.mxu0 0.0
    %540 = vmatpush2.msra.mxu0 0.0
    %541 = vmatprep.subr.mxu0 0.0
    %542 = vmatpush2.msra.mxu0 0.0
    %543 = vmatprep.subr.mxu0 0.0
    %544 = vmatpush2.msra.mxu0 0.0
    %545 = vmatprep.subr.mxu0 0.0
    %546 = vmatpush2.msra.mxu0 0.0
    %547 = vmatprep.subr.mxu0 0.0
    %548 = vmatpush2.msra.mxu0 0.0
    %549 = vmatprep.subr.mxu0 0.0
    %550 = vmatpush2.msra.mxu0 0.0
    %551 = vmatprep.subr.mxu0 0.0
    %552 = vmatpush2.msra.mxu0 0.0
    %553 = vmatprep.subr.mxu0 0.0
    %554 = vmatpush2.msra.mxu0 0.0
    %555 = vmatprep.subr.mxu0 0.0
    %556 = vmatpush2.msra.mxu0 0.0
    %557 = vmatprep.mubr.f32.mxu0 0.0
    %558 = vmatmul.mubr.f32.gmra.mxu0 0.0
    %v559 = vpop.f32.mrf.mxu0
    %v560 = vadd.f32 0.0, %v559
    %v561 = vpop.f32.mrf.mxu0
    %v562 = vadd.f32 0.0, %v561
    %563 = vdwg.mxu0
    %v564 = vadd.f32 %v199, %v489
    %v565 = vadd.f32 %v201, %v491
    %v566 = vadd.f32 %v312, %v560
    %v567 = vadd.f32 %v314, %v562
    %v568 = vmul.f32 %v564, 0.5
    %v569 = vtanh.pop %v568
    %v570 = vmul.f32 %v569, 0.5
    %v571 = vadd.f32 %v570, 0.5
    %v572 = vmul.f32 %v565, 0.5
    %v573 = vtanh.pop %v572
    %v574 = vmul.f32 %v573, 0.5
    %v575 = vadd.f32 %v574, 0.5
    %v576 = vtanh.pop %v566
    %v577 = vmul.f32 %v567, 0.5
    %v578 = vtanh.pop %v577
    %v579 = vmul.f32 %v578, 0.5
    %v580 = vadd.f32 %v579, 0.5
    %v581 = vmul.f32 %v575, 0.0
    %v582 = vmul.f32 %v571, %v576
    %v583 = vadd.f32 %v581, %v582
    %v584 = vtanh.pop %v583
    %v585 = vmul.f32 %v580, %v584
    %v586 = vld [vmem:[#allocation4] sm:$0xff]
    %v587 = vld [vmem:[#allocation4 + $0x8] sm:$0xff]
    %v588 = vld [vmem:[#allocation4 + $0x10] sm:$0xff]
    %v589 = vld [vmem:[#allocation4 + $0x18] sm:$0xff]
    %v590 = vld [vmem:[#allocation4 + $0x20] sm:$0xff]
    %v591 = vld [vmem:[#allocation4 + $0x28] sm:$0xff]
    %v592 = vld [vmem:[#allocation4 + $0x30] sm:$0xff]
    %v593 = vld [vmem:[#allocation4 + $0x38] sm:$0xff]
    %v594 = vld [vmem:[#allocation4 + $0x40] sm:$0xff]
    %v595 = vld [vmem:[#allocation4 + $0x48] sm:$0xff]
    %v596 = vld [vmem:[#allocation4 + $0x50] sm:$0xff]
    %v597 = vld [vmem:[#allocation4 + $0x58] sm:$0xff]
    %v598 = vld [vmem:[#allocation4 + $0x60] sm:$0xff]
    %v599 = vld [vmem:[#allocation4 + $0x68] sm:$0xff]
    %v600 = vld [vmem:[#allocation4 + $0x70] sm:$0xff]
    %v601 = vld [vmem:[#allocation4 + $0x78] sm:$0xff]
    %v602 = vld [vmem:[#allocation4 + $0x80] sm:$0xff]
    %v603 = vld [vmem:[#allocation4 + $0x88] sm:$0xff]
    %v604 = vld [vmem:[#allocation4 + $0x90] sm:$0xff]
    %v605 = vld [vmem:[#allocation4 + $0x98] sm:$0xff]
    %v606 = vld [vmem:[#allocation4 + $0xa0] sm:$0xff]
    %v607 = vld [vmem:[#allocation4 + $0xa8] sm:$0xff]
    %v608 = vld [vmem:[#allocation4 + $0xb0] sm:$0xff]
    %v609 = vld [vmem:[#allocation4 + $0xb8] sm:$0xff]
    %v610 = vld [vmem:[#allocation4 + $0xc0] sm:$0xff]
    %v611 = vld [vmem:[#allocation4 + $0xc8] sm:$0xff]
    %v612 = vld [vmem:[#allocation4 + $0xd0] sm:$0xff]
    %v613 = vld [vmem:[#allocation4 + $0xd8] sm:$0xff]
    %v614 = vld [vmem:[#allocation4 + $0xe0] sm:$0xff]
    %v615 = vld [vmem:[#allocation4 + $0xe8] sm:$0xff]
    %v616 = vld [vmem:[#allocation4 + $0xf0] sm:$0xff]
    %v617 = vld [vmem:[#allocation4 + $0xf8] sm:$0xff]
    %v618 = vld [vmem:[#allocation4 + $0x100] sm:$0xff]
    %v619 = vld [vmem:[#allocation4 + $0x108] sm:$0xff]
    %v620 = vld [vmem:[#allocation4 + $0x110] sm:$0xff]
    %v621 = vld [vmem:[#allocation4 + $0x118] sm:$0xff]
    %v622 = vld [vmem:[#allocation4 + $0x120] sm:$0xff]
    %v623 = vld [vmem:[#allocation4 + $0x128] sm:$0xff]
    %v624 = vld [vmem:[#allocation4 + $0x130] sm:$0xff]
    %v625 = vld [vmem:[#allocation4 + $0x138] sm:$0xff]
    %v626 = vld [vmem:[#allocation4 + $0x140] sm:$0xff]
    %v627 = vld [vmem:[#allocation4 + $0x148] sm:$0xff]
    %v628 = vld [vmem:[#allocation4 + $0x150] sm:$0xff]
    %v629 = vld [vmem:[#allocation4 + $0x158] sm:$0xff]
    %v630 = vld [vmem:[#allocation4 + $0x160] sm:$0xff]
    %v631 = vld [vmem:[#allocation4 + $0x168] sm:$0xff]
    %v632 = vld [vmem:[#allocation4 + $0x170] sm:$0xff]
    %v633 = vld [vmem:[#allocation4 + $0x178] sm:$0xff]
    %v634 = vld [vmem:[#allocation4 + $0x180] sm:$0xff]
    %v635 = vld [vmem:[#allocation4 + $0x188] sm:$0xff]
    %v636 = vld [vmem:[#allocation4 + $0x190] sm:$0xff]
    %v637 = vld [vmem:[#allocation4 + $0x198] sm:$0xff]
    %v638 = vld [vmem:[#allocation4 + $0x1a0] sm:$0xff]
    %v639 = vld [vmem:[#allocation4 + $0x1a8] sm:$0xff]
    %v640 = vld [vmem:[#allocation4 + $0x1b0] sm:$0xff]
    %v641 = vld [vmem:[#allocation4 + $0x1b8] sm:$0xff]
    %v642 = vld [vmem:[#allocation4 + $0x1c0] sm:$0xff]
    %v643 = vld [vmem:[#allocation4 + $0x1c8] sm:$0xff]
    %v644 = vld [vmem:[#allocation4 + $0x1d0] sm:$0xff]
    %v645 = vld [vmem:[#allocation4 + $0x1d8] sm:$0xff]
    %v646 = vld [vmem:[#allocation4 + $0x1e0] sm:$0xff]
    %v647 = vld [vmem:[#allocation4 + $0x1e8] sm:$0xff]
    %v648 = vld [vmem:[#allocation4 + $0x1f0] sm:$0xff]
    %v649 = vld [vmem:[#allocation4 + $0x1f8] sm:$0xff]
    %v650 = vld [vmem:[#allocation6] sm:$0xff]
    %v651 = vld [vmem:[#allocation6 + $0x8] sm:$0xff]
    %v652 = vld [vmem:[#allocation6 + $0x10] sm:$0xff]
    %v653 = vld [vmem:[#allocation6 + $0x18] sm:$0xff]
    %v654 = vld [vmem:[#allocation6 + $0x20] sm:$0xff]
    %v655 = vld [vmem:[#allocation6 + $0x28] sm:$0xff]
    %v656 = vld [vmem:[#allocation6 + $0x30] sm:$0xff]
    %v657 = vld [vmem:[#allocation6 + $0x38] sm:$0xff]
    %v658 = vld [vmem:[#allocation6 + $0x40] sm:$0xff]
    %v659 = vld [vmem:[#allocation6 + $0x48] sm:$0xff]
    %v660 = vld [vmem:[#allocation6 + $0x50] sm:$0xff]
    %v661 = vld [vmem:[#allocation6 + $0x58] sm:$0xff]
    %v662 = vld [vmem:[#allocation6 + $0x60] sm:$0xff]
    %v663 = vld [vmem:[#allocation6 + $0x68] sm:$0xff]
    %v664 = vld [vmem:[#allocation6 + $0x70] sm:$0xff]
    %v665 = vld [vmem:[#allocation6 + $0x78] sm:$0xff]
    %v666 = vld [vmem:[#allocation6 + $0x80] sm:$0xff]
    %v667 = vld [vmem:[#allocation6 + $0x88] sm:$0xff]
    %v668 = vld [vmem:[#allocation6 + $0x90] sm:$0xff]
    %v669 = vld [vmem:[#allocation6 + $0x98] sm:$0xff]
    %v670 = vld [vmem:[#allocation6 + $0xa0] sm:$0xff]
    %v671 = vld [vmem:[#allocation6 + $0xa8] sm:$0xff]
    %v672 = vld [vmem:[#allocation6 + $0xb0] sm:$0xff]
    %v673 = vld [vmem:[#allocation6 + $0xb8] sm:$0xff]
    %v674 = vld [vmem:[#allocation6 + $0xc0] sm:$0xff]
    %v675 = vld [vmem:[#allocation6 + $0xc8] sm:$0xff]
    %v676 = vld [vmem:[#allocation6 + $0xd0] sm:$0xff]
    %v677 = vld [vmem:[#allocation6 + $0xd8] sm:$0xff]
    %v678 = vld [vmem:[#allocation6 + $0xe0] sm:$0xff]
    %v679 = vld [vmem:[#allocation6 + $0xe8] sm:$0xff]
    %v680 = vld [vmem:[#allocation6 + $0xf0] sm:$0xff]
    %v681 = vld [vmem:[#allocation6 + $0xf8] sm:$0xff]
    %v682 = vld [vmem:[#allocation6 + $0x100] sm:$0xff]
    %v683 = vld [vmem:[#allocation6 + $0x108] sm:$0xff]
    %v684 = vld [vmem:[#allocation6 + $0x110] sm:$0xff]
    %v685 = vld [vmem:[#allocation6 + $0x118] sm:$0xff]
    %v686 = vld [vmem:[#allocation6 + $0x120] sm:$0xff]
    %v687 = vld [vmem:[#allocation6 + $0x128] sm:$0xff]
    %v688 = vld [vmem:[#allocation6 + $0x130] sm:$0xff]
    %v689 = vld [vmem:[#allocation6 + $0x138] sm:$0xff]
    %v690 = vld [vmem:[#allocation6 + $0x140] sm:$0xff]
    %v691 = vld [vmem:[#allocation6 + $0x148] sm:$0xff]
    %v692 = vld [vmem:[#allocation6 + $0x150] sm:$0xff]
    %v693 = vld [vmem:[#allocation6 + $0x158] sm:$0xff]
    %v694 = vld [vmem:[#allocation6 + $0x160] sm:$0xff]
    %v695 = vld [vmem:[#allocation6 + $0x168] sm:$0xff]
    %v696 = vld [vmem:[#allocation6 + $0x170] sm:$0xff]
    %v697 = vld [vmem:[#allocation6 + $0x178] sm:$0xff]
    %v698 = vld [vmem:[#allocation6 + $0x180] sm:$0xff]
    %v699 = vld [vmem:[#allocation6 + $0x188] sm:$0xff]
    %v700 = vld [vmem:[#allocation6 + $0x190] sm:$0xff]
    %v701 = vld [vmem:[#allocation6 + $0x198] sm:$0xff]
    %v702 = vld [vmem:[#allocation6 + $0x1a0] sm:$0xff]
    %v703 = vld [vmem:[#allocation6 + $0x1a8] sm:$0xff]
    %v704 = vld [vmem:[#allocation6 + $0x1b0] sm:$0xff]
    %v705 = vld [vmem:[#allocation6 + $0x1b8] sm:$0xff]
    %v706 = vld [vmem:[#allocation6 + $0x1c0] sm:$0xff]
    %v707 = vld [vmem:[#allocation6 + $0x1c8] sm:$0xff]
    %v708 = vld [vmem:[#allocation6 + $0x1d0] sm:$0xff]
    %v709 = vld [vmem:[#allocation6 + $0x1d8] sm:$0xff]
    %v710 = vld [vmem:[#allocation6 + $0x1e0] sm:$0xff]
    %v711 = vld [vmem:[#allocation6 + $0x1e8] sm:$0xff]
    %v712 = vld [vmem:[#allocation6 + $0x1f0] sm:$0xff]
    %v713 = vld [vmem:[#allocation6 + $0x1f8] sm:$0xff]
    %714 = vmatprep.subr.mxu0 %v711
    %715 = vmatpush1.msra.mxu0 %v710
    %716 = vmatprep.subr.mxu0 %v707
    %717 = vmatpush1.msra.mxu0 %v706
    %718 = vmatprep.subr.mxu0 %v703
    %719 = vmatpush1.msra.mxu0 %v702
    %720 = vmatprep.subr.mxu0 %v699
    %721 = vmatpush1.msra.mxu0 %v698
    %722 = vmatprep.subr.mxu0 %v695
    %723 = vmatpush1.msra.mxu0 %v694
    %724 = vmatprep.subr.mxu0 %v691
    %725 = vmatpush1.msra.mxu0 %v690
    %726 = vmatprep.subr.mxu0 %v687
    %727 = vmatpush1.msra.mxu0 %v686
    %728 = vmatprep.subr.mxu0 %v683
    %729 = vmatpush1.msra.mxu0 %v682
    %730 = vmatprep.subr.mxu0 %v679
    %731 = vmatpush1.msra.mxu0 %v678
    %732 = vmatprep.subr.mxu0 %v675
    %733 = vmatpush1.msra.mxu0 %v674
    %734 = vmatprep.subr.mxu0 %v671
    %735 = vmatpush1.msra.mxu0 %v670
    %736 = vmatprep.subr.mxu0 %v667
    %737 = vmatpush1.msra.mxu0 %v666
    %738 = vmatprep.subr.mxu0 %v663
    %739 = vmatpush1.msra.mxu0 %v662
    %740 = vmatprep.subr.mxu0 %v659
    %741 = vmatpush1.msra.mxu0 %v658
    %742 = vmatprep.subr.mxu0 %v655
    %743 = vmatpush1.msra.mxu0 %v654
    %744 = vmatprep.subr.mxu0 %v651
    %745 = vmatpush1.msra.mxu0 %v650
    %746 = vmatprep.subr.mxu0 0.0
    %747 = vmatpush2.msra.mxu0 0.0
    %748 = vmatprep.subr.mxu0 0.0
    %749 = vmatpush2.msra.mxu0 0.0
    %750 = vmatprep.subr.mxu0 0.0
    %751 = vmatpush2.msra.mxu0 0.0
    %752 = vmatprep.subr.mxu0 0.0
    %753 = vmatpush2.msra.mxu0 0.0
    %754 = vmatprep.subr.mxu0 0.0
    %755 = vmatpush2.msra.mxu0 0.0
    %756 = vmatprep.subr.mxu0 0.0
    %757 = vmatpush2.msra.mxu0 0.0
    %758 = vmatprep.subr.mxu0 0.0
    %759 = vmatpush2.msra.mxu0 0.0
    %760 = vmatprep.subr.mxu0 0.0
    %761 = vmatpush2.msra.mxu0 0.0
    %762 = vmatprep.subr.mxu0 0.0
    %763 = vmatpush2.msra.mxu0 0.0
    %764 = vmatprep.subr.mxu0 0.0
    %765 = vmatpush2.msra.mxu0 0.0
    %766 = vmatprep.subr.mxu0 0.0
    %767 = vmatpush2.msra.mxu0 0.0
    %768 = vmatprep.subr.mxu0 0.0
    %769 = vmatpush2.msra.mxu0 0.0
    %770 = vmatprep.subr.mxu0 0.0
    %771 = vmatpush2.msra.mxu0 0.0
    %772 = vmatprep.subr.mxu0 0.0
    %773 = vmatpush2.msra.mxu0 0.0
    %774 = vmatprep.subr.mxu0 0.0
    %775 = vmatpush2.msra.mxu0 0.0
    %776 = vmatprep.subr.mxu0 0.0
    %777 = vmatpush2.msra.mxu0 0.0
    %778 = vmatprep.mubr.f32.mxu0 0.0
    %779 = vmatmul.mubr.f32.gmra.mxu0 0.0
    %v780 = vpop.f32.mrf.mxu0
    %v781 = vadd.f32 0.0, %v780
    %v782 = vpop.f32.mrf.mxu0
    %v783 = vadd.f32 0.0, %v782
    %784 = vdwg.mxu0
    %785 = vmatprep.subr.mxu0 %v713
    %786 = vmatpush1.msra.mxu0 %v712
    %787 = vmatprep.subr.mxu0 %v709
    %788 = vmatpush1.msra.mxu0 %v708
    %789 = vmatprep.subr.mxu0 %v705
    %790 = vmatpush1.msra.mxu0 %v704
    %791 = vmatprep.subr.mxu0 %v701
    %792 = vmatpush1.msra.mxu0 %v700
    %793 = vmatprep.subr.mxu0 %v697
    %794 = vmatpush1.msra.mxu0 %v696
    %795 = vmatprep.subr.mxu0 %v693
    %796 = vmatpush1.msra.mxu0 %v692
    %797 = vmatprep.subr.mxu0 %v689
    %798 = vmatpush1.msra.mxu0 %v688
    %799 = vmatprep.subr.mxu0 %v685
    %800 = vmatpush1.msra.mxu0 %v684
    %801 = vmatprep.subr.mxu0 %v681
    %802 = vmatpush1.msra.mxu0 %v680
    %803 = vmatprep.subr.mxu0 %v677
    %804 = vmatpush1.msra.mxu0 %v676
    %805 = vmatprep.subr.mxu0 %v673
    %806 = vmatpush1.msra.mxu0 %v672
    %807 = vmatprep.subr.mxu0 %v669
    %808 = vmatpush1.msra.mxu0 %v668
    %809 = vmatprep.subr.mxu0 %v665
    %810 = vmatpush1.msra.mxu0 %v664
    %811 = vmatprep.subr.mxu0 %v661
    %812 = vmatpush1.msra.mxu0 %v660
    %813 = vmatprep.subr.mxu0 %v657
    %814 = vmatpush1.msra.mxu0 %v656
    %815 = vmatprep.subr.mxu0 %v653
    %816 = vmatpush1.msra.mxu0 %v652
    %817 = vmatprep.subr.mxu0 0.0
    %818 = vmatpush2.msra.mxu0 0.0
    %819 = vmatprep.subr.mxu0 0.0
    %820 = vmatpush2.msra.mxu0 0.0
    %821 = vmatprep.subr.mxu0 0.0
    %822 = vmatpush2.msra.mxu0 0.0
    %823 = vmatprep.subr.mxu0 0.0
    %824 = vmatpush2.msra.mxu0 0.0
    %825 = vmatprep.subr.mxu0 0.0
    %826 = vmatpush2.msra.mxu0 0.0
    %827 = vmatprep.subr.mxu0 0.0
    %828 = vmatpush2.msra.mxu0 0.0
    %829 = vmatprep.subr.mxu0 0.0
    %830 = vmatpush2.msra.mxu0 0.0
    %831 = vmatprep.subr.mxu0 0.0
    %832 = vmatpush2.msra.mxu0 0.0
    %833 = vmatprep.subr.mxu0 0.0
    %834 = vmatpush2.msra.mxu0 0.0
    %835 = vmatprep.subr.mxu0 0.0
    %836 = vmatpush2.msra.mxu0 0.0
    %837 = vmatprep.subr.mxu0 0.0
    %838 = vmatpush2.msra.mxu0 0.0
    %839 = vmatprep.subr.mxu0 0.0
    %840 = vmatpush2.msra.mxu0 0.0
    %841 = vmatprep.subr.mxu0 0.0
    %842 = vmatpush2.msra.mxu0 0.0
    %843 = vmatprep.subr.mxu0 0.0
    %844 = vmatpush2.msra.mxu0 0.0
    %845 = vmatprep.subr.mxu0 0.0
    %846 = vmatpush2.msra.mxu0 0.0
    %847 = vmatprep.subr.mxu0 0.0
    %848 = vmatpush2.msra.mxu0 0.0
    %849 = vmatprep.mubr.f32.mxu0 0.0
    %850 = vmatmul.mubr.f32.gmra.mxu0 0.0
    %v851 = vpop.f32.mrf.mxu0
    %v852 = vadd.f32 0.0, %v851
    %v853 = vpop.f32.mrf.mxu0
    %v854 = vadd.f32 0.0, %v853
    %855 = vdwg.mxu0
    %856 = vmatprep.subr.mxu0 %v647
    %857 = vmatpush1.msra.mxu0 %v646
    %858 = vmatprep.subr.mxu0 %v643
    %859 = vmatpush1.msra.mxu0 %v642
    %860 = vmatprep.subr.mxu0 %v639
    %861 = vmatpush1.msra.mxu0 %v638
    %862 = vmatprep.subr.mxu0 %v635
    %863 = vmatpush1.msra.mxu0 %v634
    %864 = vmatprep.subr.mxu0 %v631
    %865 = vmatpush1.msra.mxu0 %v630
    %866 = vmatprep.subr.mxu0 %v627
    %867 = vmatpush1.msra.mxu0 %v626
    %868 = vmatprep.subr.mxu0 %v623
    %869 = vmatpush1.msra.mxu0 %v622
    %870 = vmatprep.subr.mxu0 %v619
    %871 = vmatpush1.msra.mxu0 %v618
    %872 = vmatprep.subr.mxu0 %v615
    %873 = vmatpush1.msra.mxu0 %v614
    %874 = vmatprep.subr.mxu0 %v611
    %875 = vmatpush1.msra.mxu0 %v610
    %876 = vmatprep.subr.mxu0 %v607
    %877 = vmatpush1.msra.mxu0 %v606
    %878 = vmatprep.subr.mxu0 %v603
    %879 = vmatpush1.msra.mxu0 %v602
    %880 = vmatprep.subr.mxu0 %v599
    %881 = vmatpush1.msra.mxu0 %v598
    %882 = vmatprep.subr.mxu0 %v595
    %883 = vmatpush1.msra.mxu0 %v594
    %884 = vmatprep.subr.mxu0 %v591
    %885 = vmatpush1.msra.mxu0 %v590
    %886 = vmatprep.subr.mxu0 %v587
    %887 = vmatpush1.msra.mxu0 %v586
    %888 = vmatprep.subr.mxu0 0.0
    %889 = vmatpush2.msra.mxu0 0.0
    %890 = vmatprep.subr.mxu0 0.0
    %891 = vmatpush2.msra.mxu0 0.0
    %892 = vmatprep.subr.mxu0 0.0
    %893 = vmatpush2.msra.mxu0 0.0
    %894 = vmatprep.subr.mxu0 0.0
    %895 = vmatpush2.msra.mxu0 0.0
    %896 = vmatprep.subr.mxu0 0.0
    %897 = vmatpush2.msra.mxu0 0.0
    %898 = vmatprep.subr.mxu0 0.0
    %899 = vmatpush2.msra.mxu0 0.0
    %900 = vmatprep.subr.mxu0 0.0
    %901 = vmatpush2.msra.mxu0 0.0
    %902 = vmatprep.subr.mxu0 0.0
    %903 = vmatpush2.msra.mxu0 0.0
    %904 = vmatprep.subr.mxu0 0.0
    %905 = vmatpush2.msra.mxu0 0.0
    %906 = vmatprep.subr.mxu0 0.0
    %907 = vmatpush2.msra.mxu0 0.0
    %908 = vmatprep.subr.mxu0 0.0
    %909 = vmatpush2.msra.mxu0 0.0
    %910 = vmatprep.subr.mxu0 0.0
    %911 = vmatpush2.msra.mxu0 0.0
    %912 = vmatprep.subr.mxu0 0.0
    %913 = vmatpush2.msra.mxu0 0.0
    %914 = vmatprep.subr.mxu0 0.0
    %915 = vmatpush2.msra.mxu0 0.0
    %916 = vmatprep.subr.mxu0 0.0
    %917 = vmatpush2.msra.mxu0 0.0
    %918 = vmatprep.subr.mxu0 0.0
    %919 = vmatpush2.msra.mxu0 0.0
    %920 = vmatprep.mubr.f32.mxu0 0.0
    %921 = vmatmul.mubr.f32.gmra.mxu0 %v585
    %v922 = vpop.f32.mrf.mxu0
    %v923 = vadd.f32 %v781, %v922
    %v924 = vpop.f32.mrf.mxu0
    %v925 = vadd.f32 %v783, %v924
    %926 = vdwg.mxu0
    %927 = vmatprep.subr.mxu0 %v649
    %928 = vmatpush1.msra.mxu0 %v648
    %929 = vmatprep.subr.mxu0 %v645
    %930 = vmatpush1.msra.mxu0 %v644
    %931 = vmatprep.subr.mxu0 %v641
    %932 = vmatpush1.msra.mxu0 %v640
    %933 = vmatprep.subr.mxu0 %v637
    %934 = vmatpush1.msra.mxu0 %v636
    %935 = vmatprep.subr.mxu0 %v633
    %936 = vmatpush1.msra.mxu0 %v632
    %937 = vmatprep.subr.mxu0 %v629
    %938 = vmatpush1.msra.mxu0 %v628
    %939 = vmatprep.subr.mxu0 %v625
    %940 = vmatpush1.msra.mxu0 %v624
    %941 = vmatprep.subr.mxu0 %v621
    %942 = vmatpush1.msra.mxu0 %v620
    %943 = vmatprep.subr.mxu0 %v617
    %944 = vmatpush1.msra.mxu0 %v616
    %945 = vmatprep.subr.mxu0 %v613
    %946 = vmatpush1.msra.mxu0 %v612
    %947 = vmatprep.subr.mxu0 %v609
    %948 = vmatpush1.msra.mxu0 %v608
    %949 = vmatprep.subr.mxu0 %v605
    %950 = vmatpush1.msra.mxu0 %v604
    %951 = vmatprep.subr.mxu0 %v601
    %952 = vmatpush1.msra.mxu0 %v600
    %953 = vmatprep.subr.mxu0 %v597
    %954 = vmatpush1.msra.mxu0 %v596
    %955 = vmatprep.subr.mxu0 %v593
    %956 = vmatpush1.msra.mxu0 %v592
    %957 = vmatprep.subr.mxu0 %v589
    %958 = vmatpush1.msra.mxu0 %v588
    %959 = vmatprep.subr.mxu0 0.0
    %960 = vmatpush2.msra.mxu0 0.0
    %961 = vmatprep.subr.mxu0 0.0
    %962 = vmatpush2.msra.mxu0 0.0
    %963 = vmatprep.subr.mxu0 0.0
    %964 = vmatpush2.msra.mxu0 0.0
    %965 = vmatprep.subr.mxu0 0.0
    %966 = vmatpush2.msra.mxu0 0.0
    %967 = vmatprep.subr.mxu0 0.0
    %968 = vmatpush2.msra.mxu0 0.0
    %969 = vmatprep.subr.mxu0 0.0
    %970 = vmatpush2.msra.mxu0 0.0
    %971 = vmatprep.subr.mxu0 0.0
    %972 = vmatpush2.msra.mxu0 0.0
    %973 = vmatprep.subr.mxu0 0.0
    %974 = vmatpush2.msra.mxu0 0.0
    %975 = vmatprep.subr.mxu0 0.0
    %976 = vmatpush2.msra.mxu0 0.0
    %977 = vmatprep.subr.mxu0 0.0
    %978 = vmatpush2.msra.mxu0 0.0
    %979 = vmatprep.subr.mxu0 0.0
    %980 = vmatpush2.msra.mxu0 0.0
    %981 = vmatprep.subr.mxu0 0.0
    %982 = vmatpush2.msra.mxu0 0.0
    %983 = vmatprep.subr.mxu0 0.0
    %984 = vmatpush2.msra.mxu0 0.0
    %985 = vmatprep.subr.mxu0 0.0
    %986 = vmatpush2.msra.mxu0 0.0
    %987 = vmatprep.subr.mxu0 0.0
    %988 = vmatpush2.msra.mxu0 0.0
    %989 = vmatprep.subr.mxu0 0.0
    %990 = vmatpush2.msra.mxu0 0.0
    %991 = vmatprep.mubr.f32.mxu0 0.0
    %992 = vmatmul.mubr.f32.gmra.mxu0 %v585
    %v993 = vpop.f32.mrf.mxu0
    %v994 = vadd.f32 %v852, %v993
    %v995 = vpop.f32.mrf.mxu0
    %v996 = vadd.f32 %v854, %v995
    %997 = vdwg.mxu0
    %v998 = vld [vmem:[%s6] sm:$0xf]
    %v1000 = vlaneseq
    %v1001 = vshrl.u32 %v1000, 7
    %v1002 = vsub.s32 0, %v1001
    %v1003 = vrot.slane %v998, %v1002
    %v1004 = vlaneseq
    %v1005 = vshrl.u32 %v1004, 7
    %v1006 = vsub.s32 1, %v1005
    %v1007 = vrot.slane %v998, %v1006
    %v1008 = vlaneseq
    %v1009 = vshrl.u32 %v1008, 7
    %v1010 = vsub.s32 2, %v1009
    %v1011 = vrot.slane %v998, %v1010
    %v1012 = vlaneseq
    %v1013 = vshrl.u32 %v1012, 7
    %v1014 = vsub.s32 3, %v1013
    %v1015 = vrot.slane %v998, %v1014
    %v1020 = vadd.f32 %v923, %v1003
    %v1021 = vadd.f32 %v925, %v1007
    %v1022 = vadd.f32 %v994, %v1011
    %v1023 = vadd.f32 %v996, %v1015
    %v1024 = vmul.f32 %v1020, 0.5
    %v1025 = vtanh.pop %v1024
    %v1026 = vmul.f32 %v1025, 0.5
    %v1027 = vadd.f32 %v1026, 0.5
    %v1028 = vmul.f32 %v1021, 0.5
    %v1029 = vtanh.pop %v1028
    %v1030 = vmul.f32 %v1029, 0.5
    %v1031 = vadd.f32 %v1030, 0.5
    %v1032 = vtanh.pop %v1022
    %v1033 = vmul.f32 %v1023, 0.5
    %v1034 = vtanh.pop %v1033
    %v1035 = vmul.f32 %v1034, 0.5
    %v1036 = vadd.f32 %v1035, 0.5
    %v1037 = vmul.f32 %v1031, 0.0
    %v1038 = vmul.f32 %v1027, %v1032
    %v1039 = vadd.f32 %v1037, %v1038
    %v1040 = vtanh.pop %v1039
    %v1041 = vmul.f32 %v1036, %v1040
    %1042 = vmatprep.subr.mxu0 %v419
    %1043 = vmatpush1.msra.mxu0 %v418
    %1044 = vmatprep.subr.mxu0 %v415
    %1045 = vmatpush1.msra.mxu0 %v414
    %1046 = vmatprep.subr.mxu0 %v411
    %1047 = vmatpush1.msra.mxu0 %v410
    %1048 = vmatprep.subr.mxu0 %v407
    %1049 = vmatpush1.msra.mxu0 %v406
    %1050 = vmatprep.subr.mxu0 %v403
    %1051 = vmatpush1.msra.mxu0 %v402
    %1052 = vmatprep.subr.mxu0 %v399
    %1053 = vmatpush1.msra.mxu0 %v398
    %1054 = vmatprep.subr.mxu0 %v395
    %1055 = vmatpush1.msra.mxu0 %v394
    %1056 = vmatprep.subr.mxu0 %v391
    %1057 = vmatpush1.msra.mxu0 %v390
    %1058 = vmatprep.subr.mxu0 %v387
    %1059 = vmatpush1.msra.mxu0 %v386
    %1060 = vmatprep.subr.mxu0 %v383
    %1061 = vmatpush1.msra.mxu0 %v382
    %1062 = vmatprep.subr.mxu0 %v379
    %1063 = vmatpush1.msra.mxu0 %v378
    %1064 = vmatprep.subr.mxu0 %v375
    %1065 = vmatpush1.msra.mxu0 %v374
    %1066 = vmatprep.subr.mxu0 %v371
    %1067 = vmatpush1.msra.mxu0 %v370
    %1068 = vmatprep.subr.mxu0 %v367
    %1069 = vmatpush1.msra.mxu0 %v366
    %1070 = vmatprep.subr.mxu0 %v363
    %1071 = vmatpush1.msra.mxu0 %v362
    %1072 = vmatprep.subr.mxu0 %v359
    %1073 = vmatpush1.msra.mxu0 %v358
    %1074 = vmatprep.subr.mxu0 0.0
    %1075 = vmatpush2.msra.mxu0 0.0
    %1076 = vmatprep.subr.mxu0 0.0
    %1077 = vmatpush2.msra.mxu0 0.0
    %1078 = vmatprep.subr.mxu0 0.0
    %1079 = vmatpush2.msra.mxu0 0.0
    %1080 = vmatprep.subr.mxu0 0.0
    %1081 = vmatpush2.msra.mxu0 0.0
    %1082 = vmatprep.subr.mxu0 0.0
    %1083 = vmatpush2.msra.mxu0 0.0
    %1084 = vmatprep.subr.mxu0 0.0
    %1085 = vmatpush2.msra.mxu0 0.0
    %1086 = vmatprep.subr.mxu0 0.0
    %1087 = vmatpush2.msra.mxu0 0.0
    %1088 = vmatprep.subr.mxu0 0.0
    %1089 = vmatpush2.msra.mxu0 0.0
    %1090 = vmatprep.subr.mxu0 0.0
    %1091 = vmatpush2.msra.mxu0 0.0
    %1092 = vmatprep.subr.mxu0 0.0
    %1093 = vmatpush2.msra.mxu0 0.0
    %1094 = vmatprep.subr.mxu0 0.0
    %1095 = vmatpush2.msra.mxu0 0.0
    %1096 = vmatprep.subr.mxu0 0.0
    %1097 = vmatpush2.msra.mxu0 0.0
    %1098 = vmatprep.subr.mxu0 0.0
    %1099 = vmatpush2.msra.mxu0 0.0
    %1100 = vmatprep.subr.mxu0 0.0
    %1101 = vmatpush2.msra.mxu0 0.0
    %1102 = vmatprep.subr.mxu0 0.0
    %1103 = vmatpush2.msra.mxu0 0.0
    %1104 = vmatprep.subr.mxu0 0.0
    %1105 = vmatpush2.msra.mxu0 0.0
    %1106 = vmatprep.mubr.f32.mxu0 0.0
    %1107 = vmatmul.mubr.f32.gmra.mxu0 %v585
    %v1108 = vpop.f32.mrf.mxu0
    %v1109 = vadd.f32 0.0, %v1108
    %v1110 = vpop.f32.mrf.mxu0
    %v1111 = vadd.f32 0.0, %v1110
    %1112 = vdwg.mxu0
    %1113 = vmatprep.subr.mxu0 %v421
    %1114 = vmatpush1.msra.mxu0 %v420
    %1115 = vmatprep.subr.mxu0 %v417
    %1116 = vmatpush1.msra.mxu0 %v416
    %1117 = vmatprep.subr.mxu0 %v413
    %1118 = vmatpush1.msra.mxu0 %v412
    %1119 = vmatprep.subr.mxu0 %v409
    %1120 = vmatpush1.msra.mxu0 %v408
    %1121 = vmatprep.subr.mxu0 %v405
    %1122 = vmatpush1.msra.mxu0 %v404
    %1123 = vmatprep.subr.mxu0 %v401
    %1124 = vmatpush1.msra.mxu0 %v400
    %1125 = vmatprep.subr.mxu0 %v397
    %1126 = vmatpush1.msra.mxu0 %v396
    %1127 = vmatprep.subr.mxu0 %v393
    %1128 = vmatpush1.msra.mxu0 %v392
    %1129 = vmatprep.subr.mxu0 %v389
    %1130 = vmatpush1.msra.mxu0 %v388
    %1131 = vmatprep.subr.mxu0 %v385
    %1132 = vmatpush1.msra.mxu0 %v384
    %1133 = vmatprep.subr.mxu0 %v381
    %1134 = vmatpush1.msra.mxu0 %v380
    %1135 = vmatprep.subr.mxu0 %v377
    %1136 = vmatpush1.msra.mxu0 %v376
    %1137 = vmatprep.subr.mxu0 %v373
    %1138 = vmatpush1.msra.mxu0 %v372
    %1139 = vmatprep.subr.mxu0 %v369
    %1140 = vmatpush1.msra.mxu0 %v368
    %1141 = vmatprep.subr.mxu0 %v365
    %1142 = vmatpush1.msra.mxu0 %v364
    %1143 = vmatprep.subr.mxu0 %v361
    %1144 = vmatpush1.msra.mxu0 %v360
    %1145 = vmatprep.subr.mxu0 0.0
    %1146 = vmatpush2.msra.mxu0 0.0
    %1147 = vmatprep.subr.mxu0 0.0
    %1148 = vmatpush2.msra.mxu0 0.0
    %1149 = vmatprep.subr.mxu0 0.0
    %1150 = vmatpush2.msra.mxu0 0.0
    %1151 = vmatprep.subr.mxu0 0.0
    %1152 = vmatpush2.msra.mxu0 0.0
    %1153 = vmatprep.subr.mxu0 0.0
    %1154 = vmatpush2.msra.mxu0 0.0
    %1155 = vmatprep.subr.mxu0 0.0
    %1156 = vmatpush2.msra.mxu0 0.0
    %1157 = vmatprep.subr.mxu0 0.0
    %1158 = vmatpush2.msra.mxu0 0.0
    %1159 = vmatprep.subr.mxu0 0.0
    %1160 = vmatpush2.msra.mxu0 0.0
    %1161 = vmatprep.subr.mxu0 0.0
    %1162 = vmatpush2.msra.mxu0 0.0
    %1163 = vmatprep.subr.mxu0 0.0
    %1164 = vmatpush2.msra.mxu0 0.0
    %1165 = vmatprep.subr.mxu0 0.0
    %1166 = vmatpush2.msra.mxu0 0.0
    %1167 = vmatprep.subr.mxu0 0.0
    %1168 = vmatpush2.msra.mxu0 0.0
    %1169 = vmatprep.subr.mxu0 0.0
    %1170 = vmatpush2.msra.mxu0 0.0
    %1171 = vmatprep.subr.mxu0 0.0
    %1172 = vmatpush2.msra.mxu0 0.0
    %1173 = vmatprep.subr.mxu0 0.0
    %1174 = vmatpush2.msra.mxu0 0.0
    %1175 = vmatprep.subr.mxu0 0.0
    %1176 = vmatpush2.msra.mxu0 0.0
    %1177 = vmatprep.mubr.f32.mxu0 0.0
    %1178 = vmatmul.mubr.f32.gmra.mxu0 %v585
    %v1179 = vpop.f32.mrf.mxu0
    %v1180 = vadd.f32 0.0, %v1179
    %v1181 = vpop.f32.mrf.mxu0
    %v1182 = vadd.f32 0.0, %v1181
    %1183 = vdwg.mxu0
    %v1184 = vadd.f32 %v205, %v1109
    %v1185 = vadd.f32 %v207, %v1111
    %v1186 = vadd.f32 %v318, %v1180
    %v1187 = vadd.f32 %v320, %v1182
    %v1188 = vmul.f32 %v1184, 0.5
    %v1189 = vtanh.pop %v1188
    %v1190 = vmul.f32 %v1189, 0.5
    %v1191 = vadd.f32 %v1190, 0.5
    %v1192 = vmul.f32 %v1185, 0.5
    %v1193 = vtanh.pop %v1192
    %v1194 = vmul.f32 %v1193, 0.5
    %v1195 = vadd.f32 %v1194, 0.5
    %v1196 = vtanh.pop %v1186
    %v1197 = vmul.f32 %v1187, 0.5
    %v1198 = vtanh.pop %v1197
    %v1199 = vmul.f32 %v1198, 0.5
    %v1200 = vadd.f32 %v1199, 0.5
    %v1201 = vmul.f32 %v1195, %v583
    %v1202 = vmul.f32 %v1191, %v1196
    %v1203 = vadd.f32 %v1201, %v1202
    %v1204 = vtanh.pop %v1203
    %v1205 = vmul.f32 %v1200, %v1204
    %1206 = vmatprep.subr.mxu0 %v711
    %1207 = vmatpush1.msra.mxu0 %v710
    %1208 = vmatprep.subr.mxu0 %v707
    %1209 = vmatpush1.msra.mxu0 %v706
    %1210 = vmatprep.subr.mxu0 %v703
    %1211 = vmatpush1.msra.mxu0 %v702
    %1212 = vmatprep.subr.mxu0 %v699
    %1213 = vmatpush1.msra.mxu0 %v698
    %1214 = vmatprep.subr.mxu0 %v695
    %1215 = vmatpush1.msra.mxu0 %v694
    %1216 = vmatprep.subr.mxu0 %v691
    %1217 = vmatpush1.msra.mxu0 %v690
    %1218 = vmatprep.subr.mxu0 %v687
    %1219 = vmatpush1.msra.mxu0 %v686
    %1220 = vmatprep.subr.mxu0 %v683
    %1221 = vmatpush1.msra.mxu0 %v682
    %1222 = vmatprep.subr.mxu0 %v679
    %1223 = vmatpush1.msra.mxu0 %v678
    %1224 = vmatprep.subr.mxu0 %v675
    %1225 = vmatpush1.msra.mxu0 %v674
    %1226 = vmatprep.subr.mxu0 %v671
    %1227 = vmatpush1.msra.mxu0 %v670
    %1228 = vmatprep.subr.mxu0 %v667
    %1229 = vmatpush1.msra.mxu0 %v666
    %1230 = vmatprep.subr.mxu0 %v663
    %1231 = vmatpush1.msra.mxu0 %v662
    %1232 = vmatprep.subr.mxu0 %v659
    %1233 = vmatpush1.msra.mxu0 %v658
    %1234 = vmatprep.subr.mxu0 %v655
    %1235 = vmatpush1.msra.mxu0 %v654
    %1236 = vmatprep.subr.mxu0 %v651
    %1237 = vmatpush1.msra.mxu0 %v650
    %1238 = vmatprep.subr.mxu0 0.0
    %1239 = vmatpush2.msra.mxu0 0.0
    %1240 = vmatprep.subr.mxu0 0.0
    %1241 = vmatpush2.msra.mxu0 0.0
    %1242 = vmatprep.subr.mxu0 0.0
    %1243 = vmatpush2.msra.mxu0 0.0
    %1244 = vmatprep.subr.mxu0 0.0
    %1245 = vmatpush2.msra.mxu0 0.0
    %1246 = vmatprep.subr.mxu0 0.0
    %1247 = vmatpush2.msra.mxu0 0.0
    %1248 = vmatprep.subr.mxu0 0.0
    %1249 = vmatpush2.msra.mxu0 0.0
    %1250 = vmatprep.subr.mxu0 0.0
    %1251 = vmatpush2.msra.mxu0 0.0
    %1252 = vmatprep.subr.mxu0 0.0
    %1253 = vmatpush2.msra.mxu0 0.0
    %1254 = vmatprep.subr.mxu0 0.0
    %1255 = vmatpush2.msra.mxu0 0.0
    %1256 = vmatprep.subr.mxu0 0.0
    %1257 = vmatpush2.msra.mxu0 0.0
    %1258 = vmatprep.subr.mxu0 0.0
    %1259 = vmatpush2.msra.mxu0 0.0
    %1260 = vmatprep.subr.mxu0 0.0
    %1261 = vmatpush2.msra.mxu0 0.0
    %1262 = vmatprep.subr.mxu0 0.0
    %1263 = vmatpush2.msra.mxu0 0.0
    %1264 = vmatprep.subr.mxu0 0.0
    %1265 = vmatpush2.msra.mxu0 0.0
    %1266 = vmatprep.subr.mxu0 0.0
    %1267 = vmatpush2.msra.mxu0 0.0
    %1268 = vmatprep.subr.mxu0 0.0
    %1269 = vmatpush2.msra.mxu0 0.0
    %1270 = vmatprep.mubr.f32.mxu0 0.0
    %1271 = vmatmul.mubr.f32.gmra.mxu0 %v1041
    %v1272 = vpop.f32.mrf.mxu0
    %v1273 = vadd.f32 0.0, %v1272
    %v1274 = vpop.f32.mrf.mxu0
    %v1275 = vadd.f32 0.0, %v1274
    %1276 = vdwg.mxu0
    %1277 = vmatprep.subr.mxu0 %v713
    %1278 = vmatpush1.msra.mxu0 %v712
    %1279 = vmatprep.subr.mxu0 %v709
    %1280 = vmatpush1.msra.mxu0 %v708
    %1281 = vmatprep.subr.mxu0 %v705
    %1282 = vmatpush1.msra.mxu0 %v704
    %1283 = vmatprep.subr.mxu0 %v701
    %1284 = vmatpush1.msra.mxu0 %v700
    %1285 = vmatprep.subr.mxu0 %v697
    %1286 = vmatpush1.msra.mxu0 %v696
    %1287 = vmatprep.subr.mxu0 %v693
    %1288 = vmatpush1.msra.mxu0 %v692
    %1289 = vmatprep.subr.mxu0 %v689
    %1290 = vmatpush1.msra.mxu0 %v688
    %1291 = vmatprep.subr.mxu0 %v685
    %1292 = vmatpush1.msra.mxu0 %v684
    %1293 = vmatprep.subr.mxu0 %v681
    %1294 = vmatpush1.msra.mxu0 %v680
    %1295 = vmatprep.subr.mxu0 %v677
    %1296 = vmatpush1.msra.mxu0 %v676
    %1297 = vmatprep.subr.mxu0 %v673
    %1298 = vmatpush1.msra.mxu0 %v672
    %1299 = vmatprep.subr.mxu0 %v669
    %1300 = vmatpush1.msra.mxu0 %v668
    %1301 = vmatprep.subr.mxu0 %v665
    %1302 = vmatpush1.msra.mxu0 %v664
    %1303 = vmatprep.subr.mxu0 %v661
    %1304 = vmatpush1.msra.mxu0 %v660
    %1305 = vmatprep.subr.mxu0 %v657
    %1306 = vmatpush1.msra.mxu0 %v656
    %1307 = vmatprep.subr.mxu0 %v653
    %1308 = vmatpush1.msra.mxu0 %v652
    %1309 = vmatprep.subr.mxu0 0.0
    %1310 = vmatpush2.msra.mxu0 0.0
    %1311 = vmatprep.subr.mxu0 0.0
    %1312 = vmatpush2.msra.mxu0 0.0
    %1313 = vmatprep.subr.mxu0 0.0
    %1314 = vmatpush2.msra.mxu0 0.0
    %1315 = vmatprep.subr.mxu0 0.0
    %1316 = vmatpush2.msra.mxu0 0.0
    %1317 = vmatprep.subr.mxu0 0.0
    %1318 = vmatpush2.msra.mxu0 0.0
    %1319 = vmatprep.subr.mxu0 0.0
    %1320 = vmatpush2.msra.mxu0 0.0
    %1321 = vmatprep.subr.mxu0 0.0
    %1322 = vmatpush2.msra.mxu0 0.0
    %1323 = vmatprep.subr.mxu0 0.0
    %1324 = vmatpush2.msra.mxu0 0.0
    %1325 = vmatprep.subr.mxu0 0.0
    %1326 = vmatpush2.msra.mxu0 0.0
    %1327 = vmatprep.subr.mxu0 0.0
    %1328 = vmatpush2.msra.mxu0 0.0
    %1329 = vmatprep.subr.mxu0 0.0
    %1330 = vmatpush2.msra.mxu0 0.0
    %1331 = vmatprep.subr.mxu0 0.0
    %1332 = vmatpush2.msra.mxu0 0.0
    %1333 = vmatprep.subr.mxu0 0.0
    %1334 = vmatpush2.msra.mxu0 0.0
    %1335 = vmatprep.subr.mxu0 0.0
    %1336 = vmatpush2.msra.mxu0 0.0
    %1337 = vmatprep.subr.mxu0 0.0
    %1338 = vmatpush2.msra.mxu0 0.0
    %1339 = vmatprep.subr.mxu0 0.0
    %1340 = vmatpush2.msra.mxu0 0.0
    %1341 = vmatprep.mubr.f32.mxu0 0.0
    %1342 = vmatmul.mubr.f32.gmra.mxu0 %v1041
    %v1343 = vpop.f32.mrf.mxu0
    %v1344 = vadd.f32 0.0, %v1343
    %v1345 = vpop.f32.mrf.mxu0
    %v1346 = vadd.f32 0.0, %v1345
    %1347 = vdwg.mxu0
    %1348 = vmatprep.subr.mxu0 %v647
    %1349 = vmatpush1.msra.mxu0 %v646
    %1350 = vmatprep.subr.mxu0 %v643
    %1351 = vmatpush1.msra.mxu0 %v642
    %1352 = vmatprep.subr.mxu0 %v639
    %1353 = vmatpush1.msra.mxu0 %v638
    %1354 = vmatprep.subr.mxu0 %v635
    %1355 = vmatpush1.msra.mxu0 %v634
    %1356 = vmatprep.subr.mxu0 %v631
    %1357 = vmatpush1.msra.mxu0 %v630
    %1358 = vmatprep.subr.mxu0 %v627
    %1359 = vmatpush1.msra.mxu0 %v626
    %1360 = vmatprep.subr.mxu0 %v623
    %1361 = vmatpush1.msra.mxu0 %v622
    %1362 = vmatprep.subr.mxu0 %v619
    %1363 = vmatpush1.msra.mxu0 %v618
    %1364 = vmatprep.subr.mxu0 %v615
    %1365 = vmatpush1.msra.mxu0 %v614
    %1366 = vmatprep.subr.mxu0 %v611
    %1367 = vmatpush1.msra.mxu0 %v610
    %1368 = vmatprep.subr.mxu0 %v607
    %1369 = vmatpush1.msra.mxu0 %v606
    %1370 = vmatprep.subr.mxu0 %v603
    %1371 = vmatpush1.msra.mxu0 %v602
    %1372 = vmatprep.subr.mxu0 %v599
    %1373 = vmatpush1.msra.mxu0 %v598
    %1374 = vmatprep.subr.mxu0 %v595
    %1375 = vmatpush1.msra.mxu0 %v594
    %1376 = vmatprep.subr.mxu0 %v591
    %1377 = vmatpush1.msra.mxu0 %v590
    %1378 = vmatprep.subr.mxu0 %v587
    %1379 = vmatpush1.msra.mxu0 %v586
    %1380 = vmatprep.subr.mxu0 0.0
    %1381 = vmatpush2.msra.mxu0 0.0
    %1382 = vmatprep.subr.mxu0 0.0
    %1383 = vmatpush2.msra.mxu0 0.0
    %1384 = vmatprep.subr.mxu0 0.0
    %1385 = vmatpush2.msra.mxu0 0.0
    %1386 = vmatprep.subr.mxu0 0.0
    %1387 = vmatpush2.msra.mxu0 0.0
    %1388 = vmatprep.subr.mxu0 0.0
    %1389 = vmatpush2.msra.mxu0 0.0
    %1390 = vmatprep.subr.mxu0 0.0
    %1391 = vmatpush2.msra.mxu0 0.0
    %1392 = vmatprep.subr.mxu0 0.0
    %1393 = vmatpush2.msra.mxu0 0.0
    %1394 = vmatprep.subr.mxu0 0.0
    %1395 = vmatpush2.msra.mxu0 0.0
    %1396 = vmatprep.subr.mxu0 0.0
    %1397 = vmatpush2.msra.mxu0 0.0
    %1398 = vmatprep.subr.mxu0 0.0
    %1399 = vmatpush2.msra.mxu0 0.0
    %1400 = vmatprep.subr.mxu0 0.0
    %1401 = vmatpush2.msra.mxu0 0.0
    %1402 = vmatprep.subr.mxu0 0.0
    %1403 = vmatpush2.msra.mxu0 0.0
    %1404 = vmatprep.subr.mxu0 0.0
    %1405 = vmatpush2.msra.mxu0 0.0
    %1406 = vmatprep.subr.mxu0 0.0
    %1407 = vmatpush2.msra.mxu0 0.0
    %1408 = vmatprep.subr.mxu0 0.0
    %1409 = vmatpush2.msra.mxu0 0.0
    %1410 = vmatprep.subr.mxu0 0.0
    %1411 = vmatpush2.msra.mxu0 0.0
    %1412 = vmatprep.mubr.f32.mxu0 0.0
    %1413 = vmatmul.mubr.f32.gmra.mxu0 %v1205
    %v1414 = vpop.f32.mrf.mxu0
    %v1415 = vadd.f32 %v1273, %v1414
    %v1416 = vpop.f32.mrf.mxu0
    %v1417 = vadd.f32 %v1275, %v1416
    %1418 = vdwg.mxu0
    %1419 = vmatprep.subr.mxu0 %v649
    %1420 = vmatpush1.msra.mxu0 %v648
    %1421 = vmatprep.subr.mxu0 %v645
    %1422 = vmatpush1.msra.mxu0 %v644
    %1423 = vmatprep.subr.mxu0 %v641
    %1424 = vmatpush1.msra.mxu0 %v640
    %1425 = vmatprep.subr.mxu0 %v637
    %1426 = vmatpush1.msra.mxu0 %v636
    %1427 = vmatprep.subr.mxu0 %v633
    %1428 = vmatpush1.msra.mxu0 %v632
    %1429 = vmatprep.subr.mxu0 %v629
    %1430 = vmatpush1.msra.mxu0 %v628
    %1431 = vmatprep.subr.mxu0 %v625
    %1432 = vmatpush1.msra.mxu0 %v624
    %1433 = vmatprep.subr.mxu0 %v621
    %1434 = vmatpush1.msra.mxu0 %v620
    %1435 = vmatprep.subr.mxu0 %v617
    %1436 = vmatpush1.msra.mxu0 %v616
    %1437 = vmatprep.subr.mxu0 %v613
    %1438 = vmatpush1.msra.mxu0 %v612
    %1439 = vmatprep.subr.mxu0 %v609
    %1440 = vmatpush1.msra.mxu0 %v608
    %1441 = vmatprep.subr.mxu0 %v605
    %1442 = vmatpush1.msra.mxu0 %v604
    %1443 = vmatprep.subr.mxu0 %v601
    %1444 = vmatpush1.msra.mxu0 %v600
    %1445 = vmatprep.subr.mxu0 %v597
    %1446 = vmatpush1.msra.mxu0 %v596
    %1447 = vmatprep.subr.mxu0 %v593
    %1448 = vmatpush1.msra.mxu0 %v592
    %1449 = vmatprep.subr.mxu0 %v589
    %1450 = vmatpush1.msra.mxu0 %v588
    %1451 = vmatprep.subr.mxu0 0.0
    %1452 = vmatpush2.msra.mxu0 0.0
    %1453 = vmatprep.subr.mxu0 0.0
    %1454 = vmatpush2.msra.mxu0 0.0
    %1455 = vmatprep.subr.mxu0 0.0
    %1456 = vmatpush2.msra.mxu0 0.0
    %1457 = vmatprep.subr.mxu0 0.0
    %1458 = vmatpush2.msra.mxu0 0.0
    %1459 = vmatprep.subr.mxu0 0.0
    %1460 = vmatpush2.msra.mxu0 0.0
    %1461 = vmatprep.subr.mxu0 0.0
    %1462 = vmatpush2.msra.mxu0 0.0
    %1463 = vmatprep.subr.mxu0 0.0
    %1464 = vmatpush2.msra.mxu0 0.0
    %1465 = vmatprep.subr.mxu0 0.0
    %1466 = vmatpush2.msra.mxu0 0.0
    %1467 = vmatprep.subr.mxu0 0.0
    %1468 = vmatpush2.msra.mxu0 0.0
    %1469 = vmatprep.subr.mxu0 0.0
    %1470 = vmatpush2.msra.mxu0 0.0
    %1471 = vmatprep.subr.mxu0 0.0
    %1472 = vmatpush2.msra.mxu0 0.0
    %1473 = vmatprep.subr.mxu0 0.0
    %1474 = vmatpush2.msra.mxu0 0.0
    %1475 = vmatprep.subr.mxu0 0.0
    %1476 = vmatpush2.msra.mxu0 0.0
    %1477 = vmatprep.subr.mxu0 0.0
    %1478 = vmatpush2.msra.mxu0 0.0
    %1479 = vmatprep.subr.mxu0 0.0
    %1480 = vmatpush2.msra.mxu0 0.0
    %1481 = vmatprep.subr.mxu0 0.0
    %1482 = vmatpush2.msra.mxu0 0.0
    %1483 = vmatprep.mubr.f32.mxu0 0.0
    %1484 = vmatmul.mubr.f32.gmra.mxu0 %v1205
    %v1485 = vpop.f32.mrf.mxu0
    %v1486 = vadd.f32 %v1344, %v1485
    %v1487 = vpop.f32.mrf.mxu0
    %v1488 = vadd.f32 %v1346, %v1487
    %1489 = vdwg.mxu0
    %v1490 = vadd.f32 %v1415, %v1003
    %v1491 = vadd.f32 %v1417, %v1007
    %v1492 = vadd.f32 %v1486, %v1011
    %v1493 = vadd.f32 %v1488, %v1015
    %v1494 = vmul.f32 %v1490, 0.5
    %v1495 = vtanh.pop %v1494
    %v1496 = vmul.f32 %v1495, 0.5
    %v1497 = vadd.f32 %v1496, 0.5
    %v1498 = vmul.f32 %v1491, 0.5
    %v1499 = vtanh.pop %v1498
    %v1500 = vmul.f32 %v1499, 0.5
    %v1501 = vadd.f32 %v1500, 0.5
    %v1502 = vtanh.pop %v1492
    %v1503 = vmul.f32 %v1493, 0.5
    %v1504 = vtanh.pop %v1503
    %v1505 = vmul.f32 %v1504, 0.5
    %v1506 = vadd.f32 %v1505, 0.5
    %v1507 = vmul.f32 %v1501, %v1039
    %v1508 = vmul.f32 %v1497, %v1502
    %v1509 = vadd.f32 %v1507, %v1508
    %v1510 = vtanh.pop %v1509
    %v1511 = vmul.f32 %v1506, %v1510
    %1512 = vmatprep.subr.mxu0 %v419
    %1513 = vmatpush1.msra.mxu0 %v418
    %1514 = vmatprep.subr.mxu0 %v415
    %1515 = vmatpush1.msra.mxu0 %v414
    %1516 = vmatprep.subr.mxu0 %v411
    %1517 = vmatpush1.msra.mxu0 %v410
    %1518 = vmatprep.subr.mxu0 %v407
    %1519 = vmatpush1.msra.mxu0 %v406
    %1520 = vmatprep.subr.mxu0 %v403
    %1521 = vmatpush1.msra.mxu0 %v402
    %1522 = vmatprep.subr.mxu0 %v399
    %1523 = vmatpush1.msra.mxu0 %v398
    %1524 = vmatprep.subr.mxu0 %v395
    %1525 = vmatpush1.msra.mxu0 %v394
    %1526 = vmatprep.subr.mxu0 %v391
    %1527 = vmatpush1.msra.mxu0 %v390
    %1528 = vmatprep.subr.mxu0 %v387
    %1529 = vmatpush1.msra.mxu0 %v386
    %1530 = vmatprep.subr.mxu0 %v383
    %1531 = vmatpush1.msra.mxu0 %v382
    %1532 = vmatprep.subr.mxu0 %v379
    %1533 = vmatpush1.msra.mxu0 %v378
    %1534 = vmatprep.subr.mxu0 %v375
    %1535 = vmatpush1.msra.mxu0 %v374
    %1536 = vmatprep.subr.mxu0 %v371
    %1537 = vmatpush1.msra.mxu0 %v370
    %1538 = vmatprep.subr.mxu0 %v367
    %1539 = vmatpush1.msra.mxu0 %v366
    %1540 = vmatprep.subr.mxu0 %v363
    %1541 = vmatpush1.msra.mxu0 %v362
    %1542 = vmatprep.subr.mxu0 %v359
    %1543 = vmatpush1.msra.mxu0 %v358
    %1544 = vmatprep.subr.mxu0 0.0
    %1545 = vmatpush2.msra.mxu0 0.0
    %1546 = vmatprep.subr.mxu0 0.0
    %1547 = vmatpush2.msra.mxu0 0.0
    %1548 = vmatprep.subr.mxu0 0.0
    %1549 = vmatpush2.msra.mxu0 0.0
    %1550 = vmatprep.subr.mxu0 0.0
    %1551 = vmatpush2.msra.mxu0 0.0
    %1552 = vmatprep.subr.mxu0 0.0
    %1553 = vmatpush2.msra.mxu0 0.0
    %1554 = vmatprep.subr.mxu0 0.0
    %1555 = vmatpush2.msra.mxu0 0.0
    %1556 = vmatprep.subr.mxu0 0.0
    %1557 = vmatpush2.msra.mxu0 0.0
    %1558 = vmatprep.subr.mxu0 0.0
    %1559 = vmatpush2.msra.mxu0 0.0
    %1560 = vmatprep.subr.mxu0 0.0
    %1561 = vmatpush2.msra.mxu0 0.0
    %1562 = vmatprep.subr.mxu0 0.0
    %1563 = vmatpush2.msra.mxu0 0.0
    %1564 = vmatprep.subr.mxu0 0.0
    %1565 = vmatpush2.msra.mxu0 0.0
    %1566 = vmatprep.subr.mxu0 0.0
    %1567 = vmatpush2.msra.mxu0 0.0
    %1568 = vmatprep.subr.mxu0 0.0
    %1569 = vmatpush2.msra.mxu0 0.0
    %1570 = vmatprep.subr.mxu0 0.0
    %1571 = vmatpush2.msra.mxu0 0.0
    %1572 = vmatprep.subr.mxu0 0.0
    %1573 = vmatpush2.msra.mxu0 0.0
    %1574 = vmatprep.subr.mxu0 0.0
    %1575 = vmatpush2.msra.mxu0 0.0
    %1576 = vmatprep.mubr.f32.mxu0 0.0
    %1577 = vmatmul.mubr.f32.gmra.mxu0 %v1205
    %v1578 = vpop.f32.mrf.mxu0
    %v1579 = vadd.f32 0.0, %v1578
    %v1580 = vpop.f32.mrf.mxu0
    %v1581 = vadd.f32 0.0, %v1580
    %1582 = vdwg.mxu0
    %1583 = vmatprep.subr.mxu0 %v421
    %1584 = vmatpush1.msra.mxu0 %v420
    %1585 = vmatprep.subr.mxu0 %v417
    %1586 = vmatpush1.msra.mxu0 %v416
    %1587 = vmatprep.subr.mxu0 %v413
    %1588 = vmatpush1.msra.mxu0 %v412
    %1589 = vmatprep.subr.mxu0 %v409
    %1590 = vmatpush1.msra.mxu0 %v408
    %1591 = vmatprep.subr.mxu0 %v405
    %1592 = vmatpush1.msra.mxu0 %v404
    %1593 = vmatprep.subr.mxu0 %v401
    %1594 = vmatpush1.msra.mxu0 %v400
    %1595 = vmatprep.subr.mxu0 %v397
    %1596 = vmatpush1.msra.mxu0 %v396
    %1597 = vmatprep.subr.mxu0 %v393
    %1598 = vmatpush1.msra.mxu0 %v392
    %1599 = vmatprep.subr.mxu0 %v389
    %1600 = vmatpush1.msra.mxu0 %v388
    %1601 = vmatprep.subr.mxu0 %v385
    %1602 = vmatpush1.msra.mxu0 %v384
    %1603 = vmatprep.subr.mxu0 %v381
    %1604 = vmatpush1.msra.mxu0 %v380
    %1605 = vmatprep.subr.mxu0 %v377
    %1606 = vmatpush1.msra.mxu0 %v376
    %1607 = vmatprep.subr.mxu0 %v373
    %1608 = vmatpush1.msra.mxu0 %v372
    %1609 = vmatprep.subr.mxu0 %v369
    %1610 = vmatpush1.msra.mxu0 %v368
    %1611 = vmatprep.subr.mxu0 %v365
    %1612 = vmatpush1.msra.mxu0 %v364
    %1613 = vmatprep.subr.mxu0 %v361
    %1614 = vmatpush1.msra.mxu0 %v360
    %1615 = vmatprep.subr.mxu0 0.0
    %1616 = vmatpush2.msra.mxu0 0.0
    %1617 = vmatprep.subr.mxu0 0.0
    %1618 = vmatpush2.msra.mxu0 0.0
    %1619 = vmatprep.subr.mxu0 0.0
    %1620 = vmatpush2.msra.mxu0 0.0
    %1621 = vmatprep.subr.mxu0 0.0
    %1622 = vmatpush2.msra.mxu0 0.0
    %1623 = vmatprep.subr.mxu0 0.0
    %1624 = vmatpush2.msra.mxu0 0.0
    %1625 = vmatprep.subr.mxu0 0.0
    %1626 = vmatpush2.msra.mxu0 0.0
    %1627 = vmatprep.subr.mxu0 0.0
    %1628 = vmatpush2.msra.mxu0 0.0
    %1629 = vmatprep.subr.mxu0 0.0
    %1630 = vmatpush2.msra.mxu0 0.0
    %1631 = vmatprep.subr.mxu0 0.0
    %1632 = vmatpush2.msra.mxu0 0.0
    %1633 = vmatprep.subr.mxu0 0.0
    %1634 = vmatpush2.msra.mxu0 0.0
    %1635 = vmatprep.subr.mxu0 0.0
    %1636 = vmatpush2.msra.mxu0 0.0
    %1637 = vmatprep.subr.mxu0 0.0
    %1638 = vmatpush2.msra.mxu0 0.0
    %1639 = vmatprep.subr.mxu0 0.0
    %1640 = vmatpush2.msra.mxu0 0.0
    %1641 = vmatprep.subr.mxu0 0.0
    %1642 = vmatpush2.msra.mxu0 0.0
    %1643 = vmatprep.subr.mxu0 0.0
    %1644 = vmatpush2.msra.mxu0 0.0
    %1645 = vmatprep.subr.mxu0 0.0
    %1646 = vmatpush2.msra.mxu0 0.0
    %1647 = vmatprep.mubr.f32.mxu0 0.0
    %1648 = vmatmul.mubr.f32.gmra.mxu0 %v1205
    %v1649 = vpop.f32.mrf.mxu0
    %v1650 = vadd.f32 0.0, %v1649
    %v1651 = vpop.f32.mrf.mxu0
    %v1652 = vadd.f32 0.0, %v1651
    %1653 = vdwg.mxu0
    %v1654 = vadd.f32 %v211, %v1579
    %v1655 = vadd.f32 %v213, %v1581
    %v1656 = vadd.f32 %v324, %v1650
    %v1657 = vadd.f32 %v326, %v1652
    %v1658 = vmul.f32 %v1654, 0.5
    %v1659 = vtanh.pop %v1658
    %v1660 = vmul.f32 %v1659, 0.5
    %v1661 = vadd.f32 %v1660, 0.5
    %v1662 = vmul.f32 %v1655, 0.5
    %v1663 = vtanh.pop %v1662
    %v1664 = vmul.f32 %v1663, 0.5
    %v1665 = vadd.f32 %v1664, 0.5
    %v1666 = vtanh.pop %v1656
    %v1667 = vmul.f32 %v1657, 0.5
    %v1668 = vtanh.pop %v1667
    %v1669 = vmul.f32 %v1668, 0.5
    %v1670 = vadd.f32 %v1669, 0.5
    %v1671 = vmul.f32 %v1665, %v1203
    %v1672 = vmul.f32 %v1661, %v1666
    %v1673 = vadd.f32 %v1671, %v1672
    %v1674 = vtanh.pop %v1673
    %v1675 = vmul.f32 %v1670, %v1674
    %1676 = vmatprep.subr.mxu0 %v711
    %1677 = vmatpush1.msra.mxu0 %v710
    %1678 = vmatprep.subr.mxu0 %v707
    %1679 = vmatpush1.msra.mxu0 %v706
    %1680 = vmatprep.subr.mxu0 %v703
    %1681 = vmatpush1.msra.mxu0 %v702
    %1682 = vmatprep.subr.mxu0 %v699
    %1683 = vmatpush1.msra.mxu0 %v698
    %1684 = vmatprep.subr.mxu0 %v695
    %1685 = vmatpush1.msra.mxu0 %v694
    %1686 = vmatprep.subr.mxu0 %v691
    %1687 = vmatpush1.msra.mxu0 %v690
    %1688 = vmatprep.subr.mxu0 %v687
    %1689 = vmatpush1.msra.mxu0 %v686
    %1690 = vmatprep.subr.mxu0 %v683
    %1691 = vmatpush1.msra.mxu0 %v682
    %1692 = vmatprep.subr.mxu0 %v679
    %1693 = vmatpush1.msra.mxu0 %v678
    %1694 = vmatprep.subr.mxu0 %v675
    %1695 = vmatpush1.msra.mxu0 %v674
    %1696 = vmatprep.subr.mxu0 %v671
    %1697 = vmatpush1.msra.mxu0 %v670
    %1698 = vmatprep.subr.mxu0 %v667
    %1699 = vmatpush1.msra.mxu0 %v666
    %1700 = vmatprep.subr.mxu0 %v663
    %1701 = vmatpush1.msra.mxu0 %v662
    %1702 = vmatprep.subr.mxu0 %v659
    %1703 = vmatpush1.msra.mxu0 %v658
    %1704 = vmatprep.subr.mxu0 %v655
    %1705 = vmatpush1.msra.mxu0 %v654
    %1706 = vmatprep.subr.mxu0 %v651
    %1707 = vmatpush1.msra.mxu0 %v650
    %1708 = vmatprep.subr.mxu0 0.0
    %1709 = vmatpush2.msra.mxu0 0.0
    %1710 = vmatprep.subr.mxu0 0.0
    %1711 = vmatpush2.msra.mxu0 0.0
    %1712 = vmatprep.subr.mxu0 0.0
    %1713 = vmatpush2.msra.mxu0 0.0
    %1714 = vmatprep.subr.mxu0 0.0
    %1715 = vmatpush2.msra.mxu0 0.0
    %1716 = vmatprep.subr.mxu0 0.0
    %1717 = vmatpush2.msra.mxu0 0.0
    %1718 = vmatprep.subr.mxu0 0.0
    %1719 = vmatpush2.msra.mxu0 0.0
    %1720 = vmatprep.subr.mxu0 0.0
    %1721 = vmatpush2.msra.mxu0 0.0
    %1722 = vmatprep.subr.mxu0 0.0
    %1723 = vmatpush2.msra.mxu0 0.0
    %1724 = vmatprep.subr.mxu0 0.0
    %1725 = vmatpush2.msra.mxu0 0.0
    %1726 = vmatprep.subr.mxu0 0.0
    %1727 = vmatpush2.msra.mxu0 0.0
    %1728 = vmatprep.subr.mxu0 0.0
    %1729 = vmatpush2.msra.mxu0 0.0
    %1730 = vmatprep.subr.mxu0 0.0
    %1731 = vmatpush2.msra.mxu0 0.0
    %1732 = vmatprep.subr.mxu0 0.0
    %1733 = vmatpush2.msra.mxu0 0.0
    %1734 = vmatprep.subr.mxu0 0.0
    %1735 = vmatpush2.msra.mxu0 0.0
    %1736 = vmatprep.subr.mxu0 0.0
    %1737 = vmatpush2.msra.mxu0 0.0
    %1738 = vmatprep.subr.mxu0 0.0
    %1739 = vmatpush2.msra.mxu0 0.0
    %1740 = vmatprep.mubr.f32.mxu0 0.0
    %1741 = vmatmul.mubr.f32.gmra.mxu0 %v1511
    %v1742 = vpop.f32.mrf.mxu0
    %v1743 = vadd.f32 0.0, %v1742
    %v1744 = vpop.f32.mrf.mxu0
    %v1745 = vadd.f32 0.0, %v1744
    %1746 = vdwg.mxu0
    %1747 = vmatprep.subr.mxu0 %v713
    %1748 = vmatpush1.msra.mxu0 %v712
    %1749 = vmatprep.subr.mxu0 %v709
    %1750 = vmatpush1.msra.mxu0 %v708
    %1751 = vmatprep.subr.mxu0 %v705
    %1752 = vmatpush1.msra.mxu0 %v704
    %1753 = vmatprep.subr.mxu0 %v701
    %1754 = vmatpush1.msra.mxu0 %v700
    %1755 = vmatprep.subr.mxu0 %v697
    %1756 = vmatpush1.msra.mxu0 %v696
    %1757 = vmatprep.subr.mxu0 %v693
    %1758 = vmatpush1.msra.mxu0 %v692
    %1759 = vmatprep.subr.mxu0 %v689
    %1760 = vmatpush1.msra.mxu0 %v688
    %1761 = vmatprep.subr.mxu0 %v685
    %1762 = vmatpush1.msra.mxu0 %v684
    %1763 = vmatprep.subr.mxu0 %v681
    %1764 = vmatpush1.msra.mxu0 %v680
    %1765 = vmatprep.subr.mxu0 %v677
    %1766 = vmatpush1.msra.mxu0 %v676
    %1767 = vmatprep.subr.mxu0 %v673
    %1768 = vmatpush1.msra.mxu0 %v672
    %1769 = vmatprep.subr.mxu0 %v669
    %1770 = vmatpush1.msra.mxu0 %v668
    %1771 = vmatprep.subr.mxu0 %v665
    %1772 = vmatpush1.msra.mxu0 %v664
    %1773 = vmatprep.subr.mxu0 %v661
    %1774 = vmatpush1.msra.mxu0 %v660
    %1775 = vmatprep.subr.mxu0 %v657
    %1776 = vmatpush1.msra.mxu0 %v656
    %1777 = vmatprep.subr.mxu0 %v653
    %1778 = vmatpush1.msra.mxu0 %v652
    %1779 = vmatprep.subr.mxu0 0.0
    %1780 = vmatpush2.msra.mxu0 0.0
    %1781 = vmatprep.subr.mxu0 0.0
    %1782 = vmatpush2.msra.mxu0 0.0
    %1783 = vmatprep.subr.mxu0 0.0
    %1784 = vmatpush2.msra.mxu0 0.0
    %1785 = vmatprep.subr.mxu0 0.0
    %1786 = vmatpush2.msra.mxu0 0.0
    %1787 = vmatprep.subr.mxu0 0.0
    %1788 = vmatpush2.msra.mxu0 0.0
    %1789 = vmatprep.subr.mxu0 0.0
    %1790 = vmatpush2.msra.mxu0 0.0
    %1791 = vmatprep.subr.mxu0 0.0
    %1792 = vmatpush2.msra.mxu0 0.0
    %1793 = vmatprep.subr.mxu0 0.0
    %1794 = vmatpush2.msra.mxu0 0.0
    %1795 = vmatprep.subr.mxu0 0.0
    %1796 = vmatpush2.msra.mxu0 0.0
    %1797 = vmatprep.subr.mxu0 0.0
    %1798 = vmatpush2.msra.mxu0 0.0
    %1799 = vmatprep.subr.mxu0 0.0
    %1800 = vmatpush2.msra.mxu0 0.0
    %1801 = vmatprep.subr.mxu0 0.0
    %1802 = vmatpush2.msra.mxu0 0.0
    %1803 = vmatprep.subr.mxu0 0.0
    %1804 = vmatpush2.msra.mxu0 0.0
    %1805 = vmatprep.subr.mxu0 0.0
    %1806 = vmatpush2.msra.mxu0 0.0
    %1807 = vmatprep.subr.mxu0 0.0
    %1808 = vmatpush2.msra.mxu0 0.0
    %1809 = vmatprep.subr.mxu0 0.0
    %1810 = vmatpush2.msra.mxu0 0.0
    %1811 = vmatprep.mubr.f32.mxu0 0.0
    %1812 = vmatmul.mubr.f32.gmra.mxu0 %v1511
    %v1813 = vpop.f32.mrf.mxu0
    %v1814 = vadd.f32 0.0, %v1813
    %v1815 = vpop.f32.mrf.mxu0
    %v1816 = vadd.f32 0.0, %v1815
    %1817 = vdwg.mxu0
    %1818 = vmatprep.subr.mxu0 %v647
    %1819 = vmatpush1.msra.mxu0 %v646
    %1820 = vmatprep.subr.mxu0 %v643
    %1821 = vmatpush1.msra.mxu0 %v642
    %1822 = vmatprep.subr.mxu0 %v639
    %1823 = vmatpush1.msra.mxu0 %v638
    %1824 = vmatprep.subr.mxu0 %v635
    %1825 = vmatpush1.msra.mxu0 %v634
    %1826 = vmatprep.subr.mxu0 %v631
    %1827 = vmatpush1.msra.mxu0 %v630
    %1828 = vmatprep.subr.mxu0 %v627
    %1829 = vmatpush1.msra.mxu0 %v626
    %1830 = vmatprep.subr.mxu0 %v623
    %1831 = vmatpush1.msra.mxu0 %v622
    %1832 = vmatprep.subr.mxu0 %v619
    %1833 = vmatpush1.msra.mxu0 %v618
    %1834 = vmatprep.subr.mxu0 %v615
    %1835 = vmatpush1.msra.mxu0 %v614
    %1836 = vmatprep.subr.mxu0 %v611
    %1837 = vmatpush1.msra.mxu0 %v610
    %1838 = vmatprep.subr.mxu0 %v607
    %1839 = vmatpush1.msra.mxu0 %v606
    %1840 = vmatprep.subr.mxu0 %v603
    %1841 = vmatpush1.msra.mxu0 %v602
    %1842 = vmatprep.subr.mxu0 %v599
    %1843 = vmatpush1.msra.mxu0 %v598
    %1844 = vmatprep.subr.mxu0 %v595
    %1845 = vmatpush1.msra.mxu0 %v594
    %1846 = vmatprep.subr.mxu0 %v591
    %1847 = vmatpush1.msra.mxu0 %v590
    %1848 = vmatprep.subr.mxu0 %v587
    %1849 = vmatpush1.msra.mxu0 %v586
    %1850 = vmatprep.subr.mxu0 0.0
    %1851 = vmatpush2.msra.mxu0 0.0
    %1852 = vmatprep.subr.mxu0 0.0
    %1853 = vmatpush2.msra.mxu0 0.0
    %1854 = vmatprep.subr.mxu0 0.0
    %1855 = vmatpush2.msra.mxu0 0.0
    %1856 = vmatprep.subr.mxu0 0.0
    %1857 = vmatpush2.msra.mxu0 0.0
    %1858 = vmatprep.subr.mxu0 0.0
    %1859 = vmatpush2.msra.mxu0 0.0
    %1860 = vmatprep.subr.mxu0 0.0
    %1861 = vmatpush2.msra.mxu0 0.0
    %1862 = vmatprep.subr.mxu0 0.0
    %1863 = vmatpush2.msra.mxu0 0.0
    %1864 = vmatprep.subr.mxu0 0.0
    %1865 = vmatpush2.msra.mxu0 0.0
    %1866 = vmatprep.subr.mxu0 0.0
    %1867 = vmatpush2.msra.mxu0 0.0
    %1868 = vmatprep.subr.mxu0 0.0
    %1869 = vmatpush2.msra.mxu0 0.0
    %1870 = vmatprep.subr.mxu0 0.0
    %1871 = vmatpush2.msra.mxu0 0.0
    %1872 = vmatprep.subr.mxu0 0.0
    %1873 = vmatpush2.msra.mxu0 0.0
    %1874 = vmatprep.subr.mxu0 0.0
    %1875 = vmatpush2.msra.mxu0 0.0
    %1876 = vmatprep.subr.mxu0 0.0
    %1877 = vmatpush2.msra.mxu0 0.0
    %1878 = vmatprep.subr.mxu0 0.0
    %1879 = vmatpush2.msra.mxu0 0.0
    %1880 = vmatprep.subr.mxu0 0.0
    %1881 = vmatpush2.msra.mxu0 0.0
    %1882 = vmatprep.mubr.f32.mxu0 0.0
    %1883 = vmatmul.mubr.f32.gmra.mxu0 %v1675
    %v1884 = vpop.f32.mrf.mxu0
    %v1885 = vadd.f32 %v1743, %v1884
    %v1886 = vpop.f32.mrf.mxu0
    %v1887 = vadd.f32 %v1745, %v1886
    %1888 = vdwg.mxu0
    %1889 = vmatprep.subr.mxu0 %v649
    %1890 = vmatpush1.msra.mxu0 %v648
    %1891 = vmatprep.subr.mxu0 %v645
    %1892 = vmatpush1.msra.mxu0 %v644
    %1893 = vmatprep.subr.mxu0 %v641
    %1894 = vmatpush1.msra.mxu0 %v640
    %1895 = vmatprep.subr.mxu0 %v637
    %1896 = vmatpush1.msra.mxu0 %v636
    %1897 = vmatprep.subr.mxu0 %v633
    %1898 = vmatpush1.msra.mxu0 %v632
    %1899 = vmatprep.subr.mxu0 %v629
    %1900 = vmatpush1.msra.mxu0 %v628
    %1901 = vmatprep.subr.mxu0 %v625
    %1902 = vmatpush1.msra.mxu0 %v624
    %1903 = vmatprep.subr.mxu0 %v621
    %1904 = vmatpush1.msra.mxu0 %v620
    %1905 = vmatprep.subr.mxu0 %v617
    %1906 = vmatpush1.msra.mxu0 %v616
    %1907 = vmatprep.subr.mxu0 %v613
    %1908 = vmatpush1.msra.mxu0 %v612
    %1909 = vmatprep.subr.mxu0 %v609
    %1910 = vmatpush1.msra.mxu0 %v608
    %1911 = vmatprep.subr.mxu0 %v605
    %1912 = vmatpush1.msra.mxu0 %v604
    %1913 = vmatprep.subr.mxu0 %v601
    %1914 = vmatpush1.msra.mxu0 %v600
    %1915 = vmatprep.subr.mxu0 %v597
    %1916 = vmatpush1.msra.mxu0 %v596
    %1917 = vmatprep.subr.mxu0 %v593
    %1918 = vmatpush1.msra.mxu0 %v592
    %1919 = vmatprep.subr.mxu0 %v589
    %1920 = vmatpush1.msra.mxu0 %v588
    %1921 = vmatprep.subr.mxu0 0.0
    %1922 = vmatpush2.msra.mxu0 0.0
    %1923 = vmatprep.subr.mxu0 0.0
    %1924 = vmatpush2.msra.mxu0 0.0
    %1925 = vmatprep.subr.mxu0 0.0
    %1926 = vmatpush2.msra.mxu0 0.0
    %1927 = vmatprep.subr.mxu0 0.0
    %1928 = vmatpush2.msra.mxu0 0.0
    %1929 = vmatprep.subr.mxu0 0.0
    %1930 = vmatpush2.msra.mxu0 0.0
    %1931 = vmatprep.subr.mxu0 0.0
    %1932 = vmatpush2.msra.mxu0 0.0
    %1933 = vmatprep.subr.mxu0 0.0
    %1934 = vmatpush2.msra.mxu0 0.0
    %1935 = vmatprep.subr.mxu0 0.0
    %1936 = vmatpush2.msra.mxu0 0.0
    %1937 = vmatprep.subr.mxu0 0.0
    %1938 = vmatpush2.msra.mxu0 0.0
    %1939 = vmatprep.subr.mxu0 0.0
    %1940 = vmatpush2.msra.mxu0 0.0
    %1941 = vmatprep.subr.mxu0 0.0
    %1942 = vmatpush2.msra.mxu0 0.0
    %1943 = vmatprep.subr.mxu0 0.0
    %1944 = vmatpush2.msra.mxu0 0.0
    %1945 = vmatprep.subr.mxu0 0.0
    %1946 = vmatpush2.msra.mxu0 0.0
    %1947 = vmatprep.subr.mxu0 0.0
    %1948 = vmatpush2.msra.mxu0 0.0
    %1949 = vmatprep.subr.mxu0 0.0
    %1950 = vmatpush2.msra.mxu0 0.0
    %1951 = vmatprep.subr.mxu0 0.0
    %1952 = vmatpush2.msra.mxu0 0.0
    %1953 = vmatprep.mubr.f32.mxu0 0.0
    %1954 = vmatmul.mubr.f32.gmra.mxu0 %v1675
    %v1955 = vpop.f32.mrf.mxu0
    %v1956 = vadd.f32 %v1814, %v1955
    %v1957 = vpop.f32.mrf.mxu0
    %v1958 = vadd.f32 %v1816, %v1957
    %1959 = vdwg.mxu0
    %v1960 = vadd.f32 %v1885, %v1003
    %v1961 = vadd.f32 %v1887, %v1007
    %v1962 = vadd.f32 %v1956, %v1011
    %v1963 = vadd.f32 %v1958, %v1015
    %v1964 = vmul.f32 %v1960, 0.5
    %v1965 = vtanh.pop %v1964
    %v1966 = vmul.f32 %v1965, 0.5
    %v1967 = vadd.f32 %v1966, 0.5
    %v1968 = vmul.f32 %v1961, 0.5
    %v1969 = vtanh.pop %v1968
    %v1970 = vmul.f32 %v1969, 0.5
    %v1971 = vadd.f32 %v1970, 0.5
    %v1972 = vtanh.pop %v1962
    %v1973 = vmul.f32 %v1963, 0.5
    %v1974 = vtanh.pop %v1973
    %v1975 = vmul.f32 %v1974, 0.5
    %v1976 = vadd.f32 %v1975, 0.5
    %v1977 = vmul.f32 %v1971, %v1509
    %v1978 = vmul.f32 %v1967, %v1972
    %v1979 = vadd.f32 %v1977, %v1978
    %v1980 = vtanh.pop %v1979
    %v1981 = vmul.f32 %v1976, %v1980
    %1982 = vmatprep.subr.mxu0 %v419
    %1983 = vmatpush1.msra.mxu0 %v418
    %1984 = vmatprep.subr.mxu0 %v415
    %1985 = vmatpush1.msra.mxu0 %v414
    %1986 = vmatprep.subr.mxu0 %v411
    %1987 = vmatpush1.msra.mxu0 %v410
    %1988 = vmatprep.subr.mxu0 %v407
    %1989 = vmatpush1.msra.mxu0 %v406
    %1990 = vmatprep.subr.mxu0 %v403
    %1991 = vmatpush1.msra.mxu0 %v402
    %1992 = vmatprep.subr.mxu0 %v399
    %1993 = vmatpush1.msra.mxu0 %v398
    %1994 = vmatprep.subr.mxu0 %v395
    %1995 = vmatpush1.msra.mxu0 %v394
    %1996 = vmatprep.subr.mxu0 %v391
    %1997 = vmatpush1.msra.mxu0 %v390
    %1998 = vmatprep.subr.mxu0 %v387
    %1999 = vmatpush1.msra.mxu0 %v386
    %2000 = vmatprep.subr.mxu0 %v383
    %2001 = vmatpush1.msra.mxu0 %v382
    %2002 = vmatprep.subr.mxu0 %v379
    %2003 = vmatpush1.msra.mxu0 %v378
    %2004 = vmatprep.subr.mxu0 %v375
    %2005 = vmatpush1.msra.mxu0 %v374
    %2006 = vmatprep.subr.mxu0 %v371
    %2007 = vmatpush1.msra.mxu0 %v370
    %2008 = vmatprep.subr.mxu0 %v367
    %2009 = vmatpush1.msra.mxu0 %v366
    %2010 = vmatprep.subr.mxu0 %v363
    %2011 = vmatpush1.msra.mxu0 %v362
    %2012 = vmatprep.subr.mxu0 %v359
    %2013 = vmatpush1.msra.mxu0 %v358
    %2014 = vmatprep.subr.mxu0 0.0
    %2015 = vmatpush2.msra.mxu0 0.0
    %2016 = vmatprep.subr.mxu0 0.0
    %2017 = vmatpush2.msra.mxu0 0.0
    %2018 = vmatprep.subr.mxu0 0.0
    %2019 = vmatpush2.msra.mxu0 0.0
    %2020 = vmatprep.subr.mxu0 0.0
    %2021 = vmatpush2.msra.mxu0 0.0
    %2022 = vmatprep.subr.mxu0 0.0
    %2023 = vmatpush2.msra.mxu0 0.0
    %2024 = vmatprep.subr.mxu0 0.0
    %2025 = vmatpush2.msra.mxu0 0.0
    %2026 = vmatprep.subr.mxu0 0.0
    %2027 = vmatpush2.msra.mxu0 0.0
    %2028 = vmatprep.subr.mxu0 0.0
    %2029 = vmatpush2.msra.mxu0 0.0
    %2030 = vmatprep.subr.mxu0 0.0
    %2031 = vmatpush2.msra.mxu0 0.0
    %2032 = vmatprep.subr.mxu0 0.0
    %2033 = vmatpush2.msra.mxu0 0.0
    %2034 = vmatprep.subr.mxu0 0.0
    %2035 = vmatpush2.msra.mxu0 0.0
    %2036 = vmatprep.subr.mxu0 0.0
    %2037 = vmatpush2.msra.mxu0 0.0
    %2038 = vmatprep.subr.mxu0 0.0
    %2039 = vmatpush2.msra.mxu0 0.0
    %2040 = vmatprep.subr.mxu0 0.0
    %2041 = vmatpush2.msra.mxu0 0.0
    %2042 = vmatprep.subr.mxu0 0.0
    %2043 = vmatpush2.msra.mxu0 0.0
    %2044 = vmatprep.subr.mxu0 0.0
    %2045 = vmatpush2.msra.mxu0 0.0
    %2046 = vmatprep.mubr.f32.mxu0 0.0
    %2047 = vmatmul.mubr.f32.gmra.mxu0 %v1675
    %v2048 = vpop.f32.mrf.mxu0
    %v2049 = vadd.f32 0.0, %v2048
    %v2050 = vpop.f32.mrf.mxu0
    %v2051 = vadd.f32 0.0, %v2050
    %2052 = vdwg.mxu0
    %2053 = vmatprep.subr.mxu0 %v421
    %2054 = vmatpush1.msra.mxu0 %v420
    %2055 = vmatprep.subr.mxu0 %v417
    %2056 = vmatpush1.msra.mxu0 %v416
    %2057 = vmatprep.subr.mxu0 %v413
    %2058 = vmatpush1.msra.mxu0 %v412
    %2059 = vmatprep.subr.mxu0 %v409
    %2060 = vmatpush1.msra.mxu0 %v408
    %2061 = vmatprep.subr.mxu0 %v405
    %2062 = vmatpush1.msra.mxu0 %v404
    %2063 = vmatprep.subr.mxu0 %v401
    %2064 = vmatpush1.msra.mxu0 %v400
    %2065 = vmatprep.subr.mxu0 %v397
    %2066 = vmatpush1.msra.mxu0 %v396
    %2067 = vmatprep.subr.mxu0 %v393
    %2068 = vmatpush1.msra.mxu0 %v392
    %2069 = vmatprep.subr.mxu0 %v389
    %2070 = vmatpush1.msra.mxu0 %v388
    %2071 = vmatprep.subr.mxu0 %v385
    %2072 = vmatpush1.msra.mxu0 %v384
    %2073 = vmatprep.subr.mxu0 %v381
    %2074 = vmatpush1.msra.mxu0 %v380
    %2075 = vmatprep.subr.mxu0 %v377
    %2076 = vmatpush1.msra.mxu0 %v376
    %2077 = vmatprep.subr.mxu0 %v373
    %2078 = vmatpush1.msra.mxu0 %v372
    %2079 = vmatprep.subr.mxu0 %v369
    %2080 = vmatpush1.msra.mxu0 %v368
    %2081 = vmatprep.subr.mxu0 %v365
    %2082 = vmatpush1.msra.mxu0 %v364
    %2083 = vmatprep.subr.mxu0 %v361
    %2084 = vmatpush1.msra.mxu0 %v360
    %2085 = vmatprep.subr.mxu0 0.0
    %2086 = vmatpush2.msra.mxu0 0.0
    %2087 = vmatprep.subr.mxu0 0.0
    %2088 = vmatpush2.msra.mxu0 0.0
    %2089 = vmatprep.subr.mxu0 0.0
    %2090 = vmatpush2.msra.mxu0 0.0
    %2091 = vmatprep.subr.mxu0 0.0
    %2092 = vmatpush2.msra.mxu0 0.0
    %2093 = vmatprep.subr.mxu0 0.0
    %2094 = vmatpush2.msra.mxu0 0.0
    %2095 = vmatprep.subr.mxu0 0.0
    %2096 = vmatpush2.msra.mxu0 0.0
    %2097 = vmatprep.subr.mxu0 0.0
    %2098 = vmatpush2.msra.mxu0 0.0
    %2099 = vmatprep.subr.mxu0 0.0
    %2100 = vmatpush2.msra.mxu0 0.0
    %2101 = vmatprep.subr.mxu0 0.0
    %2102 = vmatpush2.msra.mxu0 0.0
    %2103 = vmatprep.subr.mxu0 0.0
    %2104 = vmatpush2.msra.mxu0 0.0
    %2105 = vmatprep.subr.mxu0 0.0
    %2106 = vmatpush2.msra.mxu0 0.0
    %2107 = vmatprep.subr.mxu0 0.0
    %2108 = vmatpush2.msra.mxu0 0.0
    %2109 = vmatprep.subr.mxu0 0.0
    %2110 = vmatpush2.msra.mxu0 0.0
    %2111 = vmatprep.subr.mxu0 0.0
    %2112 = vmatpush2.msra.mxu0 0.0
    %2113 = vmatprep.subr.mxu0 0.0
    %2114 = vmatpush2.msra.mxu0 0.0
    %2115 = vmatprep.subr.mxu0 0.0
    %2116 = vmatpush2.msra.mxu0 0.0
    %2117 = vmatprep.mubr.f32.mxu0 0.0
    %2118 = vmatmul.mubr.f32.gmra.mxu0 %v1675
    %v2119 = vpop.f32.mrf.mxu0
    %v2120 = vadd.f32 0.0, %v2119
    %v2121 = vpop.f32.mrf.mxu0
    %v2122 = vadd.f32 0.0, %v2121
    %2123 = vdwg.mxu0
    %v2124 = vadd.f32 %v217, %v2049
    %v2125 = vadd.f32 %v219, %v2051
    %v2126 = vadd.f32 %v330, %v2120
    %v2127 = vadd.f32 %v332, %v2122
    %v2128 = vmul.f32 %v2124, 0.5
    %v2129 = vtanh.pop %v2128
    %v2130 = vmul.f32 %v2129, 0.5
    %v2131 = vadd.f32 %v2130, 0.5
    %v2132 = vmul.f32 %v2125, 0.5
    %v2133 = vtanh.pop %v2132
    %v2134 = vmul.f32 %v2133, 0.5
    %v2135 = vadd.f32 %v2134, 0.5
    %v2136 = vtanh.pop %v2126
    %v2137 = vmul.f32 %v2127, 0.5
    %v2138 = vtanh.pop %v2137
    %v2139 = vmul.f32 %v2138, 0.5
    %v2140 = vadd.f32 %v2139, 0.5
    %v2141 = vmul.f32 %v2135, %v1673
    %v2142 = vmul.f32 %v2131, %v2136
    %v2143 = vadd.f32 %v2141, %v2142
    %v2144 = vtanh.pop %v2143
    %v2145 = vmul.f32 %v2140, %v2144
    %2146 = vmatprep.subr.mxu0 %v711
    %2147 = vmatpush1.msra.mxu0 %v710
    %2148 = vmatprep.subr.mxu0 %v707
    %2149 = vmatpush1.msra.mxu0 %v706
    %2150 = vmatprep.subr.mxu0 %v703
    %2151 = vmatpush1.msra.mxu0 %v702
    %2152 = vmatprep.subr.mxu0 %v699
    %2153 = vmatpush1.msra.mxu0 %v698
    %2154 = vmatprep.subr.mxu0 %v695
    %2155 = vmatpush1.msra.mxu0 %v694
    %2156 = vmatprep.subr.mxu0 %v691
    %2157 = vmatpush1.msra.mxu0 %v690
    %2158 = vmatprep.subr.mxu0 %v687
    %2159 = vmatpush1.msra.mxu0 %v686
    %2160 = vmatprep.subr.mxu0 %v683
    %2161 = vmatpush1.msra.mxu0 %v682
    %2162 = vmatprep.subr.mxu0 %v679
    %2163 = vmatpush1.msra.mxu0 %v678
    %2164 = vmatprep.subr.mxu0 %v675
    %2165 = vmatpush1.msra.mxu0 %v674
    %2166 = vmatprep.subr.mxu0 %v671
    %2167 = vmatpush1.msra.mxu0 %v670
    %2168 = vmatprep.subr.mxu0 %v667
    %2169 = vmatpush1.msra.mxu0 %v666
    %2170 = vmatprep.subr.mxu0 %v663
    %2171 = vmatpush1.msra.mxu0 %v662
    %2172 = vmatprep.subr.mxu0 %v659
    %2173 = vmatpush1.msra.mxu0 %v658
    %2174 = vmatprep.subr.mxu0 %v655
    %2175 = vmatpush1.msra.mxu0 %v654
    %2176 = vmatprep.subr.mxu0 %v651
    %2177 = vmatpush1.msra.mxu0 %v650
    %2178 = vmatprep.subr.mxu0 0.0
    %2179 = vmatpush2.msra.mxu0 0.0
    %2180 = vmatprep.subr.mxu0 0.0
    %2181 = vmatpush2.msra.mxu0 0.0
    %2182 = vmatprep.subr.mxu0 0.0
    %2183 = vmatpush2.msra.mxu0 0.0
    %2184 = vmatprep.subr.mxu0 0.0
    %2185 = vmatpush2.msra.mxu0 0.0
    %2186 = vmatprep.subr.mxu0 0.0
    %2187 = vmatpush2.msra.mxu0 0.0
    %2188 = vmatprep.subr.mxu0 0.0
    %2189 = vmatpush2.msra.mxu0 0.0
    %2190 = vmatprep.subr.mxu0 0.0
    %2191 = vmatpush2.msra.mxu0 0.0
    %2192 = vmatprep.subr.mxu0 0.0
    %2193 = vmatpush2.msra.mxu0 0.0
    %2194 = vmatprep.subr.mxu0 0.0
    %2195 = vmatpush2.msra.mxu0 0.0
    %2196 = vmatprep.subr.mxu0 0.0
    %2197 = vmatpush2.msra.mxu0 0.0
    %2198 = vmatprep.subr.mxu0 0.0
    %2199 = vmatpush2.msra.mxu0 0.0
    %2200 = vmatprep.subr.mxu0 0.0
    %2201 = vmatpush2.msra.mxu0 0.0
    %2202 = vmatprep.subr.mxu0 0.0
    %2203 = vmatpush2.msra.mxu0 0.0
    %2204 = vmatprep.subr.mxu0 0.0
    %2205 = vmatpush2.msra.mxu0 0.0
    %2206 = vmatprep.subr.mxu0 0.0
    %2207 = vmatpush2.msra.mxu0 0.0
    %2208 = vmatprep.subr.mxu0 0.0
    %2209 = vmatpush2.msra.mxu0 0.0
    %2210 = vmatprep.mubr.f32.mxu0 0.0
    %2211 = vmatmul.mubr.f32.gmra.mxu0 %v1981
    %v2212 = vpop.f32.mrf.mxu0
    %v2213 = vadd.f32 0.0, %v2212
    %v2214 = vpop.f32.mrf.mxu0
    %v2215 = vadd.f32 0.0, %v2214
    %2216 = vdwg.mxu0
    %2217 = vmatprep.subr.mxu0 %v713
    %2218 = vmatpush1.msra.mxu0 %v712
    %2219 = vmatprep.subr.mxu0 %v709
    %2220 = vmatpush1.msra.mxu0 %v708
    %2221 = vmatprep.subr.mxu0 %v705
    %2222 = vmatpush1.msra.mxu0 %v704
    %2223 = vmatprep.subr.mxu0 %v701
    %2224 = vmatpush1.msra.mxu0 %v700
    %2225 = vmatprep.subr.mxu0 %v697
    %2226 = vmatpush1.msra.mxu0 %v696
    %2227 = vmatprep.subr.mxu0 %v693
    %2228 = vmatpush1.msra.mxu0 %v692
    %2229 = vmatprep.subr.mxu0 %v689
    %2230 = vmatpush1.msra.mxu0 %v688
    %2231 = vmatprep.subr.mxu0 %v685
    %2232 = vmatpush1.msra.mxu0 %v684
    %2233 = vmatprep.subr.mxu0 %v681
    %2234 = vmatpush1.msra.mxu0 %v680
    %2235 = vmatprep.subr.mxu0 %v677
    %2236 = vmatpush1.msra.mxu0 %v676
    %2237 = vmatprep.subr.mxu0 %v673
    %2238 = vmatpush1.msra.mxu0 %v672
    %2239 = vmatprep.subr.mxu0 %v669
    %2240 = vmatpush1.msra.mxu0 %v668
    %2241 = vmatprep.subr.mxu0 %v665
    %2242 = vmatpush1.msra.mxu0 %v664
    %2243 = vmatprep.subr.mxu0 %v661
    %2244 = vmatpush1.msra.mxu0 %v660
    %2245 = vmatprep.subr.mxu0 %v657
    %2246 = vmatpush1.msra.mxu0 %v656
    %2247 = vmatprep.subr.mxu0 %v653
    %2248 = vmatpush1.msra.mxu0 %v652
    %2249 = vmatprep.subr.mxu0 0.0
    %2250 = vmatpush2.msra.mxu0 0.0
    %2251 = vmatprep.subr.mxu0 0.0
    %2252 = vmatpush2.msra.mxu0 0.0
    %2253 = vmatprep.subr.mxu0 0.0
    %2254 = vmatpush2.msra.mxu0 0.0
    %2255 = vmatprep.subr.mxu0 0.0
    %2256 = vmatpush2.msra.mxu0 0.0
    %2257 = vmatprep.subr.mxu0 0.0
    %2258 = vmatpush2.msra.mxu0 0.0
    %2259 = vmatprep.subr.mxu0 0.0
    %2260 = vmatpush2.msra.mxu0 0.0
    %2261 = vmatprep.subr.mxu0 0.0
    %2262 = vmatpush2.msra.mxu0 0.0
    %2263 = vmatprep.subr.mxu0 0.0
    %2264 = vmatpush2.msra.mxu0 0.0
    %2265 = vmatprep.subr.mxu0 0.0
    %2266 = vmatpush2.msra.mxu0 0.0
    %2267 = vmatprep.subr.mxu0 0.0
    %2268 = vmatpush2.msra.mxu0 0.0
    %2269 = vmatprep.subr.mxu0 0.0
    %2270 = vmatpush2.msra.mxu0 0.0
    %2271 = vmatprep.subr.mxu0 0.0
    %2272 = vmatpush2.msra.mxu0 0.0
    %2273 = vmatprep.subr.mxu0 0.0
    %2274 = vmatpush2.msra.mxu0 0.0
    %2275 = vmatprep.subr.mxu0 0.0
    %2276 = vmatpush2.msra.mxu0 0.0
    %2277 = vmatprep.subr.mxu0 0.0
    %2278 = vmatpush2.msra.mxu0 0.0
    %2279 = vmatprep.subr.mxu0 0.0
    %2280 = vmatpush2.msra.mxu0 0.0
    %2281 = vmatprep.mubr.f32.mxu0 0.0
    %2282 = vmatmul.mubr.f32.gmra.mxu0 %v1981
    %v2283 = vpop.f32.mrf.mxu0
    %v2284 = vadd.f32 0.0, %v2283
    %v2285 = vpop.f32.mrf.mxu0
    %v2286 = vadd.f32 0.0, %v2285
    %2287 = vdwg.mxu0
    %2288 = vmatprep.subr.mxu0 %v647
    %2289 = vmatpush1.msra.mxu0 %v646
    %2290 = vmatprep.subr.mxu0 %v643
    %2291 = vmatpush1.msra.mxu0 %v642
    %2292 = vmatprep.subr.mxu0 %v639
    %2293 = vmatpush1.msra.mxu0 %v638
    %2294 = vmatprep.subr.mxu0 %v635
    %2295 = vmatpush1.msra.mxu0 %v634
    %2296 = vmatprep.subr.mxu0 %v631
    %2297 = vmatpush1.msra.mxu0 %v630
    %2298 = vmatprep.subr.mxu0 %v627
    %2299 = vmatpush1.msra.mxu0 %v626
    %2300 = vmatprep.subr.mxu0 %v623
    %2301 = vmatpush1.msra.mxu0 %v622
    %2302 = vmatprep.subr.mxu0 %v619
    %2303 = vmatpush1.msra.mxu0 %v618
    %2304 = vmatprep.subr.mxu0 %v615
    %2305 = vmatpush1.msra.mxu0 %v614
    %2306 = vmatprep.subr.mxu0 %v611
    %2307 = vmatpush1.msra.mxu0 %v610
    %2308 = vmatprep.subr.mxu0 %v607
    %2309 = vmatpush1.msra.mxu0 %v606
    %2310 = vmatprep.subr.mxu0 %v603
    %2311 = vmatpush1.msra.mxu0 %v602
    %2312 = vmatprep.subr.mxu0 %v599
    %2313 = vmatpush1.msra.mxu0 %v598
    %2314 = vmatprep.subr.mxu0 %v595
    %2315 = vmatpush1.msra.mxu0 %v594
    %2316 = vmatprep.subr.mxu0 %v591
    %2317 = vmatpush1.msra.mxu0 %v590
    %2318 = vmatprep.subr.mxu0 %v587
    %2319 = vmatpush1.msra.mxu0 %v586
    %2320 = vmatprep.subr.mxu0 0.0
    %2321 = vmatpush2.msra.mxu0 0.0
    %2322 = vmatprep.subr.mxu0 0.0
    %2323 = vmatpush2.msra.mxu0 0.0
    %2324 = vmatprep.subr.mxu0 0.0
    %2325 = vmatpush2.msra.mxu0 0.0
    %2326 = vmatprep.subr.mxu0 0.0
    %2327 = vmatpush2.msra.mxu0 0.0
    %2328 = vmatprep.subr.mxu0 0.0
    %2329 = vmatpush2.msra.mxu0 0.0
    %2330 = vmatprep.subr.mxu0 0.0
    %2331 = vmatpush2.msra.mxu0 0.0
    %2332 = vmatprep.subr.mxu0 0.0
    %2333 = vmatpush2.msra.mxu0 0.0
    %2334 = vmatprep.subr.mxu0 0.0
    %2335 = vmatpush2.msra.mxu0 0.0
    %2336 = vmatprep.subr.mxu0 0.0
    %2337 = vmatpush2.msra.mxu0 0.0
    %2338 = vmatprep.subr.mxu0 0.0
    %2339 = vmatpush2.msra.mxu0 0.0
    %2340 = vmatprep.subr.mxu0 0.0
    %2341 = vmatpush2.msra.mxu0 0.0
    %2342 = vmatprep.subr.mxu0 0.0
    %2343 = vmatpush2.msra.mxu0 0.0
    %2344 = vmatprep.subr.mxu0 0.0
    %2345 = vmatpush2.msra.mxu0 0.0
    %2346 = vmatprep.subr.mxu0 0.0
    %2347 = vmatpush2.msra.mxu0 0.0
    %2348 = vmatprep.subr.mxu0 0.0
    %2349 = vmatpush2.msra.mxu0 0.0
    %2350 = vmatprep.subr.mxu0 0.0
    %2351 = vmatpush2.msra.mxu0 0.0
    %2352 = vmatprep.mubr.f32.mxu0 0.0
    %2353 = vmatmul.mubr.f32.gmra.mxu0 %v2145
    %v2354 = vpop.f32.mrf.mxu0
    %v2355 = vadd.f32 %v2213, %v2354
    %v2356 = vpop.f32.mrf.mxu0
    %v2357 = vadd.f32 %v2215, %v2356
    %2358 = vdwg.mxu0
    %2359 = vmatprep.subr.mxu0 %v649
    %2360 = vmatpush1.msra.mxu0 %v648
    %2361 = vmatprep.subr.mxu0 %v645
    %2362 = vmatpush1.msra.mxu0 %v644
    %2363 = vmatprep.subr.mxu0 %v641
    %2364 = vmatpush1.msra.mxu0 %v640
    %2365 = vmatprep.subr.mxu0 %v637
    %2366 = vmatpush1.msra.mxu0 %v636
    %2367 = vmatprep.subr.mxu0 %v633
    %2368 = vmatpush1.msra.mxu0 %v632
    %2369 = vmatprep.subr.mxu0 %v629
    %2370 = vmatpush1.msra.mxu0 %v628
    %2371 = vmatprep.subr.mxu0 %v625
    %2372 = vmatpush1.msra.mxu0 %v624
    %2373 = vmatprep.subr.mxu0 %v621
    %2374 = vmatpush1.msra.mxu0 %v620
    %2375 = vmatprep.subr.mxu0 %v617
    %2376 = vmatpush1.msra.mxu0 %v616
    %2377 = vmatprep.subr.mxu0 %v613
    %2378 = vmatpush1.msra.mxu0 %v612
    %2379 = vmatprep.subr.mxu0 %v609
    %2380 = vmatpush1.msra.mxu0 %v608
    %2381 = vmatprep.subr.mxu0 %v605
    %2382 = vmatpush1.msra.mxu0 %v604
    %2383 = vmatprep.subr.mxu0 %v601
    %2384 = vmatpush1.msra.mxu0 %v600
    %2385 = vmatprep.subr.mxu0 %v597
    %2386 = vmatpush1.msra.mxu0 %v596
    %2387 = vmatprep.subr.mxu0 %v593
    %2388 = vmatpush1.msra.mxu0 %v592
    %2389 = vmatprep.subr.mxu0 %v589
    %2390 = vmatpush1.msra.mxu0 %v588
    %2391 = vmatprep.subr.mxu0 0.0
    %2392 = vmatpush2.msra.mxu0 0.0
    %2393 = vmatprep.subr.mxu0 0.0
    %2394 = vmatpush2.msra.mxu0 0.0
    %2395 = vmatprep.subr.mxu0 0.0
    %2396 = vmatpush2.msra.mxu0 0.0
    %2397 = vmatprep.subr.mxu0 0.0
    %2398 = vmatpush2.msra.mxu0 0.0
    %2399 = vmatprep.subr.mxu0 0.0
    %2400 = vmatpush2.msra.mxu0 0.0
    %2401 = vmatprep.subr.mxu0 0.0
    %2402 = vmatpush2.msra.mxu0 0.0
    %2403 = vmatprep.subr.mxu0 0.0
    %2404 = vmatpush2.msra.mxu0 0.0
    %2405 = vmatprep.subr.mxu0 0.0
    %2406 = vmatpush2.msra.mxu0 0.0
    %2407 = vmatprep.subr.mxu0 0.0
    %2408 = vmatpush2.msra.mxu0 0.0
    %2409 = vmatprep.subr.mxu0 0.0
    %2410 = vmatpush2.msra.mxu0 0.0
    %2411 = vmatprep.subr.mxu0 0.0
    %2412 = vmatpush2.msra.mxu0 0.0
    %2413 = vmatprep.subr.mxu0 0.0
    %2414 = vmatpush2.msra.mxu0 0.0
    %2415 = vmatprep.subr.mxu0 0.0
    %2416 = vmatpush2.msra.mxu0 0.0
    %2417 = vmatprep.subr.mxu0 0.0
    %2418 = vmatpush2.msra.mxu0 0.0
    %2419 = vmatprep.subr.mxu0 0.0
    %2420 = vmatpush2.msra.mxu0 0.0
    %2421 = vmatprep.subr.mxu0 0.0
    %2422 = vmatpush2.msra.mxu0 0.0
    %2423 = vmatprep.mubr.f32.mxu0 0.0
    %2424 = vmatmul.mubr.f32.gmra.mxu0 %v2145
    %v2425 = vpop.f32.mrf.mxu0
    %v2426 = vadd.f32 %v2284, %v2425
    %v2427 = vpop.f32.mrf.mxu0
    %v2428 = vadd.f32 %v2286, %v2427
    %2429 = vdwg.mxu0
    %v2430 = vadd.f32 %v2355, %v1003
    %v2431 = vadd.f32 %v2357, %v1007
    %v2432 = vadd.f32 %v2426, %v1011
    %v2433 = vadd.f32 %v2428, %v1015
    %v2434 = vmul.f32 %v2430, 0.5
    %v2435 = vtanh.pop %v2434
    %v2436 = vmul.f32 %v2435, 0.5
    %v2437 = vadd.f32 %v2436, 0.5
    %v2438 = vmul.f32 %v2431, 0.5
    %v2439 = vtanh.pop %v2438
    %v2440 = vmul.f32 %v2439, 0.5
    %v2441 = vadd.f32 %v2440, 0.5
    %v2442 = vtanh.pop %v2432
    %v2443 = vmul.f32 %v2433, 0.5
    %v2444 = vtanh.pop %v2443
    %v2445 = vmul.f32 %v2444, 0.5
    %v2446 = vadd.f32 %v2445, 0.5
    %v2447 = vmul.f32 %v2441, %v1979
    %v2448 = vmul.f32 %v2437, %v2442
    %v2449 = vadd.f32 %v2447, %v2448
    %v2450 = vtanh.pop %v2449
    %v2451 = vmul.f32 %v2446, %v2450
    %2452 = vmatprep.subr.mxu0 %v419
    %2453 = vmatpush1.msra.mxu0 %v418
    %2454 = vmatprep.subr.mxu0 %v415
    %2455 = vmatpush1.msra.mxu0 %v414
    %2456 = vmatprep.subr.mxu0 %v411
    %2457 = vmatpush1.msra.mxu0 %v410
    %2458 = vmatprep.subr.mxu0 %v407
    %2459 = vmatpush1.msra.mxu0 %v406
    %2460 = vmatprep.subr.mxu0 %v403
    %2461 = vmatpush1.msra.mxu0 %v402
    %2462 = vmatprep.subr.mxu0 %v399
    %2463 = vmatpush1.msra.mxu0 %v398
    %2464 = vmatprep.subr.mxu0 %v395
    %2465 = vmatpush1.msra.mxu0 %v394
    %2466 = vmatprep.subr.mxu0 %v391
    %2467 = vmatpush1.msra.mxu0 %v390
    %2468 = vmatprep.subr.mxu0 %v387
    %2469 = vmatpush1.msra.mxu0 %v386
    %2470 = vmatprep.subr.mxu0 %v383
    %2471 = vmatpush1.msra.mxu0 %v382
    %2472 = vmatprep.subr.mxu0 %v379
    %2473 = vmatpush1.msra.mxu0 %v378
    %2474 = vmatprep.subr.mxu0 %v375
    %2475 = vmatpush1.msra.mxu0 %v374
    %2476 = vmatprep.subr.mxu0 %v371
    %2477 = vmatpush1.msra.mxu0 %v370
    %2478 = vmatprep.subr.mxu0 %v367
    %2479 = vmatpush1.msra.mxu0 %v366
    %2480 = vmatprep.subr.mxu0 %v363
    %2481 = vmatpush1.msra.mxu0 %v362
    %2482 = vmatprep.subr.mxu0 %v359
    %2483 = vmatpush1.msra.mxu0 %v358
    %2484 = vmatprep.subr.mxu0 0.0
    %2485 = vmatpush2.msra.mxu0 0.0
    %2486 = vmatprep.subr.mxu0 0.0
    %2487 = vmatpush2.msra.mxu0 0.0
    %2488 = vmatprep.subr.mxu0 0.0
    %2489 = vmatpush2.msra.mxu0 0.0
    %2490 = vmatprep.subr.mxu0 0.0
    %2491 = vmatpush2.msra.mxu0 0.0
    %2492 = vmatprep.subr.mxu0 0.0
    %2493 = vmatpush2.msra.mxu0 0.0
    %2494 = vmatprep.subr.mxu0 0.0
    %2495 = vmatpush2.msra.mxu0 0.0
    %2496 = vmatprep.subr.mxu0 0.0
    %2497 = vmatpush2.msra.mxu0 0.0
    %2498 = vmatprep.subr.mxu0 0.0
    %2499 = vmatpush2.msra.mxu0 0.0
    %2500 = vmatprep.subr.mxu0 0.0
    %2501 = vmatpush2.msra.mxu0 0.0
    %2502 = vmatprep.subr.mxu0 0.0
    %2503 = vmatpush2.msra.mxu0 0.0
    %2504 = vmatprep.subr.mxu0 0.0
    %2505 = vmatpush2.msra.mxu0 0.0
    %2506 = vmatprep.subr.mxu0 0.0
    %2507 = vmatpush2.msra.mxu0 0.0
    %2508 = vmatprep.subr.mxu0 0.0
    %2509 = vmatpush2.msra.mxu0 0.0
    %2510 = vmatprep.subr.mxu0 0.0
    %2511 = vmatpush2.msra.mxu0 0.0
    %2512 = vmatprep.subr.mxu0 0.0
    %2513 = vmatpush2.msra.mxu0 0.0
    %2514 = vmatprep.subr.mxu0 0.0
    %2515 = vmatpush2.msra.mxu0 0.0
    %2516 = vmatprep.mubr.f32.mxu0 0.0
    %2517 = vmatmul.mubr.f32.gmra.mxu0 %v2145
    %v2518 = vpop.f32.mrf.mxu0
    %v2519 = vadd.f32 0.0, %v2518
    %v2520 = vpop.f32.mrf.mxu0
    %v2521 = vadd.f32 0.0, %v2520
    %2522 = vdwg.mxu0
    %2523 = vmatprep.subr.mxu0 %v421
    %2524 = vmatpush1.msra.mxu0 %v420
    %2525 = vmatprep.subr.mxu0 %v417
    %2526 = vmatpush1.msra.mxu0 %v416
    %2527 = vmatprep.subr.mxu0 %v413
    %2528 = vmatpush1.msra.mxu0 %v412
    %2529 = vmatprep.subr.mxu0 %v409
    %2530 = vmatpush1.msra.mxu0 %v408
    %2531 = vmatprep.subr.mxu0 %v405
    %2532 = vmatpush1.msra.mxu0 %v404
    %2533 = vmatprep.subr.mxu0 %v401
    %2534 = vmatpush1.msra.mxu0 %v400
    %2535 = vmatprep.subr.mxu0 %v397
    %2536 = vmatpush1.msra.mxu0 %v396
    %2537 = vmatprep.subr.mxu0 %v393
    %2538 = vmatpush1.msra.mxu0 %v392
    %2539 = vmatprep.subr.mxu0 %v389
    %2540 = vmatpush1.msra.mxu0 %v388
    %2541 = vmatprep.subr.mxu0 %v385
    %2542 = vmatpush1.msra.mxu0 %v384
    %2543 = vmatprep.subr.mxu0 %v381
    %2544 = vmatpush1.msra.mxu0 %v380
    %2545 = vmatprep.subr.mxu0 %v377
    %2546 = vmatpush1.msra.mxu0 %v376
    %2547 = vmatprep.subr.mxu0 %v373
    %2548 = vmatpush1.msra.mxu0 %v372
    %2549 = vmatprep.subr.mxu0 %v369
    %2550 = vmatpush1.msra.mxu0 %v368
    %2551 = vmatprep.subr.mxu0 %v365
    %2552 = vmatpush1.msra.mxu0 %v364
    %2553 = vmatprep.subr.mxu0 %v361
    %2554 = vmatpush1.msra.mxu0 %v360
    %2555 = vmatprep.subr.mxu0 0.0
    %2556 = vmatpush2.msra.mxu0 0.0
    %2557 = vmatprep.subr.mxu0 0.0
    %2558 = vmatpush2.msra.mxu0 0.0
    %2559 = vmatprep.subr.mxu0 0.0
    %2560 = vmatpush2.msra.mxu0 0.0
    %2561 = vmatprep.subr.mxu0 0.0
    %2562 = vmatpush2.msra.mxu0 0.0
    %2563 = vmatprep.subr.mxu0 0.0
    %2564 = vmatpush2.msra.mxu0 0.0
    %2565 = vmatprep.subr.mxu0 0.0
    %2566 = vmatpush2.msra.mxu0 0.0
    %2567 = vmatprep.subr.mxu0 0.0
    %2568 = vmatpush2.msra.mxu0 0.0
    %2569 = vmatprep.subr.mxu0 0.0
    %2570 = vmatpush2.msra.mxu0 0.0
    %2571 = vmatprep.subr.mxu0 0.0
    %2572 = vmatpush2.msra.mxu0 0.0
    %2573 = vmatprep.subr.mxu0 0.0
    %2574 = vmatpush2.msra.mxu0 0.0
    %2575 = vmatprep.subr.mxu0 0.0
    %2576 = vmatpush2.msra.mxu0 0.0
    %2577 = vmatprep.subr.mxu0 0.0
    %2578 = vmatpush2.msra.mxu0 0.0
    %2579 = vmatprep.subr.mxu0 0.0
    %2580 = vmatpush2.msra.mxu0 0.0
    %2581 = vmatprep.subr.mxu0 0.0
    %2582 = vmatpush2.msra.mxu0 0.0
    %2583 = vmatprep.subr.mxu0 0.0
    %2584 = vmatpush2.msra.mxu0 0.0
    %2585 = vmatprep.subr.mxu0 0.0
    %2586 = vmatpush2.msra.mxu0 0.0
    %2587 = vmatprep.mubr.f32.mxu0 0.0
    %2588 = vmatmul.mubr.f32.gmra.mxu0 %v2145
    %v2589 = vpop.f32.mrf.mxu0
    %v2590 = vadd.f32 0.0, %v2589
    %v2591 = vpop.f32.mrf.mxu0
    %v2592 = vadd.f32 0.0, %v2591
    %2593 = vdwg.mxu0
    %v2594 = vadd.f32 %v223, %v2519
    %v2595 = vadd.f32 %v225, %v2521
    %v2596 = vadd.f32 %v336, %v2590
    %v2597 = vadd.f32 %v338, %v2592
    %v2598 = vmul.f32 %v2594, 0.5
    %v2599 = vtanh.pop %v2598
    %v2600 = vmul.f32 %v2599, 0.5
    %v2601 = vadd.f32 %v2600, 0.5
    %v2602 = vmul.f32 %v2595, 0.5
    %v2603 = vtanh.pop %v2602
    %v2604 = vmul.f32 %v2603, 0.5
    %v2605 = vadd.f32 %v2604, 0.5
    %v2606 = vtanh.pop %v2596
    %v2607 = vmul.f32 %v2597, 0.5
    %v2608 = vtanh.pop %v2607
    %v2609 = vmul.f32 %v2608, 0.5
    %v2610 = vadd.f32 %v2609, 0.5
    %v2611 = vmul.f32 %v2605, %v2143
    %v2612 = vmul.f32 %v2601, %v2606
    %v2613 = vadd.f32 %v2611, %v2612
    %v2614 = vtanh.pop %v2613
    %v2615 = vmul.f32 %v2610, %v2614
    %2616 = vmatprep.subr.mxu0 %v711
    %2617 = vmatpush1.msra.mxu0 %v710
    %2618 = vmatprep.subr.mxu0 %v707
    %2619 = vmatpush1.msra.mxu0 %v706
    %2620 = vmatprep.subr.mxu0 %v703
    %2621 = vmatpush1.msra.mxu0 %v702
    %2622 = vmatprep.subr.mxu0 %v699
    %2623 = vmatpush1.msra.mxu0 %v698
    %2624 = vmatprep.subr.mxu0 %v695
    %2625 = vmatpush1.msra.mxu0 %v694
    %2626 = vmatprep.subr.mxu0 %v691
    %2627 = vmatpush1.msra.mxu0 %v690
    %2628 = vmatprep.subr.mxu0 %v687
    %2629 = vmatpush1.msra.mxu0 %v686
    %2630 = vmatprep.subr.mxu0 %v683
    %2631 = vmatpush1.msra.mxu0 %v682
    %2632 = vmatprep.subr.mxu0 %v679
    %2633 = vmatpush1.msra.mxu0 %v678
    %2634 = vmatprep.subr.mxu0 %v675
    %2635 = vmatpush1.msra.mxu0 %v674
    %2636 = vmatprep.subr.mxu0 %v671
    %2637 = vmatpush1.msra.mxu0 %v670
    %2638 = vmatprep.subr.mxu0 %v667
    %2639 = vmatpush1.msra.mxu0 %v666
    %2640 = vmatprep.subr.mxu0 %v663
    %2641 = vmatpush1.msra.mxu0 %v662
    %2642 = vmatprep.subr.mxu0 %v659
    %2643 = vmatpush1.msra.mxu0 %v658
    %2644 = vmatprep.subr.mxu0 %v655
    %2645 = vmatpush1.msra.mxu0 %v654
    %2646 = vmatprep.subr.mxu0 %v651
    %2647 = vmatpush1.msra.mxu0 %v650
    %2648 = vmatprep.subr.mxu0 0.0
    %2649 = vmatpush2.msra.mxu0 0.0
    %2650 = vmatprep.subr.mxu0 0.0
    %2651 = vmatpush2.msra.mxu0 0.0
    %2652 = vmatprep.subr.mxu0 0.0
    %2653 = vmatpush2.msra.mxu0 0.0
    %2654 = vmatprep.subr.mxu0 0.0
    %2655 = vmatpush2.msra.mxu0 0.0
    %2656 = vmatprep.subr.mxu0 0.0
    %2657 = vmatpush2.msra.mxu0 0.0
    %2658 = vmatprep.subr.mxu0 0.0
    %2659 = vmatpush2.msra.mxu0 0.0
    %2660 = vmatprep.subr.mxu0 0.0
    %2661 = vmatpush2.msra.mxu0 0.0
    %2662 = vmatprep.subr.mxu0 0.0
    %2663 = vmatpush2.msra.mxu0 0.0
    %2664 = vmatprep.subr.mxu0 0.0
    %2665 = vmatpush2.msra.mxu0 0.0
    %2666 = vmatprep.subr.mxu0 0.0
    %2667 = vmatpush2.msra.mxu0 0.0
    %2668 = vmatprep.subr.mxu0 0.0
    %2669 = vmatpush2.msra.mxu0 0.0
    %2670 = vmatprep.subr.mxu0 0.0
    %2671 = vmatpush2.msra.mxu0 0.0
    %2672 = vmatprep.subr.mxu0 0.0
    %2673 = vmatpush2.msra.mxu0 0.0
    %2674 = vmatprep.subr.mxu0 0.0
    %2675 = vmatpush2.msra.mxu0 0.0
    %2676 = vmatprep.subr.mxu0 0.0
    %2677 = vmatpush2.msra.mxu0 0.0
    %2678 = vmatprep.subr.mxu0 0.0
    %2679 = vmatpush2.msra.mxu0 0.0
    %2680 = vmatprep.mubr.f32.mxu0 0.0
    %2681 = vmatmul.mubr.f32.gmra.mxu0 %v2451
    %v2682 = vpop.f32.mrf.mxu0
    %v2683 = vadd.f32 0.0, %v2682
    %v2684 = vpop.f32.mrf.mxu0
    %v2685 = vadd.f32 0.0, %v2684
    %2686 = vdwg.mxu0
    %2687 = vmatprep.subr.mxu0 %v713
    %2688 = vmatpush1.msra.mxu0 %v712
    %2689 = vmatprep.subr.mxu0 %v709
    %2690 = vmatpush1.msra.mxu0 %v708
    %2691 = vmatprep.subr.mxu0 %v705
    %2692 = vmatpush1.msra.mxu0 %v704
    %2693 = vmatprep.subr.mxu0 %v701
    %2694 = vmatpush1.msra.mxu0 %v700
    %2695 = vmatprep.subr.mxu0 %v697
    %2696 = vmatpush1.msra.mxu0 %v696
    %2697 = vmatprep.subr.mxu0 %v693
    %2698 = vmatpush1.msra.mxu0 %v692
    %2699 = vmatprep.subr.mxu0 %v689
    %2700 = vmatpush1.msra.mxu0 %v688
    %2701 = vmatprep.subr.mxu0 %v685
    %2702 = vmatpush1.msra.mxu0 %v684
    %2703 = vmatprep.subr.mxu0 %v681
    %2704 = vmatpush1.msra.mxu0 %v680
    %2705 = vmatprep.subr.mxu0 %v677
    %2706 = vmatpush1.msra.mxu0 %v676
    %2707 = vmatprep.subr.mxu0 %v673
    %2708 = vmatpush1.msra.mxu0 %v672
    %2709 = vmatprep.subr.mxu0 %v669
    %2710 = vmatpush1.msra.mxu0 %v668
    %2711 = vmatprep.subr.mxu0 %v665
    %2712 = vmatpush1.msra.mxu0 %v664
    %2713 = vmatprep.subr.mxu0 %v661
    %2714 = vmatpush1.msra.mxu0 %v660
    %2715 = vmatprep.subr.mxu0 %v657
    %2716 = vmatpush1.msra.mxu0 %v656
    %2717 = vmatprep.subr.mxu0 %v653
    %2718 = vmatpush1.msra.mxu0 %v652
    %2719 = vmatprep.subr.mxu0 0.0
    %2720 = vmatpush2.msra.mxu0 0.0
    %2721 = vmatprep.subr.mxu0 0.0
    %2722 = vmatpush2.msra.mxu0 0.0
    %2723 = vmatprep.subr.mxu0 0.0
    %2724 = vmatpush2.msra.mxu0 0.0
    %2725 = vmatprep.subr.mxu0 0.0
    %2726 = vmatpush2.msra.mxu0 0.0
    %2727 = vmatprep.subr.mxu0 0.0
    %2728 = vmatpush2.msra.mxu0 0.0
    %2729 = vmatprep.subr.mxu0 0.0
    %2730 = vmatpush2.msra.mxu0 0.0
    %2731 = vmatprep.subr.mxu0 0.0
    %2732 = vmatpush2.msra.mxu0 0.0
    %2733 = vmatprep.subr.mxu0 0.0
    %2734 = vmatpush2.msra.mxu0 0.0
    %2735 = vmatprep.subr.mxu0 0.0
    %2736 = vmatpush2.msra.mxu0 0.0
    %2737 = vmatprep.subr.mxu0 0.0
    %2738 = vmatpush2.msra.mxu0 0.0
    %2739 = vmatprep.subr.mxu0 0.0
    %2740 = vmatpush2.msra.mxu0 0.0
    %2741 = vmatprep.subr.mxu0 0.0
    %2742 = vmatpush2.msra.mxu0 0.0
    %2743 = vmatprep.subr.mxu0 0.0
    %2744 = vmatpush2.msra.mxu0 0.0
    %2745 = vmatprep.subr.mxu0 0.0
    %2746 = vmatpush2.msra.mxu0 0.0
    %2747 = vmatprep.subr.mxu0 0.0
    %2748 = vmatpush2.msra.mxu0 0.0
    %2749 = vmatprep.subr.mxu0 0.0
    %2750 = vmatpush2.msra.mxu0 0.0
    %2751 = vmatprep.mubr.f32.mxu0 0.0
    %2752 = vmatmul.mubr.f32.gmra.mxu0 %v2451
    %v2753 = vpop.f32.mrf.mxu0
    %v2754 = vadd.f32 0.0, %v2753
    %v2755 = vpop.f32.mrf.mxu0
    %v2756 = vadd.f32 0.0, %v2755
    %2757 = vdwg.mxu0
    %2758 = vmatprep.subr.mxu0 %v647
    %2759 = vmatpush1.msra.mxu0 %v646
    %2760 = vmatprep.subr.mxu0 %v643
    %2761 = vmatpush1.msra.mxu0 %v642
    %2762 = vmatprep.subr.mxu0 %v639
    %2763 = vmatpush1.msra.mxu0 %v638
    %2764 = vmatprep.subr.mxu0 %v635
    %2765 = vmatpush1.msra.mxu0 %v634
    %2766 = vmatprep.subr.mxu0 %v631
    %2767 = vmatpush1.msra.mxu0 %v630
    %2768 = vmatprep.subr.mxu0 %v627
    %2769 = vmatpush1.msra.mxu0 %v626
    %2770 = vmatprep.subr.mxu0 %v623
    %2771 = vmatpush1.msra.mxu0 %v622
    %2772 = vmatprep.subr.mxu0 %v619
    %2773 = vmatpush1.msra.mxu0 %v618
    %2774 = vmatprep.subr.mxu0 %v615
    %2775 = vmatpush1.msra.mxu0 %v614
    %2776 = vmatprep.subr.mxu0 %v611
    %2777 = vmatpush1.msra.mxu0 %v610
    %2778 = vmatprep.subr.mxu0 %v607
    %2779 = vmatpush1.msra.mxu0 %v606
    %2780 = vmatprep.subr.mxu0 %v603
    %2781 = vmatpush1.msra.mxu0 %v602
    %2782 = vmatprep.subr.mxu0 %v599
    %2783 = vmatpush1.msra.mxu0 %v598
    %2784 = vmatprep.subr.mxu0 %v595
    %2785 = vmatpush1.msra.mxu0 %v594
    %2786 = vmatprep.subr.mxu0 %v591
    %2787 = vmatpush1.msra.mxu0 %v590
    %2788 = vmatprep.subr.mxu0 %v587
    %2789 = vmatpush1.msra.mxu0 %v586
    %2790 = vmatprep.subr.mxu0 0.0
    %2791 = vmatpush2.msra.mxu0 0.0
    %2792 = vmatprep.subr.mxu0 0.0
    %2793 = vmatpush2.msra.mxu0 0.0
    %2794 = vmatprep.subr.mxu0 0.0
    %2795 = vmatpush2.msra.mxu0 0.0
    %2796 = vmatprep.subr.mxu0 0.0
    %2797 = vmatpush2.msra.mxu0 0.0
    %2798 = vmatprep.subr.mxu0 0.0
    %2799 = vmatpush2.msra.mxu0 0.0
    %2800 = vmatprep.subr.mxu0 0.0
    %2801 = vmatpush2.msra.mxu0 0.0
    %2802 = vmatprep.subr.mxu0 0.0
    %2803 = vmatpush2.msra.mxu0 0.0
    %2804 = vmatprep.subr.mxu0 0.0
    %2805 = vmatpush2.msra.mxu0 0.0
    %2806 = vmatprep.subr.mxu0 0.0
    %2807 = vmatpush2.msra.mxu0 0.0
    %2808 = vmatprep.subr.mxu0 0.0
    %2809 = vmatpush2.msra.mxu0 0.0
    %2810 = vmatprep.subr.mxu0 0.0
    %2811 = vmatpush2.msra.mxu0 0.0
    %2812 = vmatprep.subr.mxu0 0.0
    %2813 = vmatpush2.msra.mxu0 0.0
    %2814 = vmatprep.subr.mxu0 0.0
    %2815 = vmatpush2.msra.mxu0 0.0
    %2816 = vmatprep.subr.mxu0 0.0
    %2817 = vmatpush2.msra.mxu0 0.0
    %2818 = vmatprep.subr.mxu0 0.0
    %2819 = vmatpush2.msra.mxu0 0.0
    %2820 = vmatprep.subr.mxu0 0.0
    %2821 = vmatpush2.msra.mxu0 0.0
    %2822 = vmatprep.mubr.f32.mxu0 0.0
    %2823 = vmatmul.mubr.f32.gmra.mxu0 %v2615
    %v2824 = vpop.f32.mrf.mxu0
    %v2825 = vadd.f32 %v2683, %v2824
    %v2826 = vpop.f32.mrf.mxu0
    %v2827 = vadd.f32 %v2685, %v2826
    %2828 = vdwg.mxu0
    %2829 = vmatprep.subr.mxu0 %v649
    %2830 = vmatpush1.msra.mxu0 %v648
    %2831 = vmatprep.subr.mxu0 %v645
    %2832 = vmatpush1.msra.mxu0 %v644
    %2833 = vmatprep.subr.mxu0 %v641
    %2834 = vmatpush1.msra.mxu0 %v640
    %2835 = vmatprep.subr.mxu0 %v637
    %2836 = vmatpush1.msra.mxu0 %v636
    %2837 = vmatprep.subr.mxu0 %v633
    %2838 = vmatpush1.msra.mxu0 %v632
    %2839 = vmatprep.subr.mxu0 %v629
    %2840 = vmatpush1.msra.mxu0 %v628
    %2841 = vmatprep.subr.mxu0 %v625
    %2842 = vmatpush1.msra.mxu0 %v624
    %2843 = vmatprep.subr.mxu0 %v621
    %2844 = vmatpush1.msra.mxu0 %v620
    %2845 = vmatprep.subr.mxu0 %v617
    %2846 = vmatpush1.msra.mxu0 %v616
    %2847 = vmatprep.subr.mxu0 %v613
    %2848 = vmatpush1.msra.mxu0 %v612
    %2849 = vmatprep.subr.mxu0 %v609
    %2850 = vmatpush1.msra.mxu0 %v608
    %2851 = vmatprep.subr.mxu0 %v605
    %2852 = vmatpush1.msra.mxu0 %v604
    %2853 = vmatprep.subr.mxu0 %v601
    %2854 = vmatpush1.msra.mxu0 %v600
    %2855 = vmatprep.subr.mxu0 %v597
    %2856 = vmatpush1.msra.mxu0 %v596
    %2857 = vmatprep.subr.mxu0 %v593
    %2858 = vmatpush1.msra.mxu0 %v592
    %2859 = vmatprep.subr.mxu0 %v589
    %2860 = vmatpush1.msra.mxu0 %v588
    %2861 = vmatprep.subr.mxu0 0.0
    %2862 = vmatpush2.msra.mxu0 0.0
    %2863 = vmatprep.subr.mxu0 0.0
    %2864 = vmatpush2.msra.mxu0 0.0
    %2865 = vmatprep.subr.mxu0 0.0
    %2866 = vmatpush2.msra.mxu0 0.0
    %2867 = vmatprep.subr.mxu0 0.0
    %2868 = vmatpush2.msra.mxu0 0.0
    %2869 = vmatprep.subr.mxu0 0.0
    %2870 = vmatpush2.msra.mxu0 0.0
    %2871 = vmatprep.subr.mxu0 0.0
    %2872 = vmatpush2.msra.mxu0 0.0
    %2873 = vmatprep.subr.mxu0 0.0
    %2874 = vmatpush2.msra.mxu0 0.0
    %2875 = vmatprep.subr.mxu0 0.0
    %2876 = vmatpush2.msra.mxu0 0.0
    %2877 = vmatprep.subr.mxu0 0.0
    %2878 = vmatpush2.msra.mxu0 0.0
    %2879 = vmatprep.subr.mxu0 0.0
    %2880 = vmatpush2.msra.mxu0 0.0
    %2881 = vmatprep.subr.mxu0 0.0
    %2882 = vmatpush2.msra.mxu0 0.0
    %2883 = vmatprep.subr.mxu0 0.0
    %2884 = vmatpush2.msra.mxu0 0.0
    %2885 = vmatprep.subr.mxu0 0.0
    %2886 = vmatpush2.msra.mxu0 0.0
    %2887 = vmatprep.subr.mxu0 0.0
    %2888 = vmatpush2.msra.mxu0 0.0
    %2889 = vmatprep.subr.mxu0 0.0
    %2890 = vmatpush2.msra.mxu0 0.0
    %2891 = vmatprep.subr.mxu0 0.0
    %2892 = vmatpush2.msra.mxu0 0.0
    %2893 = vmatprep.mubr.f32.mxu0 0.0
    %2894 = vmatmul.mubr.f32.gmra.mxu0 %v2615
    %v2895 = vpop.f32.mrf.mxu0
    %v2896 = vadd.f32 %v2754, %v2895
    %v2897 = vpop.f32.mrf.mxu0
    %v2898 = vadd.f32 %v2756, %v2897
    %2899 = vdwg.mxu0
    %v2900 = vadd.f32 %v2825, %v1003
    %v2901 = vadd.f32 %v2827, %v1007
    %v2902 = vadd.f32 %v2896, %v1011
    %v2903 = vadd.f32 %v2898, %v1015
    %v2904 = vmul.f32 %v2900, 0.5
    %v2905 = vtanh.pop %v2904
    %v2906 = vmul.f32 %v2905, 0.5
    %v2907 = vadd.f32 %v2906, 0.5
    %v2908 = vmul.f32 %v2901, 0.5
    %v2909 = vtanh.pop %v2908
    %v2910 = vmul.f32 %v2909, 0.5
    %v2911 = vadd.f32 %v2910, 0.5
    %v2912 = vtanh.pop %v2902
    %v2913 = vmul.f32 %v2903, 0.5
    %v2914 = vtanh.pop %v2913
    %v2915 = vmul.f32 %v2914, 0.5
    %v2916 = vadd.f32 %v2915, 0.5
    %v2917 = vmul.f32 %v2911, %v2449
    %v2918 = vmul.f32 %v2907, %v2912
    %v2919 = vadd.f32 %v2917, %v2918
    %v2920 = vtanh.pop %v2919
    %v2921 = vmul.f32 %v2916, %v2920
    %2922 = vmatprep.subr.mxu0 %v419
    %2923 = vmatpush1.msra.mxu0 %v418
    %2924 = vmatprep.subr.mxu0 %v415
    %2925 = vmatpush1.msra.mxu0 %v414
    %2926 = vmatprep.subr.mxu0 %v411
    %2927 = vmatpush1.msra.mxu0 %v410
    %2928 = vmatprep.subr.mxu0 %v407
    %2929 = vmatpush1.msra.mxu0 %v406
    %2930 = vmatprep.subr.mxu0 %v403
    %2931 = vmatpush1.msra.mxu0 %v402
    %2932 = vmatprep.subr.mxu0 %v399
    %2933 = vmatpush1.msra.mxu0 %v398
    %2934 = vmatprep.subr.mxu0 %v395
    %2935 = vmatpush1.msra.mxu0 %v394
    %2936 = vmatprep.subr.mxu0 %v391
    %2937 = vmatpush1.msra.mxu0 %v390
    %2938 = vmatprep.subr.mxu0 %v387
    %2939 = vmatpush1.msra.mxu0 %v386
    %2940 = vmatprep.subr.mxu0 %v383
    %2941 = vmatpush1.msra.mxu0 %v382
    %2942 = vmatprep.subr.mxu0 %v379
    %2943 = vmatpush1.msra.mxu0 %v378
    %2944 = vmatprep.subr.mxu0 %v375
    %2945 = vmatpush1.msra.mxu0 %v374
    %2946 = vmatprep.subr.mxu0 %v371
    %2947 = vmatpush1.msra.mxu0 %v370
    %2948 = vmatprep.subr.mxu0 %v367
    %2949 = vmatpush1.msra.mxu0 %v366
    %2950 = vmatprep.subr.mxu0 %v363
    %2951 = vmatpush1.msra.mxu0 %v362
    %2952 = vmatprep.subr.mxu0 %v359
    %2953 = vmatpush1.msra.mxu0 %v358
    %2954 = vmatprep.subr.mxu0 0.0
    %2955 = vmatpush2.msra.mxu0 0.0
    %2956 = vmatprep.subr.mxu0 0.0
    %2957 = vmatpush2.msra.mxu0 0.0
    %2958 = vmatprep.subr.mxu0 0.0
    %2959 = vmatpush2.msra.mxu0 0.0
    %2960 = vmatprep.subr.mxu0 0.0
    %2961 = vmatpush2.msra.mxu0 0.0
    %2962 = vmatprep.subr.mxu0 0.0
    %2963 = vmatpush2.msra.mxu0 0.0
    %2964 = vmatprep.subr.mxu0 0.0
    %2965 = vmatpush2.msra.mxu0 0.0
    %2966 = vmatprep.subr.mxu0 0.0
    %2967 = vmatpush2.msra.mxu0 0.0
    %2968 = vmatprep.subr.mxu0 0.0
    %2969 = vmatpush2.msra.mxu0 0.0
    %2970 = vmatprep.subr.mxu0 0.0
    %2971 = vmatpush2.msra.mxu0 0.0
    %2972 = vmatprep.subr.mxu0 0.0
    %2973 = vmatpush2.msra.mxu0 0.0
    %2974 = vmatprep.subr.mxu0 0.0
    %2975 = vmatpush2.msra.mxu0 0.0
    %2976 = vmatprep.subr.mxu0 0.0
    %2977 = vmatpush2.msra.mxu0 0.0
    %2978 = vmatprep.subr.mxu0 0.0
    %2979 = vmatpush2.msra.mxu0 0.0
    %2980 = vmatprep.subr.mxu0 0.0
    %2981 = vmatpush2.msra.mxu0 0.0
    %2982 = vmatprep.subr.mxu0 0.0
    %2983 = vmatpush2.msra.mxu0 0.0
    %2984 = vmatprep.subr.mxu0 0.0
    %2985 = vmatpush2.msra.mxu0 0.0
    %2986 = vmatprep.mubr.f32.mxu0 0.0
    %2987 = vmatmul.mubr.f32.gmra.mxu0 %v2615
    %v2988 = vpop.f32.mrf.mxu0
    %v2989 = vadd.f32 0.0, %v2988
    %v2990 = vpop.f32.mrf.mxu0
    %v2991 = vadd.f32 0.0, %v2990
    %2992 = vdwg.mxu0
    %2993 = vmatprep.subr.mxu0 %v421
    %2994 = vmatpush1.msra.mxu0 %v420
    %2995 = vmatprep.subr.mxu0 %v417
    %2996 = vmatpush1.msra.mxu0 %v416
    %2997 = vmatprep.subr.mxu0 %v413
    %2998 = vmatpush1.msra.mxu0 %v412
    %2999 = vmatprep.subr.mxu0 %v409
    %3000 = vmatpush1.msra.mxu0 %v408
    %3001 = vmatprep.subr.mxu0 %v405
    %3002 = vmatpush1.msra.mxu0 %v404
    %3003 = vmatprep.subr.mxu0 %v401
    %3004 = vmatpush1.msra.mxu0 %v400
    %3005 = vmatprep.subr.mxu0 %v397
    %3006 = vmatpush1.msra.mxu0 %v396
    %3007 = vmatprep.subr.mxu0 %v393
    %3008 = vmatpush1.msra.mxu0 %v392
    %3009 = vmatprep.subr.mxu0 %v389
    %3010 = vmatpush1.msra.mxu0 %v388
    %3011 = vmatprep.subr.mxu0 %v385
    %3012 = vmatpush1.msra.mxu0 %v384
    %3013 = vmatprep.subr.mxu0 %v381
    %3014 = vmatpush1.msra.mxu0 %v380
    %3015 = vmatprep.subr.mxu0 %v377
    %3016 = vmatpush1.msra.mxu0 %v376
    %3017 = vmatprep.subr.mxu0 %v373
    %3018 = vmatpush1.msra.mxu0 %v372
    %3019 = vmatprep.subr.mxu0 %v369
    %3020 = vmatpush1.msra.mxu0 %v368
    %3021 = vmatprep.subr.mxu0 %v365
    %3022 = vmatpush1.msra.mxu0 %v364
    %3023 = vmatprep.subr.mxu0 %v361
    %3024 = vmatpush1.msra.mxu0 %v360
    %3025 = vmatprep.subr.mxu0 0.0
    %3026 = vmatpush2.msra.mxu0 0.0
    %3027 = vmatprep.subr.mxu0 0.0
    %3028 = vmatpush2.msra.mxu0 0.0
    %3029 = vmatprep.subr.mxu0 0.0
    %3030 = vmatpush2.msra.mxu0 0.0
    %3031 = vmatprep.subr.mxu0 0.0
    %3032 = vmatpush2.msra.mxu0 0.0
    %3033 = vmatprep.subr.mxu0 0.0
    %3034 = vmatpush2.msra.mxu0 0.0
    %3035 = vmatprep.subr.mxu0 0.0
    %3036 = vmatpush2.msra.mxu0 0.0
    %3037 = vmatprep.subr.mxu0 0.0
    %3038 = vmatpush2.msra.mxu0 0.0
    %3039 = vmatprep.subr.mxu0 0.0
    %3040 = vmatpush2.msra.mxu0 0.0
    %3041 = vmatprep.subr.mxu0 0.0
    %3042 = vmatpush2.msra.mxu0 0.0
    %3043 = vmatprep.subr.mxu0 0.0
    %3044 = vmatpush2.msra.mxu0 0.0
    %3045 = vmatprep.subr.mxu0 0.0
    %3046 = vmatpush2.msra.mxu0 0.0
    %3047 = vmatprep.subr.mxu0 0.0
    %3048 = vmatpush2.msra.mxu0 0.0
    %3049 = vmatprep.subr.mxu0 0.0
    %3050 = vmatpush2.msra.mxu0 0.0
    %3051 = vmatprep.subr.mxu0 0.0
    %3052 = vmatpush2.msra.mxu0 0.0
    %3053 = vmatprep.subr.mxu0 0.0
    %3054 = vmatpush2.msra.mxu0 0.0
    %3055 = vmatprep.subr.mxu0 0.0
    %3056 = vmatpush2.msra.mxu0 0.0
    %3057 = vmatprep.mubr.f32.mxu0 0.0
    %3058 = vmatmul.mubr.f32.gmra.mxu0 %v2615
    %v3059 = vpop.f32.mrf.mxu0
    %v3060 = vadd.f32 0.0, %v3059
    %v3061 = vpop.f32.mrf.mxu0
    %v3062 = vadd.f32 0.0, %v3061
    %3063 = vdwg.mxu0
    %v3064 = vadd.f32 %v229, %v2989
    %v3065 = vadd.f32 %v231, %v2991
    %v3066 = vadd.f32 %v342, %v3060
    %v3067 = vadd.f32 %v344, %v3062
    %v3068 = vmul.f32 %v3064, 0.5
    %v3069 = vtanh.pop %v3068
    %v3070 = vmul.f32 %v3069, 0.5
    %v3071 = vadd.f32 %v3070, 0.5
    %v3072 = vmul.f32 %v3065, 0.5
    %v3073 = vtanh.pop %v3072
    %v3074 = vmul.f32 %v3073, 0.5
    %v3075 = vadd.f32 %v3074, 0.5
    %v3076 = vtanh.pop %v3066
    %v3077 = vmul.f32 %v3067, 0.5
    %v3078 = vtanh.pop %v3077
    %v3079 = vmul.f32 %v3078, 0.5
    %v3080 = vadd.f32 %v3079, 0.5
    %v3081 = vmul.f32 %v3075, %v2613
    %v3082 = vmul.f32 %v3071, %v3076
    %v3083 = vadd.f32 %v3081, %v3082
    %v3084 = vtanh.pop %v3083
    %v3085 = vmul.f32 %v3080, %v3084
    %3086 = vmatprep.subr.mxu0 %v711
    %3087 = vmatpush1.msra.mxu0 %v710
    %3088 = vmatprep.subr.mxu0 %v707
    %3089 = vmatpush1.msra.mxu0 %v706
    %3090 = vmatprep.subr.mxu0 %v703
    %3091 = vmatpush1.msra.mxu0 %v702
    %3092 = vmatprep.subr.mxu0 %v699
    %3093 = vmatpush1.msra.mxu0 %v698
    %3094 = vmatprep.subr.mxu0 %v695
    %3095 = vmatpush1.msra.mxu0 %v694
    %3096 = vmatprep.subr.mxu0 %v691
    %3097 = vmatpush1.msra.mxu0 %v690
    %3098 = vmatprep.subr.mxu0 %v687
    %3099 = vmatpush1.msra.mxu0 %v686
    %3100 = vmatprep.subr.mxu0 %v683
    %3101 = vmatpush1.msra.mxu0 %v682
    %3102 = vmatprep.subr.mxu0 %v679
    %3103 = vmatpush1.msra.mxu0 %v678
    %3104 = vmatprep.subr.mxu0 %v675
    %3105 = vmatpush1.msra.mxu0 %v674
    %3106 = vmatprep.subr.mxu0 %v671
    %3107 = vmatpush1.msra.mxu0 %v670
    %3108 = vmatprep.subr.mxu0 %v667
    %3109 = vmatpush1.msra.mxu0 %v666
    %3110 = vmatprep.subr.mxu0 %v663
    %3111 = vmatpush1.msra.mxu0 %v662
    %3112 = vmatprep.subr.mxu0 %v659
    %3113 = vmatpush1.msra.mxu0 %v658
    %3114 = vmatprep.subr.mxu0 %v655
    %3115 = vmatpush1.msra.mxu0 %v654
    %3116 = vmatprep.subr.mxu0 %v651
    %3117 = vmatpush1.msra.mxu0 %v650
    %3118 = vmatprep.subr.mxu0 0.0
    %3119 = vmatpush2.msra.mxu0 0.0
    %3120 = vmatprep.subr.mxu0 0.0
    %3121 = vmatpush2.msra.mxu0 0.0
    %3122 = vmatprep.subr.mxu0 0.0
    %3123 = vmatpush2.msra.mxu0 0.0
    %3124 = vmatprep.subr.mxu0 0.0
    %3125 = vmatpush2.msra.mxu0 0.0
    %3126 = vmatprep.subr.mxu0 0.0
    %3127 = vmatpush2.msra.mxu0 0.0
    %3128 = vmatprep.subr.mxu0 0.0
    %3129 = vmatpush2.msra.mxu0 0.0
    %3130 = vmatprep.subr.mxu0 0.0
    %3131 = vmatpush2.msra.mxu0 0.0
    %3132 = vmatprep.subr.mxu0 0.0
    %3133 = vmatpush2.msra.mxu0 0.0
    %3134 = vmatprep.subr.mxu0 0.0
    %3135 = vmatpush2.msra.mxu0 0.0
    %3136 = vmatprep.subr.mxu0 0.0
    %3137 = vmatpush2.msra.mxu0 0.0
    %3138 = vmatprep.subr.mxu0 0.0
    %3139 = vmatpush2.msra.mxu0 0.0
    %3140 = vmatprep.subr.mxu0 0.0
    %3141 = vmatpush2.msra.mxu0 0.0
    %3142 = vmatprep.subr.mxu0 0.0
    %3143 = vmatpush2.msra.mxu0 0.0
    %3144 = vmatprep.subr.mxu0 0.0
    %3145 = vmatpush2.msra.mxu0 0.0
    %3146 = vmatprep.subr.mxu0 0.0
    %3147 = vmatpush2.msra.mxu0 0.0
    %3148 = vmatprep.subr.mxu0 0.0
    %3149 = vmatpush2.msra.mxu0 0.0
    %3150 = vmatprep.mubr.f32.mxu0 0.0
    %3151 = vmatmul.mubr.f32.gmra.mxu0 %v2921
    %v3152 = vpop.f32.mrf.mxu0
    %v3153 = vadd.f32 0.0, %v3152
    %v3154 = vpop.f32.mrf.mxu0
    %v3155 = vadd.f32 0.0, %v3154
    %3156 = vdwg.mxu0
    %3157 = vmatprep.subr.mxu0 %v713
    %3158 = vmatpush1.msra.mxu0 %v712
    %3159 = vmatprep.subr.mxu0 %v709
    %3160 = vmatpush1.msra.mxu0 %v708
    %3161 = vmatprep.subr.mxu0 %v705
    %3162 = vmatpush1.msra.mxu0 %v704
    %3163 = vmatprep.subr.mxu0 %v701
    %3164 = vmatpush1.msra.mxu0 %v700
    %3165 = vmatprep.subr.mxu0 %v697
    %3166 = vmatpush1.msra.mxu0 %v696
    %3167 = vmatprep.subr.mxu0 %v693
    %3168 = vmatpush1.msra.mxu0 %v692
    %3169 = vmatprep.subr.mxu0 %v689
    %3170 = vmatpush1.msra.mxu0 %v688
    %3171 = vmatprep.subr.mxu0 %v685
    %3172 = vmatpush1.msra.mxu0 %v684
    %3173 = vmatprep.subr.mxu0 %v681
    %3174 = vmatpush1.msra.mxu0 %v680
    %3175 = vmatprep.subr.mxu0 %v677
    %3176 = vmatpush1.msra.mxu0 %v676
    %3177 = vmatprep.subr.mxu0 %v673
    %3178 = vmatpush1.msra.mxu0 %v672
    %3179 = vmatprep.subr.mxu0 %v669
    %3180 = vmatpush1.msra.mxu0 %v668
    %3181 = vmatprep.subr.mxu0 %v665
    %3182 = vmatpush1.msra.mxu0 %v664
    %3183 = vmatprep.subr.mxu0 %v661
    %3184 = vmatpush1.msra.mxu0 %v660
    %3185 = vmatprep.subr.mxu0 %v657
    %3186 = vmatpush1.msra.mxu0 %v656
    %3187 = vmatprep.subr.mxu0 %v653
    %3188 = vmatpush1.msra.mxu0 %v652
    %3189 = vmatprep.subr.mxu0 0.0
    %3190 = vmatpush2.msra.mxu0 0.0
    %3191 = vmatprep.subr.mxu0 0.0
    %3192 = vmatpush2.msra.mxu0 0.0
    %3193 = vmatprep.subr.mxu0 0.0
    %3194 = vmatpush2.msra.mxu0 0.0
    %3195 = vmatprep.subr.mxu0 0.0
    %3196 = vmatpush2.msra.mxu0 0.0
    %3197 = vmatprep.subr.mxu0 0.0
    %3198 = vmatpush2.msra.mxu0 0.0
    %3199 = vmatprep.subr.mxu0 0.0
    %3200 = vmatpush2.msra.mxu0 0.0
    %3201 = vmatprep.subr.mxu0 0.0
    %3202 = vmatpush2.msra.mxu0 0.0
    %3203 = vmatprep.subr.mxu0 0.0
    %3204 = vmatpush2.msra.mxu0 0.0
    %3205 = vmatprep.subr.mxu0 0.0
    %3206 = vmatpush2.msra.mxu0 0.0
    %3207 = vmatprep.subr.mxu0 0.0
    %3208 = vmatpush2.msra.mxu0 0.0
    %3209 = vmatprep.subr.mxu0 0.0
    %3210 = vmatpush2.msra.mxu0 0.0
    %3211 = vmatprep.subr.mxu0 0.0
    %3212 = vmatpush2.msra.mxu0 0.0
    %3213 = vmatprep.subr.mxu0 0.0
    %3214 = vmatpush2.msra.mxu0 0.0
    %3215 = vmatprep.subr.mxu0 0.0
    %3216 = vmatpush2.msra.mxu0 0.0
    %3217 = vmatprep.subr.mxu0 0.0
    %3218 = vmatpush2.msra.mxu0 0.0
    %3219 = vmatprep.subr.mxu0 0.0
    %3220 = vmatpush2.msra.mxu0 0.0
    %3221 = vmatprep.mubr.f32.mxu0 0.0
    %3222 = vmatmul.mubr.f32.gmra.mxu0 %v2921
    %v3223 = vpop.f32.mrf.mxu0
    %v3224 = vadd.f32 0.0, %v3223
    %v3225 = vpop.f32.mrf.mxu0
    %v3226 = vadd.f32 0.0, %v3225
    %3227 = vdwg.mxu0
    %3228 = vmatprep.subr.mxu0 %v647
    %3229 = vmatpush1.msra.mxu0 %v646
    %3230 = vmatprep.subr.mxu0 %v643
    %3231 = vmatpush1.msra.mxu0 %v642
    %3232 = vmatprep.subr.mxu0 %v639
    %3233 = vmatpush1.msra.mxu0 %v638
    %3234 = vmatprep.subr.mxu0 %v635
    %3235 = vmatpush1.msra.mxu0 %v634
    %3236 = vmatprep.subr.mxu0 %v631
    %3237 = vmatpush1.msra.mxu0 %v630
    %3238 = vmatprep.subr.mxu0 %v627
    %3239 = vmatpush1.msra.mxu0 %v626
    %3240 = vmatprep.subr.mxu0 %v623
    %3241 = vmatpush1.msra.mxu0 %v622
    %3242 = vmatprep.subr.mxu0 %v619
    %3243 = vmatpush1.msra.mxu0 %v618
    %3244 = vmatprep.subr.mxu0 %v615
    %3245 = vmatpush1.msra.mxu0 %v614
    %3246 = vmatprep.subr.mxu0 %v611
    %3247 = vmatpush1.msra.mxu0 %v610
    %3248 = vmatprep.subr.mxu0 %v607
    %3249 = vmatpush1.msra.mxu0 %v606
    %3250 = vmatprep.subr.mxu0 %v603
    %3251 = vmatpush1.msra.mxu0 %v602
    %3252 = vmatprep.subr.mxu0 %v599
    %3253 = vmatpush1.msra.mxu0 %v598
    %3254 = vmatprep.subr.mxu0 %v595
    %3255 = vmatpush1.msra.mxu0 %v594
    %3256 = vmatprep.subr.mxu0 %v591
    %3257 = vmatpush1.msra.mxu0 %v590
    %3258 = vmatprep.subr.mxu0 %v587
    %3259 = vmatpush1.msra.mxu0 %v586
    %3260 = vmatprep.subr.mxu0 0.0
    %3261 = vmatpush2.msra.mxu0 0.0
    %3262 = vmatprep.subr.mxu0 0.0
    %3263 = vmatpush2.msra.mxu0 0.0
    %3264 = vmatprep.subr.mxu0 0.0
    %3265 = vmatpush2.msra.mxu0 0.0
    %3266 = vmatprep.subr.mxu0 0.0
    %3267 = vmatpush2.msra.mxu0 0.0
    %3268 = vmatprep.subr.mxu0 0.0
    %3269 = vmatpush2.msra.mxu0 0.0
    %3270 = vmatprep.subr.mxu0 0.0
    %3271 = vmatpush2.msra.mxu0 0.0
    %3272 = vmatprep.subr.mxu0 0.0
    %3273 = vmatpush2.msra.mxu0 0.0
    %3274 = vmatprep.subr.mxu0 0.0
    %3275 = vmatpush2.msra.mxu0 0.0
    %3276 = vmatprep.subr.mxu0 0.0
    %3277 = vmatpush2.msra.mxu0 0.0
    %3278 = vmatprep.subr.mxu0 0.0
    %3279 = vmatpush2.msra.mxu0 0.0
    %3280 = vmatprep.subr.mxu0 0.0
    %3281 = vmatpush2.msra.mxu0 0.0
    %3282 = vmatprep.subr.mxu0 0.0
    %3283 = vmatpush2.msra.mxu0 0.0
    %3284 = vmatprep.subr.mxu0 0.0
    %3285 = vmatpush2.msra.mxu0 0.0
    %3286 = vmatprep.subr.mxu0 0.0
    %3287 = vmatpush2.msra.mxu0 0.0
    %3288 = vmatprep.subr.mxu0 0.0
    %3289 = vmatpush2.msra.mxu0 0.0
    %3290 = vmatprep.subr.mxu0 0.0
    %3291 = vmatpush2.msra.mxu0 0.0
    %3292 = vmatprep.mubr.f32.mxu0 0.0
    %3293 = vmatmul.mubr.f32.gmra.mxu0 %v3085
    %v3294 = vpop.f32.mrf.mxu0
    %v3295 = vadd.f32 %v3153, %v3294
    %v3296 = vpop.f32.mrf.mxu0
    %v3297 = vadd.f32 %v3155, %v3296
    %3298 = vdwg.mxu0
    %3299 = vmatprep.subr.mxu0 %v649
    %3300 = vmatpush1.msra.mxu0 %v648
    %3301 = vmatprep.subr.mxu0 %v645
    %3302 = vmatpush1.msra.mxu0 %v644
    %3303 = vmatprep.subr.mxu0 %v641
    %3304 = vmatpush1.msra.mxu0 %v640
    %3305 = vmatprep.subr.mxu0 %v637
    %3306 = vmatpush1.msra.mxu0 %v636
    %3307 = vmatprep.subr.mxu0 %v633
    %3308 = vmatpush1.msra.mxu0 %v632
    %3309 = vmatprep.subr.mxu0 %v629
    %3310 = vmatpush1.msra.mxu0 %v628
    %3311 = vmatprep.subr.mxu0 %v625
    %3312 = vmatpush1.msra.mxu0 %v624
    %3313 = vmatprep.subr.mxu0 %v621
    %3314 = vmatpush1.msra.mxu0 %v620
    %3315 = vmatprep.subr.mxu0 %v617
    %3316 = vmatpush1.msra.mxu0 %v616
    %3317 = vmatprep.subr.mxu0 %v613
    %3318 = vmatpush1.msra.mxu0 %v612
    %3319 = vmatprep.subr.mxu0 %v609
    %3320 = vmatpush1.msra.mxu0 %v608
    %3321 = vmatprep.subr.mxu0 %v605
    %3322 = vmatpush1.msra.mxu0 %v604
    %3323 = vmatprep.subr.mxu0 %v601
    %3324 = vmatpush1.msra.mxu0 %v600
    %3325 = vmatprep.subr.mxu0 %v597
    %3326 = vmatpush1.msra.mxu0 %v596
    %3327 = vmatprep.subr.mxu0 %v593
    %3328 = vmatpush1.msra.mxu0 %v592
    %3329 = vmatprep.subr.mxu0 %v589
    %3330 = vmatpush1.msra.mxu0 %v588
    %3331 = vmatprep.subr.mxu0 0.0
    %3332 = vmatpush2.msra.mxu0 0.0
    %3333 = vmatprep.subr.mxu0 0.0
    %3334 = vmatpush2.msra.mxu0 0.0
    %3335 = vmatprep.subr.mxu0 0.0
    %3336 = vmatpush2.msra.mxu0 0.0
    %3337 = vmatprep.subr.mxu0 0.0
    %3338 = vmatpush2.msra.mxu0 0.0
    %3339 = vmatprep.subr.mxu0 0.0
    %3340 = vmatpush2.msra.mxu0 0.0
    %3341 = vmatprep.subr.mxu0 0.0
    %3342 = vmatpush2.msra.mxu0 0.0
    %3343 = vmatprep.subr.mxu0 0.0
    %3344 = vmatpush2.msra.mxu0 0.0
    %3345 = vmatprep.subr.mxu0 0.0
    %3346 = vmatpush2.msra.mxu0 0.0
    %3347 = vmatprep.subr.mxu0 0.0
    %3348 = vmatpush2.msra.mxu0 0.0
    %3349 = vmatprep.subr.mxu0 0.0
    %3350 = vmatpush2.msra.mxu0 0.0
    %3351 = vmatprep.subr.mxu0 0.0
    %3352 = vmatpush2.msra.mxu0 0.0
    %3353 = vmatprep.subr.mxu0 0.0
    %3354 = vmatpush2.msra.mxu0 0.0
    %3355 = vmatprep.subr.mxu0 0.0
    %3356 = vmatpush2.msra.mxu0 0.0
    %3357 = vmatprep.subr.mxu0 0.0
    %3358 = vmatpush2.msra.mxu0 0.0
    %3359 = vmatprep.subr.mxu0 0.0
    %3360 = vmatpush2.msra.mxu0 0.0
    %3361 = vmatprep.subr.mxu0 0.0
    %3362 = vmatpush2.msra.mxu0 0.0
    %3363 = vmatprep.mubr.f32.mxu0 0.0
    %3364 = vmatmul.mubr.f32.gmra.mxu0 %v3085
    %v3365 = vpop.f32.mrf.mxu0
    %v3366 = vadd.f32 %v3224, %v3365
    %v3367 = vpop.f32.mrf.mxu0
    %v3368 = vadd.f32 %v3226, %v3367
    %3369 = vdwg.mxu0
    %v3370 = vadd.f32 %v3295, %v1003
    %v3371 = vadd.f32 %v3297, %v1007
    %v3372 = vadd.f32 %v3366, %v1011
    %v3373 = vadd.f32 %v3368, %v1015
    %v3374 = vmul.f32 %v3370, 0.5
    %v3375 = vtanh.pop %v3374
    %v3376 = vmul.f32 %v3375, 0.5
    %v3377 = vadd.f32 %v3376, 0.5
    %v3378 = vmul.f32 %v3371, 0.5
    %v3379 = vtanh.pop %v3378
    %v3380 = vmul.f32 %v3379, 0.5
    %v3381 = vadd.f32 %v3380, 0.5
    %v3382 = vtanh.pop %v3372
    %v3383 = vmul.f32 %v3373, 0.5
    %v3384 = vtanh.pop %v3383
    %v3385 = vmul.f32 %v3384, 0.5
    %v3386 = vadd.f32 %v3385, 0.5
    %v3387 = vmul.f32 %v3381, %v2919
    %v3388 = vmul.f32 %v3377, %v3382
    %v3389 = vadd.f32 %v3387, %v3388
    %v3390 = vtanh.pop %v3389
    %v3391 = vmul.f32 %v3386, %v3390
    %3392 = vmatprep.subr.mxu0 %v419
    %3393 = vmatpush1.msra.mxu0 %v418
    %3394 = vmatprep.subr.mxu0 %v415
    %3395 = vmatpush1.msra.mxu0 %v414
    %3396 = vmatprep.subr.mxu0 %v411
    %3397 = vmatpush1.msra.mxu0 %v410
    %3398 = vmatprep.subr.mxu0 %v407
    %3399 = vmatpush1.msra.mxu0 %v406
    %3400 = vmatprep.subr.mxu0 %v403
    %3401 = vmatpush1.msra.mxu0 %v402
    %3402 = vmatprep.subr.mxu0 %v399
    %3403 = vmatpush1.msra.mxu0 %v398
    %3404 = vmatprep.subr.mxu0 %v395
    %3405 = vmatpush1.msra.mxu0 %v394
    %3406 = vmatprep.subr.mxu0 %v391
    %3407 = vmatpush1.msra.mxu0 %v390
    %3408 = vmatprep.subr.mxu0 %v387
    %3409 = vmatpush1.msra.mxu0 %v386
    %3410 = vmatprep.subr.mxu0 %v383
    %3411 = vmatpush1.msra.mxu0 %v382
    %3412 = vmatprep.subr.mxu0 %v379
    %3413 = vmatpush1.msra.mxu0 %v378
    %3414 = vmatprep.subr.mxu0 %v375
    %3415 = vmatpush1.msra.mxu0 %v374
    %3416 = vmatprep.subr.mxu0 %v371
    %3417 = vmatpush1.msra.mxu0 %v370
    %3418 = vmatprep.subr.mxu0 %v367
    %3419 = vmatpush1.msra.mxu0 %v366
    %3420 = vmatprep.subr.mxu0 %v363
    %3421 = vmatpush1.msra.mxu0 %v362
    %3422 = vmatprep.subr.mxu0 %v359
    %3423 = vmatpush1.msra.mxu0 %v358
    %3424 = vmatprep.subr.mxu0 0.0
    %3425 = vmatpush2.msra.mxu0 0.0
    %3426 = vmatprep.subr.mxu0 0.0
    %3427 = vmatpush2.msra.mxu0 0.0
    %3428 = vmatprep.subr.mxu0 0.0
    %3429 = vmatpush2.msra.mxu0 0.0
    %3430 = vmatprep.subr.mxu0 0.0
    %3431 = vmatpush2.msra.mxu0 0.0
    %3432 = vmatprep.subr.mxu0 0.0
    %3433 = vmatpush2.msra.mxu0 0.0
    %3434 = vmatprep.subr.mxu0 0.0
    %3435 = vmatpush2.msra.mxu0 0.0
    %3436 = vmatprep.subr.mxu0 0.0
    %3437 = vmatpush2.msra.mxu0 0.0
    %3438 = vmatprep.subr.mxu0 0.0
    %3439 = vmatpush2.msra.mxu0 0.0
    %3440 = vmatprep.subr.mxu0 0.0
    %3441 = vmatpush2.msra.mxu0 0.0
    %3442 = vmatprep.subr.mxu0 0.0
    %3443 = vmatpush2.msra.mxu0 0.0
    %3444 = vmatprep.subr.mxu0 0.0
    %3445 = vmatpush2.msra.mxu0 0.0
    %3446 = vmatprep.subr.mxu0 0.0
    %3447 = vmatpush2.msra.mxu0 0.0
    %3448 = vmatprep.subr.mxu0 0.0
    %3449 = vmatpush2.msra.mxu0 0.0
    %3450 = vmatprep.subr.mxu0 0.0
    %3451 = vmatpush2.msra.mxu0 0.0
    %3452 = vmatprep.subr.mxu0 0.0
    %3453 = vmatpush2.msra.mxu0 0.0
    %3454 = vmatprep.subr.mxu0 0.0
    %3455 = vmatpush2.msra.mxu0 0.0
    %3456 = vmatprep.mubr.f32.mxu0 0.0
    %3457 = vmatmul.mubr.f32.gmra.mxu0 %v3085
    %v3458 = vpop.f32.mrf.mxu0
    %v3459 = vadd.f32 0.0, %v3458
    %v3460 = vpop.f32.mrf.mxu0
    %v3461 = vadd.f32 0.0, %v3460
    %3462 = vdwg.mxu0
    %3463 = vmatprep.subr.mxu0 %v421
    %3464 = vmatpush1.msra.mxu0 %v420
    %3465 = vmatprep.subr.mxu0 %v417
    %3466 = vmatpush1.msra.mxu0 %v416
    %3467 = vmatprep.subr.mxu0 %v413
    %3468 = vmatpush1.msra.mxu0 %v412
    %3469 = vmatprep.subr.mxu0 %v409
    %3470 = vmatpush1.msra.mxu0 %v408
    %3471 = vmatprep.subr.mxu0 %v405
    %3472 = vmatpush1.msra.mxu0 %v404
    %3473 = vmatprep.subr.mxu0 %v401
    %3474 = vmatpush1.msra.mxu0 %v400
    %3475 = vmatprep.subr.mxu0 %v397
    %3476 = vmatpush1.msra.mxu0 %v396
    %3477 = vmatprep.subr.mxu0 %v393
    %3478 = vmatpush1.msra.mxu0 %v392
    %3479 = vmatprep.subr.mxu0 %v389
    %3480 = vmatpush1.msra.mxu0 %v388
    %3481 = vmatprep.subr.mxu0 %v385
    %3482 = vmatpush1.msra.mxu0 %v384
    %3483 = vmatprep.subr.mxu0 %v381
    %3484 = vmatpush1.msra.mxu0 %v380
    %3485 = vmatprep.subr.mxu0 %v377
    %3486 = vmatpush1.msra.mxu0 %v376
    %3487 = vmatprep.subr.mxu0 %v373
    %3488 = vmatpush1.msra.mxu0 %v372
    %3489 = vmatprep.subr.mxu0 %v369
    %3490 = vmatpush1.msra.mxu0 %v368
    %3491 = vmatprep.subr.mxu0 %v365
    %3492 = vmatpush1.msra.mxu0 %v364
    %3493 = vmatprep.subr.mxu0 %v361
    %3494 = vmatpush1.msra.mxu0 %v360
    %3495 = vmatprep.subr.mxu0 0.0
    %3496 = vmatpush2.msra.mxu0 0.0
    %3497 = vmatprep.subr.mxu0 0.0
    %3498 = vmatpush2.msra.mxu0 0.0
    %3499 = vmatprep.subr.mxu0 0.0
    %3500 = vmatpush2.msra.mxu0 0.0
    %3501 = vmatprep.subr.mxu0 0.0
    %3502 = vmatpush2.msra.mxu0 0.0
    %3503 = vmatprep.subr.mxu0 0.0
    %3504 = vmatpush2.msra.mxu0 0.0
    %3505 = vmatprep.subr.mxu0 0.0
    %3506 = vmatpush2.msra.mxu0 0.0
    %3507 = vmatprep.subr.mxu0 0.0
    %3508 = vmatpush2.msra.mxu0 0.0
    %3509 = vmatprep.subr.mxu0 0.0
    %3510 = vmatpush2.msra.mxu0 0.0
    %3511 = vmatprep.subr.mxu0 0.0
    %3512 = vmatpush2.msra.mxu0 0.0
    %3513 = vmatprep.subr.mxu0 0.0
    %3514 = vmatpush2.msra.mxu0 0.0
    %3515 = vmatprep.subr.mxu0 0.0
    %3516 = vmatpush2.msra.mxu0 0.0
    %3517 = vmatprep.subr.mxu0 0.0
    %3518 = vmatpush2.msra.mxu0 0.0
    %3519 = vmatprep.subr.mxu0 0.0
    %3520 = vmatpush2.msra.mxu0 0.0
    %3521 = vmatprep.subr.mxu0 0.0
    %3522 = vmatpush2.msra.mxu0 0.0
    %3523 = vmatprep.subr.mxu0 0.0
    %3524 = vmatpush2.msra.mxu0 0.0
    %3525 = vmatprep.subr.mxu0 0.0
    %3526 = vmatpush2.msra.mxu0 0.0
    %3527 = vmatprep.mubr.f32.mxu0 0.0
    %3528 = vmatmul.mubr.f32.gmra.mxu0 %v3085
    %v3529 = vpop.f32.mrf.mxu0
    %v3530 = vadd.f32 0.0, %v3529
    %v3531 = vpop.f32.mrf.mxu0
    %v3532 = vadd.f32 0.0, %v3531
    %3533 = vdwg.mxu0
    %v3534 = vadd.f32 %v235, %v3459
    %v3535 = vadd.f32 %v237, %v3461
    %v3536 = vadd.f32 %v348, %v3530
    %v3537 = vadd.f32 %v350, %v3532
    %v3538 = vmul.f32 %v3534, 0.5
    %v3539 = vtanh.pop %v3538
    %v3540 = vmul.f32 %v3539, 0.5
    %v3541 = vadd.f32 %v3540, 0.5
    %v3542 = vmul.f32 %v3535, 0.5
    %v3543 = vtanh.pop %v3542
    %v3544 = vmul.f32 %v3543, 0.5
    %v3545 = vadd.f32 %v3544, 0.5
    %v3546 = vtanh.pop %v3536
    %v3547 = vmul.f32 %v3537, 0.5
    %v3548 = vtanh.pop %v3547
    %v3549 = vmul.f32 %v3548, 0.5
    %v3550 = vadd.f32 %v3549, 0.5
    %v3551 = vmul.f32 %v3545, %v3083
    %v3552 = vmul.f32 %v3541, %v3546
    %v3553 = vadd.f32 %v3551, %v3552
    %v3554 = vtanh.pop %v3553
    %v3555 = vmul.f32 %v3550, %v3554
    %3556 = vmatprep.subr.mxu0 %v711
    %3557 = vmatpush1.msra.mxu0 %v710
    %3558 = vmatprep.subr.mxu0 %v707
    %3559 = vmatpush1.msra.mxu0 %v706
    %3560 = vmatprep.subr.mxu0 %v703
    %3561 = vmatpush1.msra.mxu0 %v702
    %3562 = vmatprep.subr.mxu0 %v699
    %3563 = vmatpush1.msra.mxu0 %v698
    %3564 = vmatprep.subr.mxu0 %v695
    %3565 = vmatpush1.msra.mxu0 %v694
    %3566 = vmatprep.subr.mxu0 %v691
    %3567 = vmatpush1.msra.mxu0 %v690
    %3568 = vmatprep.subr.mxu0 %v687
    %3569 = vmatpush1.msra.mxu0 %v686
    %3570 = vmatprep.subr.mxu0 %v683
    %3571 = vmatpush1.msra.mxu0 %v682
    %3572 = vmatprep.subr.mxu0 %v679
    %3573 = vmatpush1.msra.mxu0 %v678
    %3574 = vmatprep.subr.mxu0 %v675
    %3575 = vmatpush1.msra.mxu0 %v674
    %3576 = vmatprep.subr.mxu0 %v671
    %3577 = vmatpush1.msra.mxu0 %v670
    %3578 = vmatprep.subr.mxu0 %v667
    %3579 = vmatpush1.msra.mxu0 %v666
    %3580 = vmatprep.subr.mxu0 %v663
    %3581 = vmatpush1.msra.mxu0 %v662
    %3582 = vmatprep.subr.mxu0 %v659
    %3583 = vmatpush1.msra.mxu0 %v658
    %3584 = vmatprep.subr.mxu0 %v655
    %3585 = vmatpush1.msra.mxu0 %v654
    %3586 = vmatprep.subr.mxu0 %v651
    %3587 = vmatpush1.msra.mxu0 %v650
    %3588 = vmatprep.subr.mxu0 0.0
    %3589 = vmatpush2.msra.mxu0 0.0
    %3590 = vmatprep.subr.mxu0 0.0
    %3591 = vmatpush2.msra.mxu0 0.0
    %3592 = vmatprep.subr.mxu0 0.0
    %3593 = vmatpush2.msra.mxu0 0.0
    %3594 = vmatprep.subr.mxu0 0.0
    %3595 = vmatpush2.msra.mxu0 0.0
    %3596 = vmatprep.subr.mxu0 0.0
    %3597 = vmatpush2.msra.mxu0 0.0
    %3598 = vmatprep.subr.mxu0 0.0
    %3599 = vmatpush2.msra.mxu0 0.0
    %3600 = vmatprep.subr.mxu0 0.0
    %3601 = vmatpush2.msra.mxu0 0.0
    %3602 = vmatprep.subr.mxu0 0.0
    %3603 = vmatpush2.msra.mxu0 0.0
    %3604 = vmatprep.subr.mxu0 0.0
    %3605 = vmatpush2.msra.mxu0 0.0
    %3606 = vmatprep.subr.mxu0 0.0
    %3607 = vmatpush2.msra.mxu0 0.0
    %3608 = vmatprep.subr.mxu0 0.0
    %3609 = vmatpush2.msra.mxu0 0.0
    %3610 = vmatprep.subr.mxu0 0.0
    %3611 = vmatpush2.msra.mxu0 0.0
    %3612 = vmatprep.subr.mxu0 0.0
    %3613 = vmatpush2.msra.mxu0 0.0
    %3614 = vmatprep.subr.mxu0 0.0
    %3615 = vmatpush2.msra.mxu0 0.0
    %3616 = vmatprep.subr.mxu0 0.0
    %3617 = vmatpush2.msra.mxu0 0.0
    %3618 = vmatprep.subr.mxu0 0.0
    %3619 = vmatpush2.msra.mxu0 0.0
    %3620 = vmatprep.mubr.f32.mxu0 0.0
    %3621 = vmatmul.mubr.f32.gmra.mxu0 %v3391
    %v3622 = vpop.f32.mrf.mxu0
    %v3623 = vadd.f32 0.0, %v3622
    %v3624 = vpop.f32.mrf.mxu0
    %v3625 = vadd.f32 0.0, %v3624
    %3626 = vdwg.mxu0
    %3627 = vmatprep.subr.mxu0 %v713
    %3628 = vmatpush1.msra.mxu0 %v712
    %3629 = vmatprep.subr.mxu0 %v709
    %3630 = vmatpush1.msra.mxu0 %v708
    %3631 = vmatprep.subr.mxu0 %v705
    %3632 = vmatpush1.msra.mxu0 %v704
    %3633 = vmatprep.subr.mxu0 %v701
    %3634 = vmatpush1.msra.mxu0 %v700
    %3635 = vmatprep.subr.mxu0 %v697
    %3636 = vmatpush1.msra.mxu0 %v696
    %3637 = vmatprep.subr.mxu0 %v693
    %3638 = vmatpush1.msra.mxu0 %v692
    %3639 = vmatprep.subr.mxu0 %v689
    %3640 = vmatpush1.msra.mxu0 %v688
    %3641 = vmatprep.subr.mxu0 %v685
    %3642 = vmatpush1.msra.mxu0 %v684
    %3643 = vmatprep.subr.mxu0 %v681
    %3644 = vmatpush1.msra.mxu0 %v680
    %3645 = vmatprep.subr.mxu0 %v677
    %3646 = vmatpush1.msra.mxu0 %v676
    %3647 = vmatprep.subr.mxu0 %v673
    %3648 = vmatpush1.msra.mxu0 %v672
    %3649 = vmatprep.subr.mxu0 %v669
    %3650 = vmatpush1.msra.mxu0 %v668
    %3651 = vmatprep.subr.mxu0 %v665
    %3652 = vmatpush1.msra.mxu0 %v664
    %3653 = vmatprep.subr.mxu0 %v661
    %3654 = vmatpush1.msra.mxu0 %v660
    %3655 = vmatprep.subr.mxu0 %v657
    %3656 = vmatpush1.msra.mxu0 %v656
    %3657 = vmatprep.subr.mxu0 %v653
    %3658 = vmatpush1.msra.mxu0 %v652
    %3659 = vmatprep.subr.mxu0 0.0
    %3660 = vmatpush2.msra.mxu0 0.0
    %3661 = vmatprep.subr.mxu0 0.0
    %3662 = vmatpush2.msra.mxu0 0.0
    %3663 = vmatprep.subr.mxu0 0.0
    %3664 = vmatpush2.msra.mxu0 0.0
    %3665 = vmatprep.subr.mxu0 0.0
    %3666 = vmatpush2.msra.mxu0 0.0
    %3667 = vmatprep.subr.mxu0 0.0
    %3668 = vmatpush2.msra.mxu0 0.0
    %3669 = vmatprep.subr.mxu0 0.0
    %3670 = vmatpush2.msra.mxu0 0.0
    %3671 = vmatprep.subr.mxu0 0.0
    %3672 = vmatpush2.msra.mxu0 0.0
    %3673 = vmatprep.subr.mxu0 0.0
    %3674 = vmatpush2.msra.mxu0 0.0
    %3675 = vmatprep.subr.mxu0 0.0
    %3676 = vmatpush2.msra.mxu0 0.0
    %3677 = vmatprep.subr.mxu0 0.0
    %3678 = vmatpush2.msra.mxu0 0.0
    %3679 = vmatprep.subr.mxu0 0.0
    %3680 = vmatpush2.msra.mxu0 0.0
    %3681 = vmatprep.subr.mxu0 0.0
    %3682 = vmatpush2.msra.mxu0 0.0
    %3683 = vmatprep.subr.mxu0 0.0
    %3684 = vmatpush2.msra.mxu0 0.0
    %3685 = vmatprep.subr.mxu0 0.0
    %3686 = vmatpush2.msra.mxu0 0.0
    %3687 = vmatprep.subr.mxu0 0.0
    %3688 = vmatpush2.msra.mxu0 0.0
    %3689 = vmatprep.subr.mxu0 0.0
    %3690 = vmatpush2.msra.mxu0 0.0
    %3691 = vmatprep.mubr.f32.mxu0 0.0
    %3692 = vmatmul.mubr.f32.gmra.mxu0 %v3391
    %v3693 = vpop.f32.mrf.mxu0
    %v3694 = vadd.f32 0.0, %v3693
    %v3695 = vpop.f32.mrf.mxu0
    %v3696 = vadd.f32 0.0, %v3695
    %3697 = vdwg.mxu0
    %3698 = vmatprep.subr.mxu0 %v647
    %3699 = vmatpush1.msra.mxu0 %v646
    %3700 = vmatprep.subr.mxu0 %v643
    %3701 = vmatpush1.msra.mxu0 %v642
    %3702 = vmatprep.subr.mxu0 %v639
    %3703 = vmatpush1.msra.mxu0 %v638
    %3704 = vmatprep.subr.mxu0 %v635
    %3705 = vmatpush1.msra.mxu0 %v634
    %3706 = vmatprep.subr.mxu0 %v631
    %3707 = vmatpush1.msra.mxu0 %v630
    %3708 = vmatprep.subr.mxu0 %v627
    %3709 = vmatpush1.msra.mxu0 %v626
    %3710 = vmatprep.subr.mxu0 %v623
    %3711 = vmatpush1.msra.mxu0 %v622
    %3712 = vmatprep.subr.mxu0 %v619
    %3713 = vmatpush1.msra.mxu0 %v618
    %3714 = vmatprep.subr.mxu0 %v615
    %3715 = vmatpush1.msra.mxu0 %v614
    %3716 = vmatprep.subr.mxu0 %v611
    %3717 = vmatpush1.msra.mxu0 %v610
    %3718 = vmatprep.subr.mxu0 %v607
    %3719 = vmatpush1.msra.mxu0 %v606
    %3720 = vmatprep.subr.mxu0 %v603
    %3721 = vmatpush1.msra.mxu0 %v602
    %3722 = vmatprep.subr.mxu0 %v599
    %3723 = vmatpush1.msra.mxu0 %v598
    %3724 = vmatprep.subr.mxu0 %v595
    %3725 = vmatpush1.msra.mxu0 %v594
    %3726 = vmatprep.subr.mxu0 %v591
    %3727 = vmatpush1.msra.mxu0 %v590
    %3728 = vmatprep.subr.mxu0 %v587
    %3729 = vmatpush1.msra.mxu0 %v586
    %3730 = vmatprep.subr.mxu0 0.0
    %3731 = vmatpush2.msra.mxu0 0.0
    %3732 = vmatprep.subr.mxu0 0.0
    %3733 = vmatpush2.msra.mxu0 0.0
    %3734 = vmatprep.subr.mxu0 0.0
    %3735 = vmatpush2.msra.mxu0 0.0
    %3736 = vmatprep.subr.mxu0 0.0
    %3737 = vmatpush2.msra.mxu0 0.0
    %3738 = vmatprep.subr.mxu0 0.0
    %3739 = vmatpush2.msra.mxu0 0.0
    %3740 = vmatprep.subr.mxu0 0.0
    %3741 = vmatpush2.msra.mxu0 0.0
    %3742 = vmatprep.subr.mxu0 0.0
    %3743 = vmatpush2.msra.mxu0 0.0
    %3744 = vmatprep.subr.mxu0 0.0
    %3745 = vmatpush2.msra.mxu0 0.0
    %3746 = vmatprep.subr.mxu0 0.0
    %3747 = vmatpush2.msra.mxu0 0.0
    %3748 = vmatprep.subr.mxu0 0.0
    %3749 = vmatpush2.msra.mxu0 0.0
    %3750 = vmatprep.subr.mxu0 0.0
    %3751 = vmatpush2.msra.mxu0 0.0
    %3752 = vmatprep.subr.mxu0 0.0
    %3753 = vmatpush2.msra.mxu0 0.0
    %3754 = vmatprep.subr.mxu0 0.0
    %3755 = vmatpush2.msra.mxu0 0.0
    %3756 = vmatprep.subr.mxu0 0.0
    %3757 = vmatpush2.msra.mxu0 0.0
    %3758 = vmatprep.subr.mxu0 0.0
    %3759 = vmatpush2.msra.mxu0 0.0
    %3760 = vmatprep.subr.mxu0 0.0
    %3761 = vmatpush2.msra.mxu0 0.0
    %3762 = vmatprep.mubr.f32.mxu0 0.0
    %3763 = vmatmul.mubr.f32.gmra.mxu0 %v3555
    %v3764 = vpop.f32.mrf.mxu0
    %v3765 = vadd.f32 %v3623, %v3764
    %v3766 = vpop.f32.mrf.mxu0
    %v3767 = vadd.f32 %v3625, %v3766
    %3768 = vdwg.mxu0
    %3769 = vmatprep.subr.mxu0 %v649
    %3770 = vmatpush1.msra.mxu0 %v648
    %3771 = vmatprep.subr.mxu0 %v645
    %3772 = vmatpush1.msra.mxu0 %v644
    %3773 = vmatprep.subr.mxu0 %v641
    %3774 = vmatpush1.msra.mxu0 %v640
    %3775 = vmatprep.subr.mxu0 %v637
    %3776 = vmatpush1.msra.mxu0 %v636
    %3777 = vmatprep.subr.mxu0 %v633
    %3778 = vmatpush1.msra.mxu0 %v632
    %3779 = vmatprep.subr.mxu0 %v629
    %3780 = vmatpush1.msra.mxu0 %v628
    %3781 = vmatprep.subr.mxu0 %v625
    %3782 = vmatpush1.msra.mxu0 %v624
    %3783 = vmatprep.subr.mxu0 %v621
    %3784 = vmatpush1.msra.mxu0 %v620
    %3785 = vmatprep.subr.mxu0 %v617
    %3786 = vmatpush1.msra.mxu0 %v616
    %3787 = vmatprep.subr.mxu0 %v613
    %3788 = vmatpush1.msra.mxu0 %v612
    %3789 = vmatprep.subr.mxu0 %v609
    %3790 = vmatpush1.msra.mxu0 %v608
    %3791 = vmatprep.subr.mxu0 %v605
    %3792 = vmatpush1.msra.mxu0 %v604
    %3793 = vmatprep.subr.mxu0 %v601
    %3794 = vmatpush1.msra.mxu0 %v600
    %3795 = vmatprep.subr.mxu0 %v597
    %3796 = vmatpush1.msra.mxu0 %v596
    %3797 = vmatprep.subr.mxu0 %v593
    %3798 = vmatpush1.msra.mxu0 %v592
    %3799 = vmatprep.subr.mxu0 %v589
    %3800 = vmatpush1.msra.mxu0 %v588
    %3801 = vmatprep.subr.mxu0 0.0
    %3802 = vmatpush2.msra.mxu0 0.0
    %3803 = vmatprep.subr.mxu0 0.0
    %3804 = vmatpush2.msra.mxu0 0.0
    %3805 = vmatprep.subr.mxu0 0.0
    %3806 = vmatpush2.msra.mxu0 0.0
    %3807 = vmatprep.subr.mxu0 0.0
    %3808 = vmatpush2.msra.mxu0 0.0
    %3809 = vmatprep.subr.mxu0 0.0
    %3810 = vmatpush2.msra.mxu0 0.0
    %3811 = vmatprep.subr.mxu0 0.0
    %3812 = vmatpush2.msra.mxu0 0.0
    %3813 = vmatprep.subr.mxu0 0.0
    %3814 = vmatpush2.msra.mxu0 0.0
    %3815 = vmatprep.subr.mxu0 0.0
    %3816 = vmatpush2.msra.mxu0 0.0
    %3817 = vmatprep.subr.mxu0 0.0
    %3818 = vmatpush2.msra.mxu0 0.0
    %3819 = vmatprep.subr.mxu0 0.0
    %3820 = vmatpush2.msra.mxu0 0.0
    %3821 = vmatprep.subr.mxu0 0.0
    %3822 = vmatpush2.msra.mxu0 0.0
    %3823 = vmatprep.subr.mxu0 0.0
    %3824 = vmatpush2.msra.mxu0 0.0
    %3825 = vmatprep.subr.mxu0 0.0
    %3826 = vmatpush2.msra.mxu0 0.0
    %3827 = vmatprep.subr.mxu0 0.0
    %3828 = vmatpush2.msra.mxu0 0.0
    %3829 = vmatprep.subr.mxu0 0.0
    %3830 = vmatpush2.msra.mxu0 0.0
    %3831 = vmatprep.subr.mxu0 0.0
    %3832 = vmatpush2.msra.mxu0 0.0
    %3833 = vmatprep.mubr.f32.mxu0 0.0
    %3834 = vmatmul.mubr.f32.gmra.mxu0 %v3555
    %v3835 = vpop.f32.mrf.mxu0
    %v3836 = vadd.f32 %v3694, %v3835
    %v3837 = vpop.f32.mrf.mxu0
    %v3838 = vadd.f32 %v3696, %v3837
    %3839 = vdwg.mxu0
    %v3840 = vadd.f32 %v3765, %v1003
    %v3841 = vadd.f32 %v3767, %v1007
    %v3842 = vadd.f32 %v3836, %v1011
    %v3843 = vadd.f32 %v3838, %v1015
    %v3844 = vmul.f32 %v3840, 0.5
    %v3845 = vtanh.pop %v3844
    %v3846 = vmul.f32 %v3845, 0.5
    %v3847 = vadd.f32 %v3846, 0.5
    %v3848 = vmul.f32 %v3841, 0.5
    %v3849 = vtanh.pop %v3848
    %v3850 = vmul.f32 %v3849, 0.5
    %v3851 = vadd.f32 %v3850, 0.5
    %v3852 = vtanh.pop %v3842
    %v3853 = vmul.f32 %v3843, 0.5
    %v3854 = vtanh.pop %v3853
    %v3855 = vmul.f32 %v3854, 0.5
    %v3856 = vadd.f32 %v3855, 0.5
    %v3857 = vmul.f32 %v3851, %v3389
    %v3858 = vmul.f32 %v3847, %v3852
    %v3859 = vadd.f32 %v3857, %v3858
    %v3860 = vtanh.pop %v3859
    %v3861 = vmul.f32 %v3856, %v3860
    %3862 = vmatprep.subr.mxu0 %v419
    %3863 = vmatpush1.msra.mxu0 %v418
    %3864 = vmatprep.subr.mxu0 %v415
    %3865 = vmatpush1.msra.mxu0 %v414
    %3866 = vmatprep.subr.mxu0 %v411
    %3867 = vmatpush1.msra.mxu0 %v410
    %3868 = vmatprep.subr.mxu0 %v407
    %3869 = vmatpush1.msra.mxu0 %v406
    %3870 = vmatprep.subr.mxu0 %v403
    %3871 = vmatpush1.msra.mxu0 %v402
    %3872 = vmatprep.subr.mxu0 %v399
    %3873 = vmatpush1.msra.mxu0 %v398
    %3874 = vmatprep.subr.mxu0 %v395
    %3875 = vmatpush1.msra.mxu0 %v394
    %3876 = vmatprep.subr.mxu0 %v391
    %3877 = vmatpush1.msra.mxu0 %v390
    %3878 = vmatprep.subr.mxu0 %v387
    %3879 = vmatpush1.msra.mxu0 %v386
    %3880 = vmatprep.subr.mxu0 %v383
    %3881 = vmatpush1.msra.mxu0 %v382
    %3882 = vmatprep.subr.mxu0 %v379
    %3883 = vmatpush1.msra.mxu0 %v378
    %3884 = vmatprep.subr.mxu0 %v375
    %3885 = vmatpush1.msra.mxu0 %v374
    %3886 = vmatprep.subr.mxu0 %v371
    %3887 = vmatpush1.msra.mxu0 %v370
    %3888 = vmatprep.subr.mxu0 %v367
    %3889 = vmatpush1.msra.mxu0 %v366
    %3890 = vmatprep.subr.mxu0 %v363
    %3891 = vmatpush1.msra.mxu0 %v362
    %3892 = vmatprep.subr.mxu0 %v359
    %3893 = vmatpush1.msra.mxu0 %v358
    %3894 = vmatprep.subr.mxu0 0.0
    %3895 = vmatpush2.msra.mxu0 0.0
    %3896 = vmatprep.subr.mxu0 0.0
    %3897 = vmatpush2.msra.mxu0 0.0
    %3898 = vmatprep.subr.mxu0 0.0
    %3899 = vmatpush2.msra.mxu0 0.0
    %3900 = vmatprep.subr.mxu0 0.0
    %3901 = vmatpush2.msra.mxu0 0.0
    %3902 = vmatprep.subr.mxu0 0.0
    %3903 = vmatpush2.msra.mxu0 0.0
    %3904 = vmatprep.subr.mxu0 0.0
    %3905 = vmatpush2.msra.mxu0 0.0
    %3906 = vmatprep.subr.mxu0 0.0
    %3907 = vmatpush2.msra.mxu0 0.0
    %3908 = vmatprep.subr.mxu0 0.0
    %3909 = vmatpush2.msra.mxu0 0.0
    %3910 = vmatprep.subr.mxu0 0.0
    %3911 = vmatpush2.msra.mxu0 0.0
    %3912 = vmatprep.subr.mxu0 0.0
    %3913 = vmatpush2.msra.mxu0 0.0
    %3914 = vmatprep.subr.mxu0 0.0
    %3915 = vmatpush2.msra.mxu0 0.0
    %3916 = vmatprep.subr.mxu0 0.0
    %3917 = vmatpush2.msra.mxu0 0.0
    %3918 = vmatprep.subr.mxu0 0.0
    %3919 = vmatpush2.msra.mxu0 0.0
    %3920 = vmatprep.subr.mxu0 0.0
    %3921 = vmatpush2.msra.mxu0 0.0
    %3922 = vmatprep.subr.mxu0 0.0
    %3923 = vmatpush2.msra.mxu0 0.0
    %3924 = vmatprep.subr.mxu0 0.0
    %3925 = vmatpush2.msra.mxu0 0.0
    %3926 = vmatprep.mubr.f32.mxu0 0.0
    %3927 = vmatmul.mubr.f32.gmra.mxu0 %v3555
    %v3928 = vpop.f32.mrf.mxu0
    %v3929 = vadd.f32 0.0, %v3928
    %v3930 = vpop.f32.mrf.mxu0
    %v3931 = vadd.f32 0.0, %v3930
    %3932 = vdwg.mxu0
    %3933 = vmatprep.subr.mxu0 %v421
    %3934 = vmatpush1.msra.mxu0 %v420
    %3935 = vmatprep.subr.mxu0 %v417
    %3936 = vmatpush1.msra.mxu0 %v416
    %3937 = vmatprep.subr.mxu0 %v413
    %3938 = vmatpush1.msra.mxu0 %v412
    %3939 = vmatprep.subr.mxu0 %v409
    %3940 = vmatpush1.msra.mxu0 %v408
    %3941 = vmatprep.subr.mxu0 %v405
    %3942 = vmatpush1.msra.mxu0 %v404
    %3943 = vmatprep.subr.mxu0 %v401
    %3944 = vmatpush1.msra.mxu0 %v400
    %3945 = vmatprep.subr.mxu0 %v397
    %3946 = vmatpush1.msra.mxu0 %v396
    %3947 = vmatprep.subr.mxu0 %v393
    %3948 = vmatpush1.msra.mxu0 %v392
    %3949 = vmatprep.subr.mxu0 %v389
    %3950 = vmatpush1.msra.mxu0 %v388
    %3951 = vmatprep.subr.mxu0 %v385
    %3952 = vmatpush1.msra.mxu0 %v384
    %3953 = vmatprep.subr.mxu0 %v381
    %3954 = vmatpush1.msra.mxu0 %v380
    %3955 = vmatprep.subr.mxu0 %v377
    %3956 = vmatpush1.msra.mxu0 %v376
    %3957 = vmatprep.subr.mxu0 %v373
    %3958 = vmatpush1.msra.mxu0 %v372
    %3959 = vmatprep.subr.mxu0 %v369
    %3960 = vmatpush1.msra.mxu0 %v368
    %3961 = vmatprep.subr.mxu0 %v365
    %3962 = vmatpush1.msra.mxu0 %v364
    %3963 = vmatprep.subr.mxu0 %v361
    %3964 = vmatpush1.msra.mxu0 %v360
    %3965 = vmatprep.subr.mxu0 0.0
    %3966 = vmatpush2.msra.mxu0 0.0
    %3967 = vmatprep.subr.mxu0 0.0
    %3968 = vmatpush2.msra.mxu0 0.0
    %3969 = vmatprep.subr.mxu0 0.0
    %3970 = vmatpush2.msra.mxu0 0.0
    %3971 = vmatprep.subr.mxu0 0.0
    %3972 = vmatpush2.msra.mxu0 0.0
    %3973 = vmatprep.subr.mxu0 0.0
    %3974 = vmatpush2.msra.mxu0 0.0
    %3975 = vmatprep.subr.mxu0 0.0
    %3976 = vmatpush2.msra.mxu0 0.0
    %3977 = vmatprep.subr.mxu0 0.0
    %3978 = vmatpush2.msra.mxu0 0.0
    %3979 = vmatprep.subr.mxu0 0.0
    %3980 = vmatpush2.msra.mxu0 0.0
    %3981 = vmatprep.subr.mxu0 0.0
    %3982 = vmatpush2.msra.mxu0 0.0
    %3983 = vmatprep.subr.mxu0 0.0
    %3984 = vmatpush2.msra.mxu0 0.0
    %3985 = vmatprep.subr.mxu0 0.0
    %3986 = vmatpush2.msra.mxu0 0.0
    %3987 = vmatprep.subr.mxu0 0.0
    %3988 = vmatpush2.msra.mxu0 0.0
    %3989 = vmatprep.subr.mxu0 0.0
    %3990 = vmatpush2.msra.mxu0 0.0
    %3991 = vmatprep.subr.mxu0 0.0
    %3992 = vmatpush2.msra.mxu0 0.0
    %3993 = vmatprep.subr.mxu0 0.0
    %3994 = vmatpush2.msra.mxu0 0.0
    %3995 = vmatprep.subr.mxu0 0.0
    %3996 = vmatpush2.msra.mxu0 0.0
    %3997 = vmatprep.mubr.f32.mxu0 0.0
    %3998 = vmatmul.mubr.f32.gmra.mxu0 %v3555
    %v3999 = vpop.f32.mrf.mxu0
    %v4000 = vadd.f32 0.0, %v3999
    %v4001 = vpop.f32.mrf.mxu0
    %v4002 = vadd.f32 0.0, %v4001
    %4003 = vdwg.mxu0
    %v4004 = vadd.f32 %v241, %v3929
    %v4005 = vadd.f32 %v243, %v3931
    %v4006 = vadd.f32 %v354, %v4000
    %v4007 = vadd.f32 %v356, %v4002
    %v4008 = vmul.f32 %v4004, 0.5
    %v4009 = vtanh.pop %v4008
    %v4010 = vmul.f32 %v4009, 0.5
    %v4011 = vadd.f32 %v4010, 0.5
    %v4012 = vmul.f32 %v4005, 0.5
    %v4013 = vtanh.pop %v4012
    %v4014 = vmul.f32 %v4013, 0.5
    %v4015 = vadd.f32 %v4014, 0.5
    %v4016 = vtanh.pop %v4006
    %v4017 = vmul.f32 %v4007, 0.5
    %v4018 = vtanh.pop %v4017
    %v4019 = vmul.f32 %v4018, 0.5
    %v4020 = vadd.f32 %v4019, 0.5
    %v4021 = vmul.f32 %v4015, %v3553
    %v4022 = vmul.f32 %v4011, %v4016
    %v4023 = vadd.f32 %v4021, %v4022
    %v4024 = vtanh.pop %v4023
    %v4025 = vmul.f32 %v4020, %v4024
    %4026 = vmatprep.subr.mxu0 %v711
    %4027 = vmatpush1.msra.mxu0 %v710
    %4028 = vmatprep.subr.mxu0 %v707
    %4029 = vmatpush1.msra.mxu0 %v706
    %4030 = vmatprep.subr.mxu0 %v703
    %4031 = vmatpush1.msra.mxu0 %v702
    %4032 = vmatprep.subr.mxu0 %v699
    %4033 = vmatpush1.msra.mxu0 %v698
    %4034 = vmatprep.subr.mxu0 %v695
    %4035 = vmatpush1.msra.mxu0 %v694
    %4036 = vmatprep.subr.mxu0 %v691
    %4037 = vmatpush1.msra.mxu0 %v690
    %4038 = vmatprep.subr.mxu0 %v687
    %4039 = vmatpush1.msra.mxu0 %v686
    %4040 = vmatprep.subr.mxu0 %v683
    %4041 = vmatpush1.msra.mxu0 %v682
    %4042 = vmatprep.subr.mxu0 %v679
    %4043 = vmatpush1.msra.mxu0 %v678
    %4044 = vmatprep.subr.mxu0 %v675
    %4045 = vmatpush1.msra.mxu0 %v674
    %4046 = vmatprep.subr.mxu0 %v671
    %4047 = vmatpush1.msra.mxu0 %v670
    %4048 = vmatprep.subr.mxu0 %v667
    %4049 = vmatpush1.msra.mxu0 %v666
    %4050 = vmatprep.subr.mxu0 %v663
    %4051 = vmatpush1.msra.mxu0 %v662
    %4052 = vmatprep.subr.mxu0 %v659
    %4053 = vmatpush1.msra.mxu0 %v658
    %4054 = vmatprep.subr.mxu0 %v655
    %4055 = vmatpush1.msra.mxu0 %v654
    %4056 = vmatprep.subr.mxu0 %v651
    %4057 = vmatpush1.msra.mxu0 %v650
    %4058 = vmatprep.subr.mxu0 0.0
    %4059 = vmatpush2.msra.mxu0 0.0
    %4060 = vmatprep.subr.mxu0 0.0
    %4061 = vmatpush2.msra.mxu0 0.0
    %4062 = vmatprep.subr.mxu0 0.0
    %4063 = vmatpush2.msra.mxu0 0.0
    %4064 = vmatprep.subr.mxu0 0.0
    %4065 = vmatpush2.msra.mxu0 0.0
    %4066 = vmatprep.subr.mxu0 0.0
    %4067 = vmatpush2.msra.mxu0 0.0
    %4068 = vmatprep.subr.mxu0 0.0
    %4069 = vmatpush2.msra.mxu0 0.0
    %4070 = vmatprep.subr.mxu0 0.0
    %4071 = vmatpush2.msra.mxu0 0.0
    %4072 = vmatprep.subr.mxu0 0.0
    %4073 = vmatpush2.msra.mxu0 0.0
    %4074 = vmatprep.subr.mxu0 0.0
    %4075 = vmatpush2.msra.mxu0 0.0
    %4076 = vmatprep.subr.mxu0 0.0
    %4077 = vmatpush2.msra.mxu0 0.0
    %4078 = vmatprep.subr.mxu0 0.0
    %4079 = vmatpush2.msra.mxu0 0.0
    %4080 = vmatprep.subr.mxu0 0.0
    %4081 = vmatpush2.msra.mxu0 0.0
    %4082 = vmatprep.subr.mxu0 0.0
    %4083 = vmatpush2.msra.mxu0 0.0
    %4084 = vmatprep.subr.mxu0 0.0
    %4085 = vmatpush2.msra.mxu0 0.0
    %4086 = vmatprep.subr.mxu0 0.0
    %4087 = vmatpush2.msra.mxu0 0.0
    %4088 = vmatprep.subr.mxu0 0.0
    %4089 = vmatpush2.msra.mxu0 0.0
    %4090 = vmatprep.mubr.f32.mxu0 0.0
    %4091 = vmatmul.mubr.f32.gmra.mxu0 %v3861
    %v4092 = vpop.f32.mrf.mxu0
    %v4093 = vadd.f32 0.0, %v4092
    %v4094 = vpop.f32.mrf.mxu0
    %v4095 = vadd.f32 0.0, %v4094
    %4096 = vdwg.mxu0
    %4097 = vmatprep.subr.mxu0 %v713
    %4098 = vmatpush1.msra.mxu0 %v712
    %4099 = vmatprep.subr.mxu0 %v709
    %4100 = vmatpush1.msra.mxu0 %v708
    %4101 = vmatprep.subr.mxu0 %v705
    %4102 = vmatpush1.msra.mxu0 %v704
    %4103 = vmatprep.subr.mxu0 %v701
    %4104 = vmatpush1.msra.mxu0 %v700
    %4105 = vmatprep.subr.mxu0 %v697
    %4106 = vmatpush1.msra.mxu0 %v696
    %4107 = vmatprep.subr.mxu0 %v693
    %4108 = vmatpush1.msra.mxu0 %v692
    %4109 = vmatprep.subr.mxu0 %v689
    %4110 = vmatpush1.msra.mxu0 %v688
    %4111 = vmatprep.subr.mxu0 %v685
    %4112 = vmatpush1.msra.mxu0 %v684
    %4113 = vmatprep.subr.mxu0 %v681
    %4114 = vmatpush1.msra.mxu0 %v680
    %4115 = vmatprep.subr.mxu0 %v677
    %4116 = vmatpush1.msra.mxu0 %v676
    %4117 = vmatprep.subr.mxu0 %v673
    %4118 = vmatpush1.msra.mxu0 %v672
    %4119 = vmatprep.subr.mxu0 %v669
    %4120 = vmatpush1.msra.mxu0 %v668
    %4121 = vmatprep.subr.mxu0 %v665
    %4122 = vmatpush1.msra.mxu0 %v664
    %4123 = vmatprep.subr.mxu0 %v661
    %4124 = vmatpush1.msra.mxu0 %v660
    %4125 = vmatprep.subr.mxu0 %v657
    %4126 = vmatpush1.msra.mxu0 %v656
    %4127 = vmatprep.subr.mxu0 %v653
    %4128 = vmatpush1.msra.mxu0 %v652
    %4129 = vmatprep.subr.mxu0 0.0
    %4130 = vmatpush2.msra.mxu0 0.0
    %4131 = vmatprep.subr.mxu0 0.0
    %4132 = vmatpush2.msra.mxu0 0.0
    %4133 = vmatprep.subr.mxu0 0.0
    %4134 = vmatpush2.msra.mxu0 0.0
    %4135 = vmatprep.subr.mxu0 0.0
    %4136 = vmatpush2.msra.mxu0 0.0
    %4137 = vmatprep.subr.mxu0 0.0
    %4138 = vmatpush2.msra.mxu0 0.0
    %4139 = vmatprep.subr.mxu0 0.0
    %4140 = vmatpush2.msra.mxu0 0.0
    %4141 = vmatprep.subr.mxu0 0.0
    %4142 = vmatpush2.msra.mxu0 0.0
    %4143 = vmatprep.subr.mxu0 0.0
    %4144 = vmatpush2.msra.mxu0 0.0
    %4145 = vmatprep.subr.mxu0 0.0
    %4146 = vmatpush2.msra.mxu0 0.0
    %4147 = vmatprep.subr.mxu0 0.0
    %4148 = vmatpush2.msra.mxu0 0.0
    %4149 = vmatprep.subr.mxu0 0.0
    %4150 = vmatpush2.msra.mxu0 0.0
    %4151 = vmatprep.subr.mxu0 0.0
    %4152 = vmatpush2.msra.mxu0 0.0
    %4153 = vmatprep.subr.mxu0 0.0
    %4154 = vmatpush2.msra.mxu0 0.0
    %4155 = vmatprep.subr.mxu0 0.0
    %4156 = vmatpush2.msra.mxu0 0.0
    %4157 = vmatprep.subr.mxu0 0.0
    %4158 = vmatpush2.msra.mxu0 0.0
    %4159 = vmatprep.subr.mxu0 0.0
    %4160 = vmatpush2.msra.mxu0 0.0
    %4161 = vmatprep.mubr.f32.mxu0 0.0
    %4162 = vmatmul.mubr.f32.gmra.mxu0 %v3861
    %v4163 = vpop.f32.mrf.mxu0
    %v4164 = vadd.f32 0.0, %v4163
    %v4165 = vpop.f32.mrf.mxu0
    %v4166 = vadd.f32 0.0, %v4165
    %4167 = vdwg.mxu0
    %4168 = vmatprep.subr.mxu0 %v647
    %4169 = vmatpush1.msra.mxu0 %v646
    %4170 = vmatprep.subr.mxu0 %v643
    %4171 = vmatpush1.msra.mxu0 %v642
    %4172 = vmatprep.subr.mxu0 %v639
    %4173 = vmatpush1.msra.mxu0 %v638
    %4174 = vmatprep.subr.mxu0 %v635
    %4175 = vmatpush1.msra.mxu0 %v634
    %4176 = vmatprep.subr.mxu0 %v631
    %4177 = vmatpush1.msra.mxu0 %v630
    %4178 = vmatprep.subr.mxu0 %v627
    %4179 = vmatpush1.msra.mxu0 %v626
    %4180 = vmatprep.subr.mxu0 %v623
    %4181 = vmatpush1.msra.mxu0 %v622
    %4182 = vmatprep.subr.mxu0 %v619
    %4183 = vmatpush1.msra.mxu0 %v618
    %4184 = vmatprep.subr.mxu0 %v615
    %4185 = vmatpush1.msra.mxu0 %v614
    %4186 = vmatprep.subr.mxu0 %v611
    %4187 = vmatpush1.msra.mxu0 %v610
    %4188 = vmatprep.subr.mxu0 %v607
    %4189 = vmatpush1.msra.mxu0 %v606
    %4190 = vmatprep.subr.mxu0 %v603
    %4191 = vmatpush1.msra.mxu0 %v602
    %4192 = vmatprep.subr.mxu0 %v599
    %4193 = vmatpush1.msra.mxu0 %v598
    %4194 = vmatprep.subr.mxu0 %v595
    %4195 = vmatpush1.msra.mxu0 %v594
    %4196 = vmatprep.subr.mxu0 %v591
    %4197 = vmatpush1.msra.mxu0 %v590
    %4198 = vmatprep.subr.mxu0 %v587
    %4199 = vmatpush1.msra.mxu0 %v586
    %4200 = vmatprep.subr.mxu0 0.0
    %4201 = vmatpush2.msra.mxu0 0.0
    %4202 = vmatprep.subr.mxu0 0.0
    %4203 = vmatpush2.msra.mxu0 0.0
    %4204 = vmatprep.subr.mxu0 0.0
    %4205 = vmatpush2.msra.mxu0 0.0
    %4206 = vmatprep.subr.mxu0 0.0
    %4207 = vmatpush2.msra.mxu0 0.0
    %4208 = vmatprep.subr.mxu0 0.0
    %4209 = vmatpush2.msra.mxu0 0.0
    %4210 = vmatprep.subr.mxu0 0.0
    %4211 = vmatpush2.msra.mxu0 0.0
    %4212 = vmatprep.subr.mxu0 0.0
    %4213 = vmatpush2.msra.mxu0 0.0
    %4214 = vmatprep.subr.mxu0 0.0
    %4215 = vmatpush2.msra.mxu0 0.0
    %4216 = vmatprep.subr.mxu0 0.0
    %4217 = vmatpush2.msra.mxu0 0.0
    %4218 = vmatprep.subr.mxu0 0.0
    %4219 = vmatpush2.msra.mxu0 0.0
    %4220 = vmatprep.subr.mxu0 0.0
    %4221 = vmatpush2.msra.mxu0 0.0
    %4222 = vmatprep.subr.mxu0 0.0
    %4223 = vmatpush2.msra.mxu0 0.0
    %4224 = vmatprep.subr.mxu0 0.0
    %4225 = vmatpush2.msra.mxu0 0.0
    %4226 = vmatprep.subr.mxu0 0.0
    %4227 = vmatpush2.msra.mxu0 0.0
    %4228 = vmatprep.subr.mxu0 0.0
    %4229 = vmatpush2.msra.mxu0 0.0
    %4230 = vmatprep.subr.mxu0 0.0
    %4231 = vmatpush2.msra.mxu0 0.0
    %4232 = vmatprep.mubr.f32.mxu0 0.0
    %4233 = vmatmul.mubr.f32.gmra.mxu0 %v4025
    %v4234 = vpop.f32.mrf.mxu0
    %v4235 = vadd.f32 %v4093, %v4234
    %v4236 = vpop.f32.mrf.mxu0
    %v4237 = vadd.f32 %v4095, %v4236
    %4238 = vdwg.mxu0
    %4239 = vmatprep.subr.mxu0 %v649
    %4240 = vmatpush1.msra.mxu0 %v648
    %4241 = vmatprep.subr.mxu0 %v645
    %4242 = vmatpush1.msra.mxu0 %v644
    %4243 = vmatprep.subr.mxu0 %v641
    %4244 = vmatpush1.msra.mxu0 %v640
    %4245 = vmatprep.subr.mxu0 %v637
    %4246 = vmatpush1.msra.mxu0 %v636
    %4247 = vmatprep.subr.mxu0 %v633
    %4248 = vmatpush1.msra.mxu0 %v632
    %4249 = vmatprep.subr.mxu0 %v629
    %4250 = vmatpush1.msra.mxu0 %v628
    %4251 = vmatprep.subr.mxu0 %v625
    %4252 = vmatpush1.msra.mxu0 %v624
    %4253 = vmatprep.subr.mxu0 %v621
    %4254 = vmatpush1.msra.mxu0 %v620
    %4255 = vmatprep.subr.mxu0 %v617
    %4256 = vmatpush1.msra.mxu0 %v616
    %4257 = vmatprep.subr.mxu0 %v613
    %4258 = vmatpush1.msra.mxu0 %v612
    %4259 = vmatprep.subr.mxu0 %v609
    %4260 = vmatpush1.msra.mxu0 %v608
    %4261 = vmatprep.subr.mxu0 %v605
    %4262 = vmatpush1.msra.mxu0 %v604
    %4263 = vmatprep.subr.mxu0 %v601
    %4264 = vmatpush1.msra.mxu0 %v600
    %4265 = vmatprep.subr.mxu0 %v597
    %4266 = vmatpush1.msra.mxu0 %v596
    %4267 = vmatprep.subr.mxu0 %v593
    %4268 = vmatpush1.msra.mxu0 %v592
    %4269 = vmatprep.subr.mxu0 %v589
    %4270 = vmatpush1.msra.mxu0 %v588
    %4271 = vmatprep.subr.mxu0 0.0
    %4272 = vmatpush2.msra.mxu0 0.0
    %4273 = vmatprep.subr.mxu0 0.0
    %4274 = vmatpush2.msra.mxu0 0.0
    %4275 = vmatprep.subr.mxu0 0.0
    %4276 = vmatpush2.msra.mxu0 0.0
    %4277 = vmatprep.subr.mxu0 0.0
    %4278 = vmatpush2.msra.mxu0 0.0
    %4279 = vmatprep.subr.mxu0 0.0
    %4280 = vmatpush2.msra.mxu0 0.0
    %4281 = vmatprep.subr.mxu0 0.0
    %4282 = vmatpush2.msra.mxu0 0.0
    %4283 = vmatprep.subr.mxu0 0.0
    %4284 = vmatpush2.msra.mxu0 0.0
    %4285 = vmatprep.subr.mxu0 0.0
    %4286 = vmatpush2.msra.mxu0 0.0
    %4287 = vmatprep.subr.mxu0 0.0
    %4288 = vmatpush2.msra.mxu0 0.0
    %4289 = vmatprep.subr.mxu0 0.0
    %4290 = vmatpush2.msra.mxu0 0.0
    %4291 = vmatprep.subr.mxu0 0.0
    %4292 = vmatpush2.msra.mxu0 0.0
    %4293 = vmatprep.subr.mxu0 0.0
    %4294 = vmatpush2.msra.mxu0 0.0
    %4295 = vmatprep.subr.mxu0 0.0
    %4296 = vmatpush2.msra.mxu0 0.0
    %4297 = vmatprep.subr.mxu0 0.0
    %4298 = vmatpush2.msra.mxu0 0.0
    %4299 = vmatprep.subr.mxu0 0.0
    %4300 = vmatpush2.msra.mxu0 0.0
    %4301 = vmatprep.subr.mxu0 0.0
    %4302 = vmatpush2.msra.mxu0 0.0
    %4303 = vmatprep.mubr.f32.mxu0 0.0
    %4304 = vmatmul.mubr.f32.gmra.mxu0 %v4025
    %v4305 = vpop.f32.mrf.mxu0
    %v4306 = vadd.f32 %v4164, %v4305
    %v4307 = vpop.f32.mrf.mxu0
    %v4308 = vadd.f32 %v4166, %v4307
    %4309 = vdwg.mxu0
    %v4310 = vadd.f32 %v4235, %v1003
    %v4311 = vadd.f32 %v4237, %v1007
    %v4312 = vadd.f32 %v4306, %v1011
    %v4313 = vadd.f32 %v4308, %v1015
    %v4314 = vmul.f32 %v4310, 0.5
    %v4315 = vtanh.pop %v4314
    %v4316 = vmul.f32 %v4315, 0.5
    %v4317 = vadd.f32 %v4316, 0.5
    %v4318 = vmul.f32 %v4311, 0.5
    %v4319 = vtanh.pop %v4318
    %v4320 = vmul.f32 %v4319, 0.5
    %v4321 = vadd.f32 %v4320, 0.5
    %v4322 = vtanh.pop %v4312
    %v4323 = vmul.f32 %v4313, 0.5
    %v4324 = vtanh.pop %v4323
    %v4325 = vmul.f32 %v4324, 0.5
    %v4326 = vadd.f32 %v4325, 0.5
    %v4327 = vmul.f32 %v4321, %v3859
    %v4328 = vmul.f32 %v4317, %v4322
    %v4329 = vadd.f32 %v4327, %v4328
    %v4330 = vtanh.pop %v4329
    %v4331 = vmul.f32 %v4326, %v4330
    %v4332 = vld [vmem:[%s7] sm:$0xff]
    %v4333 = vld [vmem:[%s7 + $0x8] sm:$0xff]
    %v4334 = vld [vmem:[%s7 + $0x10] sm:$0xff]
    %v4335 = vld [vmem:[%s7 + $0x18] sm:$0xff]
    %v4336 = vld [vmem:[%s7 + $0x20] sm:$0xff]
    %v4337 = vld [vmem:[%s7 + $0x28] sm:$0xff]
    %v4338 = vld [vmem:[%s7 + $0x30] sm:$0xff]
    %v4339 = vld [vmem:[%s7 + $0x38] sm:$0xff]
    %v4340 = vld [vmem:[%s7 + $0x40] sm:$0xff]
    %v4341 = vld [vmem:[%s7 + $0x48] sm:$0xff]
    %v4342 = vld [vmem:[%s7 + $0x50] sm:$0xff]
    %v4343 = vld [vmem:[%s7 + $0x58] sm:$0xff]
    %v4344 = vld [vmem:[%s7 + $0x60] sm:$0xff]
    %v4345 = vld [vmem:[%s7 + $0x68] sm:$0xff]
    %v4346 = vld [vmem:[%s7 + $0x70] sm:$0xff]
    %v4347 = vld [vmem:[%s7 + $0x78] sm:$0xff]
    %v4348 = vld [vmem:[%s8] sm:$0x1]
    %v4350 = vlaneseq
    %v4351 = vshrl.u32 %v4350, 7
    %v4352 = vsub.s32 0, %v4351
    %v4353 = vrot.slane %v4348, %v4352
    %4355 = vmatprep.subr.mxu0 0.0
    %4356 = vmatpush1.msra.mxu0 %v4347
    %4357 = vmatprep.subr.mxu0 0.0
    %4358 = vmatpush1.msra.mxu0 %v4346
    %4359 = vmatprep.subr.mxu0 0.0
    %4360 = vmatpush1.msra.mxu0 %v4345
    %4361 = vmatprep.subr.mxu0 0.0
    %4362 = vmatpush1.msra.mxu0 %v4344
    %4363 = vmatprep.subr.mxu0 0.0
    %4364 = vmatpush1.msra.mxu0 %v4343
    %4365 = vmatprep.subr.mxu0 0.0
    %4366 = vmatpush1.msra.mxu0 %v4342
    %4367 = vmatprep.subr.mxu0 0.0
    %4368 = vmatpush1.msra.mxu0 %v4341
    %4369 = vmatprep.subr.mxu0 0.0
    %4370 = vmatpush1.msra.mxu0 %v4340
    %4371 = vmatprep.subr.mxu0 0.0
    %4372 = vmatpush1.msra.mxu0 %v4339
    %4373 = vmatprep.subr.mxu0 0.0
    %4374 = vmatpush1.msra.mxu0 %v4338
    %4375 = vmatprep.subr.mxu0 0.0
    %4376 = vmatpush1.msra.mxu0 %v4337
    %4377 = vmatprep.subr.mxu0 0.0
    %4378 = vmatpush1.msra.mxu0 %v4336
    %4379 = vmatprep.subr.mxu0 0.0
    %4380 = vmatpush1.msra.mxu0 %v4335
    %4381 = vmatprep.subr.mxu0 0.0
    %4382 = vmatpush1.msra.mxu0 %v4334
    %4383 = vmatprep.subr.mxu0 0.0
    %4384 = vmatpush1.msra.mxu0 %v4333
    %4385 = vmatprep.subr.mxu0 0.0
    %4386 = vmatpush1.msra.mxu0 %v4332
    %4387 = vmatprep.subr.mxu0 0.0
    %4388 = vmatpush2.msra.mxu0 0.0
    %4389 = vmatprep.subr.mxu0 0.0
    %4390 = vmatpush2.msra.mxu0 0.0
    %4391 = vmatprep.subr.mxu0 0.0
    %4392 = vmatpush2.msra.mxu0 0.0
    %4393 = vmatprep.subr.mxu0 0.0
    %4394 = vmatpush2.msra.mxu0 0.0
    %4395 = vmatprep.subr.mxu0 0.0
    %4396 = vmatpush2.msra.mxu0 0.0
    %4397 = vmatprep.subr.mxu0 0.0
    %4398 = vmatpush2.msra.mxu0 0.0
    %4399 = vmatprep.subr.mxu0 0.0
    %4400 = vmatpush2.msra.mxu0 0.0
    %4401 = vmatprep.subr.mxu0 0.0
    %4402 = vmatpush2.msra.mxu0 0.0
    %4403 = vmatprep.subr.mxu0 0.0
    %4404 = vmatpush2.msra.mxu0 0.0
    %4405 = vmatprep.subr.mxu0 0.0
    %4406 = vmatpush2.msra.mxu0 0.0
    %4407 = vmatprep.subr.mxu0 0.0
    %4408 = vmatpush2.msra.mxu0 0.0
    %4409 = vmatprep.subr.mxu0 0.0
    %4410 = vmatpush2.msra.mxu0 0.0
    %4411 = vmatprep.subr.mxu0 0.0
    %4412 = vmatpush2.msra.mxu0 0.0
    %4413 = vmatprep.subr.mxu0 0.0
    %4414 = vmatpush2.msra.mxu0 0.0
    %4415 = vmatprep.subr.mxu0 0.0
    %4416 = vmatpush2.msra.mxu0 0.0
    %4417 = vmatprep.subr.mxu0 0.0
    %4418 = vmatpush2.msra.mxu0 0.0
    %4419 = vmatprep.mubr.f32.mxu0 0.0
    %4420 = vmatmul.mubr.f32.gmra.mxu0 %v4331
    %v4421 = vpop.f32.mrf.mxu0
    %v4422 = vadd.f32 %v4353, %v4421
    %v4423 = vpop.f32.mrf.mxu0
    %4424 = vdwg.mxu0
    %4425 = vst [vmem:[%s9] sm:$0xff] %v4422
    // Predicated region
    $region50: #{deeplog_forward.1} parent=1 // pred_check
      _
    $region51: #{deeplog_forward.1} parent=1 // pred_check_branch
      %4427 = sbr.rel (0) target = $region53
    $region52: #{deeplog_forward.1} parent=1 // pred_region
      _
    $region53: #{deeplog_forward.1} parent=1 // pred_fallthru
      _
    // Predicated region
    $region54: #{deeplog_forward.1} parent=1 // pred_check
      _
    $region55: #{deeplog_forward.1} parent=1 // pred_check_branch
      %4429 = sbr.rel (0) target = $region57
    $region56: #{deeplog_forward.1} parent=1 // pred_region
      _
    $region57: #{deeplog_forward.1} parent=1 // pred_fallthru
      _
    %4430 = vsyncpa [#allocation3], 1
    %4431 = vsyncpa [#allocation5], 1

</llo_original>
